<compile_context>
chip_gen: v5e
topology: v5e:2x2
jax: 0.10.0
libtpu: 0.0.40
codegen_flags: <defaults>
</compile_context>

<pallas_src>
import functools

import jax
import jax.numpy as jnp
from jax import lax
from jax.experimental import pallas as pl
from jax.experimental.pallas import tpu as pltpu


# --------------------------------- kernels ---------------------------------

def _conv1_and_shifts(x_ref, xh_ref, w1_ref, b1_ref, hh_ref, *, W, TW, Cmid):
    """conv1(1x1)+BN+ReLU on the tile, plus the shifted copies the stride-2 transposed
    conv needs: h[i, j+1], h[i+1, j], h[i+1, j+1] (zero outside the image)."""
    w1 = w1_ref[...]
    b1 = b1_ref[...]
    h = jnp.maximum(jnp.dot(x_ref[0], w1, preferred_element_type=jnp.float32) + b1, 0.0)

    t = pl.program_id(1)
    n_t = pl.num_programs(1)

    # halo = conv1 of the first image row of the next tile; zeros at the bottom border.
    # The halo matmul is skipped entirely on the last row tile.
    @pl.when(t == n_t - 1)
    def _():
        hh_ref[...] = jnp.zeros((W, Cmid), jnp.float32)

    @pl.when(t < n_t - 1)
    def _():
        hh_ref[...] = jnp.maximum(
            jnp.dot(xh_ref[0], w1, preferred_element_type=jnp.float32) + b1, 0.0)

    hh = hh_ref[...]
    # h shifted down one image row: value-level slice + concat (no big scratch round trip)
    h_d = jnp.concatenate([h[W:, :], hh], axis=0) if TW > W else hh

    # "+1 column" shifts via XLU roll; the circular wrap always lands in the last image
    # column, which is masked to zero (matches the transposed-conv zero padding).
    col = lax.broadcasted_iota(jnp.int32, (TW, 1), 0) % W
    last_col = col == (W - 1)
    h_r = jnp.where(last_col, 0.0, pltpu.roll(h, shift=TW - 1, axis=0))      # h[i,   j+1]
    h_dr = jnp.where(last_col, 0.0, pltpu.roll(h_d, shift=TW - 1, axis=0))   # h[i+1, j+1]

    return (h.astype(jnp.bfloat16), h_r.astype(jnp.bfloat16),
            h_d.astype(jnp.bfloat16), h_dr.astype(jnp.bfloat16))


def _decoder_kernel_merged(x_ref, xh_ref, w1_ref, b1_ref, wdec_ref, b2_ref, w3_ref, b3_ref,
                           out_ref, hh_ref, *, W, TW, Cmid, Fo):
    # Small-Cmid path: deconv taps packed into one (4C, 4C) block matrix (rows = shift
    # groups [h, h_r, h_d, h_dr], cols = output parities), conv3 block-diagonal.
    del Fo
    hb, hrb, hdb, hdrb = _conv1_and_shifts(x_ref, xh_ref, w1_ref, b1_ref, hh_ref,
                                           W=W, TW=TW, Cmid=Cmid)
    lhs = jnp.concatenate([hb, hrb, hdb, hdrb], axis=1)                     # (TW, 4*Cmid)
    y = jnp.dot(lhs, wdec_ref[...], preferred_element_type=jnp.float32) + b2_ref[...]
    z = jnp.maximum(y, 0.0).astype(jnp.bfloat16)                            # (TW, 4*Cmid)
    o = jnp.dot(z, w3_ref[...], preferred_element_type=jnp.float32) + b3_ref[...]
    # single full-width, lane-dense store (4*Fo channels)
    out_ref[0] = jnp.maximum(o, 0.0).astype(out_ref.dtype)


def _decoder_kernel_grouped(x_ref, xh_ref, w1_ref, b1_ref, wdh_ref, wdr_ref, wdd_ref,
                            wddr_ref, b2_ref, w3_ref, b3_ref, out_ref, hh_ref,
                            *, W, TW, Cmid, Fo):
    # Large-Cmid path: keep the 4-group deconv matmuls but accumulate all four parity
    # results into one full-width value and store once.
    del Fo
    hb, hrb, hdb, hdrb = _conv1_and_shifts(x_ref, xh_ref, w1_ref, b1_ref, hh_ref,
                                           W=W, TW=TW, Cmid=Cmid)
    C = Cmid
    yh = jnp.dot(hb, wdh_ref[...], preferred_element_type=jnp.float32)      # (TW, 4C)
    yr = jnp.dot(hrb, wdr_ref[...], preferred_element_type=jnp.float32)     # (TW, 2C)
    yd = jnp.dot(hdb, wdd_ref[...], preferred_element_type=jnp.float32)     # (TW, 2C)
    ydr = jnp.dot(hdrb, wddr_ref[...], preferred_element_type=jnp.float32)  # (TW,  C)
    b2 = b2_ref[...]
    w3 = w3_ref[...]
    b3 = b3_ref[...]

    def conv3(y):
        z = jnp.maximum(y + b2, 0.0).astype(jnp.bfloat16)
        return jnp.maximum(jnp.dot(z, w3, preferred_element_type=jnp.float32) + b3, 0.0)

    o = jnp.concatenate([
        conv3(yh[:, 0:C]),
        conv3(yh[:, C:2 * C] + yr[:, 0:C]),
        conv3(yh[:, 2 * C:3 * C] + yd[:, 0:C]),
        conv3(yh[:, 3 * C:4 * C] + yr[:, C:2 * C] + yd[:, C:2 * C] + ydr),
    ], axis=1)                                                              # (TW, 4*Fo)
    out_ref[0] = o.astype(out_ref.dtype)


# --------------------------------- wrapper ---------------------------------

def _fold_bn(bn, eps):
    s = bn["gamma"] / jnp.sqrt(bn["var"] + eps)
    return s, bn["beta"] - bn["mean"] * s


def _vmem_capacity_bytes(default=64 * 1024 * 1024):
    try:
        cap = getattr(pltpu.get_tpu_info(), "vmem_capacity_bytes", None)
        return int(cap) if cap else default
    except Exception:
        return default


def _pick_tile_rows(N, H, W, Cin, Cmid, Fo, budget_bytes):
    # rough VMEM live-bytes per output row: double-buffered bf16 x/out tiles, h and its
    # shifted bf16 copies, merged-matmul operands and f32 results.
    per_row = W * (4 * Cin + 32 * Fo + 44 * Cmid)
    divisors = [d for d in range(1, H + 1) if H % d == 0]
    fits = [d for d in divisors if d * per_row <= budget_bytes] or divisors[:1]
    aligned = [d for d in fits if (d * W) % 16 == 0 or d == H] or fits
    tr = max(aligned)
    if N * (H // tr) < 2:            # keep >=2 "parallel" grid steps (v7x: 2 TCs/chip)
        smaller = [d for d in aligned if d < tr and N * (H // d) >= 2]
        if smaller:
            tr = max(smaller)
    return tr


def decoder_block_pallas(x_nchw, params, eps=1e-5, tile_rows=None, vmem_limit_bytes=None,
                         out_dtype=jnp.bfloat16, return_parity_layout=False):
    N, Cin, H, W = x_nchw.shape
    Cmid = params["conv1_w"].shape[0]
    Fo = params["conv3_w"].shape[0]
    S = H * W
    # TODO(synk): the bf16 1-row halo block needs W % 16 == 0; other R2AttU_Net
    # resolutions (W = 14/28/56, ...) would need a multi-row halo block instead.
    assert W % 16 == 0, f"W={W} must be a multiple of 16 for the bf16 halo block"

    vmem_cap = _vmem_capacity_bytes()
    if vmem_limit_bytes is None:
        vmem_limit_bytes = (vmem_cap * 5) // 8        # ~40 MiB on v7x, ~80 MiB on v5e/v6e
    TR = tile_rows if tile_rows is not None else _pick_tile_rows(
        N, H, W, Cin, Cmid, Fo, budget_bytes=(2 * vmem_cap) // 5)
    assert H % TR == 0, (H, TR)
    TW = TR * W
    assert TW % 16 == 0 or TW == S, (TW,)
    n_tiles = H // TR

    # ---- fold inference BN into conv / deconv weights; bf16 weights, f32 biases ----
    s1, t1 = _fold_bn(params["bn1"], eps)
    s2, t2 = _fold_bn(params["bn2"], eps)
    s3, t3 = _fold_bn(params["bn3"], eps)

    w1f = (params["conv1_w"][:, :, 0, 0] * s1[:, None]).T.astype(jnp.bfloat16)   # (Cin, Cmid)
    b1f = (params["conv1_b"] * s1 + t1).reshape(1, Cmid).astype(jnp.float32)
    taps = jnp.transpose(params["deconv2_w"], (2, 3, 0, 1)) * s2[None, None, None, :]  # (3,3,Ci,Co)
    b2v = (params["deconv2_b"] * s2 + t2).astype(jnp.float32)
    w3f32 = (params["conv3_w"][:, :, 0, 0] * s3[:, None]).T                      # (Cmid, Fo)
    b3v = (params["conv3_b"] * s3 + t3).astype(jnp.float32)

    merged = 4 * Cmid <= 256    # small-Cmid levels: one wide MXU matmul beats 4 narrow ones
    if merged:
        Z = jnp.zeros((Cmid, Cmid), taps.dtype)
        # rows: shift groups [h, h_r, h_d, h_dr]; cols: output parities [00, 01, 10, 11]
        wdec = jnp.concatenate([
            jnp.concatenate([taps[1, 1], taps[1, 2], taps[2, 1], taps[2, 2]], axis=1),
            jnp.concatenate([Z,          taps[1, 0], Z,          taps[2, 0]], axis=1),
            jnp.concatenate([Z,          Z,          taps[0, 1], taps[0, 2]], axis=1),
            jnp.concatenate([Z,          Z,          Z,          taps[0, 0]], axis=1),
        ], axis=0).astype(jnp.bfloat16)                                  # (4*Cmid, 4*Cmid)
        w3blk = jnp.zeros((4 * Cmid, 4 * Fo), jnp.float32)
        for p in range(4):
            w3blk = w3blk.at[p * Cmid:(p + 1) * Cmid, p * Fo:(p + 1) * Fo].set(w3f32)
        w3blk = w3blk.astype(jnp.bfloat16)                               # block-diagonal
        weights = (w1f, b1f, wdec, jnp.tile(b2v, 4).reshape(1, 4 * Cmid),
                   w3blk, jnp.tile(b3v, 4).reshape(1, 4 * Fo))
        kernel = functools.partial(_decoder_kernel_merged, W=W, TW=TW, Cmid=Cmid, Fo=Fo)
    else:
        wdh = jnp.concatenate([taps[1, 1], taps[1, 2], taps[2, 1], taps[2, 2]],
                              axis=1).astype(jnp.bfloat16)               # (Cmid, 4*Cmid)
        wdr = jnp.concatenate([taps[1, 0], taps[2, 0]], axis=1).astype(jnp.bfloat16)
        wdd = jnp.concatenate([taps[0, 1], taps[0, 2]], axis=1).astype(jnp.bfloat16)
        wddr = taps[0, 0].astype(jnp.bfloat16)
        weights = (w1f, b1f, wdh, wdr, wdd, wddr, b2v.reshape(1, Cmid),
                   w3f32.astype(jnp.bfloat16), b3v.reshape(1, Fo))
        kernel = functools.partial(_decoder_kernel_grouped, W=W, TW=TW, Cmid=Cmid, Fo=Fo)

    x_k = jnp.transpose(x_nchw, (0, 2, 3, 1)).reshape(N, S, Cin).astype(jnp.bfloat16)

    def call(single_buffer_weights):
        def const(w):
            shape = w.shape
            if single_buffer_weights:
                return pl.BlockSpec(shape, lambda b, t: (0,) * len(shape),
                                    pipeline_mode=pl.Buffered(1))
            return pl.BlockSpec(shape, lambda b, t: (0,) * len(shape))

        in_specs = [
            # main tile rows
            pl.BlockSpec((1, TW, Cin), lambda b, t: (b, t, 0)),
            # 1-row halo = first image row of the next tile (clamped at the bottom border,
            # zeroed / skipped in-kernel on the last tile)
            pl.BlockSpec((1, W, Cin),
                         lambda b, t: (b, jnp.minimum((t + 1) * TR, H - 1), 0)),
        ] + [const(w) for w in weights]

        return pl.pallas_call(
            kernel,
            out_shape=jax.ShapeDtypeStruct((N, S, 4 * Fo), out_dtype),
            grid=(N, n_tiles),
            in_specs=in_specs,
            out_specs=pl.BlockSpec((1, TW, 4 * Fo), lambda b, t: (b, t, 0)),
            scratch_shapes=[pltpu.VMEM((W, Cmid), jnp.float32)],        # conv1(halo row)
            compiler_params=pltpu.CompilerParams(
                dimension_semantics=("parallel", "parallel"),
                vmem_limit_bytes=vmem_limit_bytes),
        )(x_k, x_k, *weights)

    try:
        out_k = jax.block_until_ready(call(True))   # single-buffered weights (v7x VMEM)
    except Exception:
        out_k = call(False)                         # fallback: default double buffering

    if return_parity_layout:
        return out_k    # (N, H*W, 4*Fo) channels-last, parity folded into channels
    # parity -> spatial (kept in bf16): (N,S,4Fo)->(N,H,W,2,2,Fo)->(N,2H,2W,Fo)->NCHW
    ob = out_k.reshape(N, H, W, 2, 2, Fo)
    out_nhwc = jnp.transpose(ob, (0, 1, 3, 2, 4, 5)).reshape(N, 2 * H, 2 * W, Fo)
    return jnp.transpose(out_nhwc, (0, 3, 1, 2))


# ------------------------- deterministic params + reference -------------------------

def init_params(key, in_channels, n_filters):
    Cmid = in_channels // 4
    ks = jax.random.split(key, 16)

    def u(k, shape, lo=-0.2, hi=0.2):
        return jax.random.uniform(k, shape, jnp.float32, lo, hi)

    def bn_init(k, c):
        k1, k2, k3, k4 = jax.random.split(k, 4)
        return {
            "gamma": 1.0 + u(k1, (c,), -0.1, 0.1),
            "beta": u(k2, (c,), -0.1, 0.1),
            "mean": u(k3, (c,), -0.1, 0.1),
            "var": jax.random.uniform(k4, (c,), jnp.float32, 0.5, 1.5),
        }

    return {
        "conv1_w": u(ks[0], (Cmid, in_channels, 1, 1)),
        "conv1_b": u(ks[1], (Cmid,)),
        "bn1": bn_init(ks[2], Cmid),
        "deconv2_w": u(ks[3], (Cmid, Cmid, 3, 3)),   # (in, out, kh, kw) — PyTorch convention
        "deconv2_b": u(ks[4], (Cmid,)),
        "bn2": bn_init(ks[5], Cmid),
        "conv3_w": u(ks[6], (n_filters, Cmid, 1, 1)),
        "conv3_b": u(ks[7], (n_filters,)),
        "bn3": bn_init(ks[8], n_filters),
    }


def decoder_block_ref(x, p, eps=1e-5):
    # Plain-JAX/XLA f32 reference (NCHW), used only to verify the Pallas kernel.
    def bn(y, b):
        s = (b["gamma"] / jnp.sqrt(b["var"] + eps)).reshape(1, -1, 1, 1)
        t = (b["beta"] - b["mean"] * b["gamma"] / jnp.sqrt(b["var"] + eps)).reshape(1, -1, 1, 1)
        return y * s + t

    def conv1x1(y, w, b):
        out = lax.conv_general_dilated(y, w, (1, 1), "VALID",
                                       dimension_numbers=("NCHW", "OIHW", "NCHW"))
        return out + b.reshape(1, -1, 1, 1)

    y = jnp.maximum(bn(conv1x1(x, p["conv1_w"], p["conv1_b"]), p["bn1"]), 0.0)

    # ConvTranspose2d(k=3, s=2, p=1, op=1) == dilated conv with lhs_dilation=2,
    # padding ((1,2),(1,2)), spatially flipped kernel, (in,out) axes swapped.
    wt = jnp.transpose(p["deconv2_w"], (1, 0, 2, 3))[:, :, ::-1, ::-1]
    y2 = lax.conv_general_dilated(y, wt, (1, 1), ((1, 2), (1, 2)),
                                  lhs_dilation=(2, 2),
                                  dimension_numbers=("NCHW", "OIHW", "NCHW"))
    y2 = y2 + p["deconv2_b"].reshape(1, -1, 1, 1)
    y2 = jnp.maximum(bn(y2, p["bn2"]), 0.0)

    y3 = jnp.maximum(bn(conv1x1(y2, p["conv3_w"], p["conv3_b"]), p["bn3"]), 0.0)
    return y3


if __name__ == "__main__":
    key = jax.random.PRNGKey(0)
    kx, kp = jax.random.split(key)

    N, Cin, H, W = 2, 64, 16, 16
    n_filters = 32            # 4 * n_filters = 128 -> lane-dense kernel output

    x = jax.random.uniform(kx, (N, Cin, H, W), jnp.float32)
    params = init_params(kp, Cin, n_filters)
    ref = decoder_block_ref(x, params)

    # Tolerance accounts for bf16 weights/activations/output with f32 accumulation.
    ATOL = RTOL = 8e-2

    # 1) generation-aware auto tiling: at this size the grid collapses to (N, 1),
    #    amortizing per-step overhead while batch keeps 2 parallel steps.
    out = jax.block_until_ready(decoder_block_pallas(x, params)).astype(jnp.float32)
    assert out.shape == (N, n_filters, 2 * H, 2 * W), out.shape
    err = float(jnp.max(jnp.abs(out - ref)))
    assert jnp.allclose(out, ref, atol=ATOL, rtol=RTOL), f"auto-tile max abs err = {err}"

    # 2) tile_rows=4 -> grid (2, 4): exercises the +1-row halo between tiles and the
    #    zero-padded bottom border on the last tile.
    out2 = jax.block_until_ready(
        decoder_block_pallas(x, params, tile_rows=4)).astype(jnp.float32)
    err2 = float(jnp.max(jnp.abs(out2 - ref)))
    assert jnp.allclose(out2, ref, atol=ATOL, rtol=RTOL), f"tiled max abs err = {err2}"

    print("KERNEL_OK")
</pallas_src>

<mosaic_0001>
module attributes {stable_mosaic.version = 11 : i64} {
  func.func @_decoder_kernel_merged(%arg0: i32, %arg1: i32, %arg2: memref<1x256x64xbf16, #tpu.memory_space<vmem>>, %arg3: memref<1x16x64xbf16, #tpu.memory_space<vmem>>, %arg4: memref<64x16xbf16, #tpu.memory_space<vmem>>, %arg5: memref<1x16xf32, #tpu.memory_space<vmem>>, %arg6: memref<64x64xbf16, #tpu.memory_space<vmem>>, %arg7: memref<1x64xf32, #tpu.memory_space<vmem>>, %arg8: memref<64x128xbf16, #tpu.memory_space<vmem>>, %arg9: memref<1x128xf32, #tpu.memory_space<vmem>>, %arg10: memref<1x256x128xbf16, #tpu.memory_space<vmem>>, %arg11: memref<16x16xf32, #tpu.memory_space<vmem>>) attributes {dimension_semantics = [#tpu.dimension_semantics<parallel>, #tpu.dimension_semantics<parallel>], iteration_bounds = array<i64: 2, 1>, scalar_prefetch = 0 : i64, scratch_operands = 1 : i64, tpu.core_type = #tpu.core_type<tc>, window_params = [{transform_indices = @transform_0, window_bounds = array<i64: 1, 256, 64>}, {transform_indices = @transform_1, window_bounds = array<i64: 1, 16, 64>}, {pipeline_mode = #tpu.pipeline_mode<synchronous>, transform_indices = @transform_2, window_bounds = array<i64: 64, 16>}, {pipeline_mode = #tpu.pipeline_mode<synchronous>, transform_indices = @transform_3, window_bounds = array<i64: 1, 16>}, {pipeline_mode = #tpu.pipeline_mode<synchronous>, transform_indices = @transform_4, window_bounds = array<i64: 64, 64>}, {pipeline_mode = #tpu.pipeline_mode<synchronous>, transform_indices = @transform_5, window_bounds = array<i64: 1, 64>}, {pipeline_mode = #tpu.pipeline_mode<synchronous>, transform_indices = @transform_6, window_bounds = array<i64: 64, 128>}, {pipeline_mode = #tpu.pipeline_mode<synchronous>, transform_indices = @transform_7, window_bounds = array<i64: 1, 128>}, {transform_indices = @transform_8, window_bounds = array<i64: 1, 256, 128>}]} {
    %c0 = arith.constant 0 : index
    %c0_0 = arith.constant 0 : index
    %0 = vector.load %arg4[%c0, %c0_0] : memref<64x16xbf16, #tpu.memory_space<vmem>>, vector<64x16xbf16>
    %c0_1 = arith.constant 0 : index
    %c0_2 = arith.constant 0 : index
    %1 = vector.load %arg5[%c0_1, %c0_2] : memref<1x16xf32, #tpu.memory_space<vmem>>, vector<1x16xf32>
    %c0_3 = arith.constant 0 : index
    %c0_4 = arith.constant 0 : index
    %c0_5 = arith.constant 0 : index
    %2 = vector.load %arg2[%c0_3, %c0_4, %c0_5] : memref<1x256x64xbf16, #tpu.memory_space<vmem>>, vector<1x256x64xbf16>
    %3 = vector.shape_cast %2 : vector<1x256x64xbf16> to vector<256x64xbf16>
    %cst = arith.constant dense<0.000000e+00> : vector<256x16xf32>
    %4 = tpu.matmul %3, %0, %cst {dimension_numbers = #tpu.dot_dimension_numbers<[1], [0], [0], [1], [0, 0, 1, 1], [], []>} : vector<256x64xbf16>, vector<64x16xbf16>, vector<256x16xf32> -> vector<256x16xf32>
    %5 = vector.broadcast %1 : vector<1x16xf32> to vector<256x16xf32>
    %6 = arith.addf %4, %5 : vector<256x16xf32>
    %cst_6 = arith.constant 0.000000e+00 : f32
    %7 = vector.broadcast %cst_6 : f32 to vector<256x16xf32>
    %8 = arith.maximumf %6, %7 : vector<256x16xf32>
    %c0_i32 = arith.constant 0 : i32
    %9 = arith.cmpi eq, %arg1, %c0_i32 : i32
    %10 = arith.extui %9 : i1 to i32
    %c0_i32_7 = arith.constant 0 : i32
    %11 = arith.cmpi ne, %10, %c0_i32_7 : i32
    scf.if %11 {
      %cst_34 = arith.constant 0.000000e+00 : f32
      %71 = vector.broadcast %cst_34 : f32 to vector<16x16xf32>
      %c0_35 = arith.constant 0 : index
      %c0_36 = arith.constant 0 : index
      %72 = vector.load %arg11[%c0_35, %c0_36] : memref<16x16xf32, #tpu.memory_space<vmem>>, vector<16x16xf32>
      tpu.vector_store %arg11[%c0_35, %c0_36], %71 {strides = array<i32>} : memref<16x16xf32, #tpu.memory_space<vmem>>, vector<16x16xf32>,
    } else {
    }
    %c0_i32_8 = arith.constant 0 : i32
    %12 = arith.cmpi slt, %arg1, %c0_i32_8 : i32
    %13 = arith.extui %12 : i1 to i32
    %c0_i32_9 = arith.constant 0 : i32
    %14 = arith.cmpi ne, %13, %c0_i32_9 : i32
    scf.if %14 {
      %c0_34 = arith.constant 0 : index
      %c0_35 = arith.constant 0 : index
      %c0_36 = arith.constant 0 : index
      %71 = vector.load %arg3[%c0_34, %c0_35, %c0_36] : memref<1x16x64xbf16, #tpu.memory_space<vmem>>, vector<1x16x64xbf16>
      %72 = vector.shape_cast %71 : vector<1x16x64xbf16> to vector<16x64xbf16>
      %cst_37 = arith.constant dense<0.000000e+00> : vector<16x16xf32>
      %73 = tpu.matmul %72, %0, %cst_37 {dimension_numbers = #tpu.dot_dimension_numbers<[1], [0], [0], [1], [0, 0, 1, 1], [], []>} : vector<16x64xbf16>, vector<64x16xbf16>, vector<16x16xf32> -> vector<16x16xf32>
      %74 = vector.broadcast %1 : vector<1x16xf32> to vector<16x16xf32>
      %75 = arith.addf %73, %74 : vector<16x16xf32>
      %cst_38 = arith.constant 0.000000e+00 : f32
      %76 = vector.broadcast %cst_38 : f32 to vector<16x16xf32>
      %77 = arith.maximumf %75, %76 : vector<16x16xf32>
      %c0_39 = arith.constant 0 : index
      %c0_40 = arith.constant 0 : index
      %78 = vector.load %arg11[%c0_39, %c0_40] : memref<16x16xf32, #tpu.memory_space<vmem>>, vector<16x16xf32>
      tpu.vector_store %arg11[%c0_39, %c0_40], %77 {strides = array<i32>} : memref<16x16xf32, #tpu.memory_space<vmem>>, vector<16x16xf32>,
    } else {
    }
    %c0_10 = arith.constant 0 : index
    %c0_11 = arith.constant 0 : index
    %15 = vector.load %arg11[%c0_10, %c0_11] : memref<16x16xf32, #tpu.memory_space<vmem>>, vector<16x16xf32>
    %16 = vector.extract_strided_slice %8 {offsets = [16, 0], sizes = [240, 16], strides = [1, 1]} : vector<256x16xf32> to vector<240x16xf32>
    %17 = tpu.concatenate %16, %15 in 0 : vector<240x16xf32>, vector<16x16xf32> -> vector<256x16xf32>
    %18 = tpu.iota {dimensions = array<i32: 0>} : vector<256x1xi32>
    %c16_i32 = arith.constant 16 : i32
    %c0_i32_12 = arith.constant 0 : i32
    %19 = arith.cmpi eq, %c16_i32, %c0_i32_12 : i32
    %c1_i32 = arith.constant 1 : i32
    %20 = arith.select %19, %c1_i32, %c16_i32 : i32
    %21 = vector.broadcast %20 : i32 to vector<256x1xi32>
    %22 = arith.remsi %18, %21 : vector<256x1xi32>
    %c0_i32_13 = arith.constant 0 : i32
    %23 = vector.broadcast %c0_i32_13 : i32 to vector<256x1xi32>
    %24 = arith.cmpi ne, %22, %23 : vector<256x1xi32>
    %c0_i32_14 = arith.constant 0 : i32
    %25 = vector.broadcast %c0_i32_14 : i32 to vector<256x1xi32>
    %26 = arith.cmpi slt, %22, %25 : vector<256x1xi32>
    %c0_i32_15 = arith.constant 0 : i32
    %27 = arith.cmpi slt, %20, %c0_i32_15 : i32
    %28 = vector.broadcast %27 : i1 to vector<256x1xi1>
    %29 = vector.broadcast %28 : vector<256x1xi1> to vector<256x1xi1>
    %30 = arith.xori %26, %29 : vector<256x1xi1>
    %31 = arith.andi %30, %24 : vector<256x1xi1>
    %32 = vector.broadcast %20 : i32 to vector<256x1xi32>
    %33 = arith.addi %22, %32 : vector<256x1xi32>
    %34 = arith.select %31, %33, %22 : vector<256x1xi1>, vector<256x1xi32>
    %c15_i32 = arith.constant 15 : i32
    %35 = vector.broadcast %c15_i32 : i32 to vector<256x1xi32>
    %36 = arith.cmpi eq, %34, %35 : vector<256x1xi32>
    %c255_i32 = arith.constant 255 : i32
    %37 = tpu.dynamic_rotate %8 by %c255_i32 dim 0 : vector<256x16xf32>, i32 -> vector<256x16xf32>
    %cst_16 = arith.constant 0.000000e+00 : f32
    %38 = vector.shape_cast %36 : vector<256x1xi1> to vector<256x1xi1>
    %39 = vector.broadcast %38 : vector<256x1xi1> to vector<256x16xi1>
    %40 = vector.broadcast %cst_16 : f32 to vector<256x16xf32>
    %41 = arith.select %39, %40, %37 : vector<256x16xi1>, vector<256x16xf32>
    %c255_i32_17 = arith.constant 255 : i32
    %42 = tpu.dynamic_rotate %17 by %c255_i32_17 dim 0 : vector<256x16xf32>, i32 -> vector<256x16xf32>
    %cst_18 = arith.constant 0.000000e+00 : f32
    %43 = vector.shape_cast %36 : vector<256x1xi1> to vector<256x1xi1>
    %44 = vector.broadcast %43 : vector<256x1xi1> to vector<256x16xi1>
    %45 = vector.broadcast %cst_18 : f32 to vector<256x16xf32>
    %46 = arith.select %44, %45, %42 : vector<256x16xi1>, vector<256x16xf32>
    %47 = arith.truncf %8 : vector<256x16xf32> to vector<256x16xbf16>
    %48 = arith.truncf %41 : vector<256x16xf32> to vector<256x16xbf16>
    %49 = arith.truncf %17 : vector<256x16xf32> to vector<256x16xbf16>
    %50 = arith.truncf %46 : vector<256x16xf32> to vector<256x16xbf16>
    %51 = tpu.concatenate %47, %48, %49, %50 in 1 : vector<256x16xbf16>, vector<256x16xbf16>, vector<256x16xbf16>, vector<256x16xbf16> -> vector<256x64xbf16>
    %c0_19 = arith.constant 0 : index
    %c0_20 = arith.constant 0 : index
    %52 = vector.load %arg6[%c0_19, %c0_20] : memref<64x64xbf16, #tpu.memory_space<vmem>>, vector<64x64xbf16>
    %cst_21 = arith.constant dense<0.000000e+00> : vector<256x64xf32>
    %53 = tpu.matmul %51, %52, %cst_21 {dimension_numbers = #tpu.dot_dimension_numbers<[1], [0], [0], [1], [0, 0, 1, 1], [], []>} : vector<256x64xbf16>, vector<64x64xbf16>, vector<256x64xf32> -> vector<256x64xf32>
    %c0_22 = arith.constant 0 : index
    %c0_23 = arith.constant 0 : index
    %54 = vector.load %arg7[%c0_22, %c0_23] : memref<1x64xf32, #tpu.memory_space<vmem>>, vector<1x64xf32>
    %55 = vector.broadcast %54 : vector<1x64xf32> to vector<256x64xf32>
    %56 = arith.addf %53, %55 : vector<256x64xf32>
    %cst_24 = arith.constant 0.000000e+00 : f32
    %57 = vector.broadcast %cst_24 : f32 to vector<256x64xf32>
    %58 = arith.maximumf %56, %57 : vector<256x64xf32>
    %59 = arith.truncf %58 : vector<256x64xf32> to vector<256x64xbf16>
    %c0_25 = arith.constant 0 : index
    %c0_26 = arith.constant 0 : index
    %60 = vector.load %arg8[%c0_25, %c0_26] : memref<64x128xbf16, #tpu.memory_space<vmem>>, vector<64x128xbf16>
    %cst_27 = arith.constant dense<0.000000e+00> : vector<256x128xf32>
    %61 = tpu.matmul %59, %60, %cst_27 {dimension_numbers = #tpu.dot_dimension_numbers<[1], [0], [0], [1], [0, 0, 1, 1], [], []>} : vector<256x64xbf16>, vector<64x128xbf16>, vector<256x128xf32> -> vector<256x128xf32>
    %c0_28 = arith.constant 0 : index
    %c0_29 = arith.constant 0 : index
    %62 = vector.load %arg9[%c0_28, %c0_29] : memref<1x128xf32, #tpu.memory_space<vmem>>, vector<1x128xf32>
    %63 = vector.broadcast %62 : vector<1x128xf32> to vector<256x128xf32>
    %64 = arith.addf %61, %63 : vector<256x128xf32>
    %cst_30 = arith.constant 0.000000e+00 : f32
    %65 = vector.broadcast %cst_30 : f32 to vector<256x128xf32>
    %66 = arith.maximumf %64, %65 : vector<256x128xf32>
    %67 = arith.truncf %66 : vector<256x128xf32> to vector<256x128xbf16>
    %c0_31 = arith.constant 0 : index
    %c0_32 = arith.constant 0 : index
    %c0_33 = arith.constant 0 : index
    %68 = vector.load %arg10[%c0_31, %c0_32, %c0_33] : memref<1x256x128xbf16, #tpu.memory_space<vmem>>, vector<1x256x128xbf16>
    %69 = vector.shape_cast %68 : vector<1x256x128xbf16> to vector<256x128xbf16>
    %70 = vector.shape_cast %67 : vector<256x128xbf16> to vector<1x256x128xbf16>
    tpu.vector_store %arg10[%c0_31, %c0_32, %c0_33], %70 {strides = array<i32>} : memref<1x256x128xbf16, #tpu.memory_space<vmem>>, vector<1x256x128xbf16>,
    return
  }
  func.func @transform_0(%arg0: i32, %arg1: i32) -> (i32, i32, i32) {
    %c0_i32 = arith.constant 0 : i32
    %c0_i32_0 = arith.constant 0 : i32
    return %arg0, %arg1, %c0_i32 : i32, i32, i32
  }
  func.func @transform_1(%arg0: i32, %arg1: i32) -> (i32, i32, i32) {
    %c1_i32 = arith.constant 1 : i32
    %0 = arith.addi %arg1, %c1_i32 : i32
    %c16_i32 = arith.constant 16 : i32
    %1 = arith.muli %0, %c16_i32 : i32
    %c15_i32 = arith.constant 15 : i32
    %2 = arith.minsi %1, %c15_i32 : i32
    %c0_i32 = arith.constant 0 : i32
    %c0_i32_0 = arith.constant 0 : i32
    return %arg0, %2, %c0_i32 : i32, i32, i32
  }
  func.func @transform_2(%arg0: i32, %arg1: i32) -> (i32, i32) {
    %c0_i32 = arith.constant 0 : i32
    %c0_i32_0 = arith.constant 0 : i32
    %c0_i32_1 = arith.constant 0 : i32
    return %c0_i32, %c0_i32_0 : i32, i32
  }
  func.func @transform_3(%arg0: i32, %arg1: i32) -> (i32, i32) {
    %c0_i32 = arith.constant 0 : i32
    %c0_i32_0 = arith.constant 0 : i32
    %c0_i32_1 = arith.constant 0 : i32
    return %c0_i32, %c0_i32_0 : i32, i32
  }
  func.func @transform_4(%arg0: i32, %arg1: i32) -> (i32, i32) {
    %c0_i32 = arith.constant 0 : i32
    %c0_i32_0 = arith.constant 0 : i32
    %c0_i32_1 = arith.constant 0 : i32
    return %c0_i32, %c0_i32_0 : i32, i32
  }
  func.func @transform_5(%arg0: i32, %arg1: i32) -> (i32, i32) {
    %c0_i32 = arith.constant 0 : i32
    %c0_i32_0 = arith.constant 0 : i32
    %c0_i32_1 = arith.constant 0 : i32
    return %c0_i32, %c0_i32_0 : i32, i32
  }
  func.func @transform_6(%arg0: i32, %arg1: i32) -> (i32, i32) {
    %c0_i32 = arith.constant 0 : i32
    %c0_i32_0 = arith.constant 0 : i32
    %c0_i32_1 = arith.constant 0 : i32
    return %c0_i32, %c0_i32_0 : i32, i32
  }
  func.func @transform_7(%arg0: i32, %arg1: i32) -> (i32, i32) {
    %c0_i32 = arith.constant 0 : i32
    %c0_i32_0 = arith.constant 0 : i32
    %c0_i32_1 = arith.constant 0 : i32
    return %c0_i32, %c0_i32_0 : i32, i32
  }
  func.func @transform_8(%arg0: i32, %arg1: i32) -> (i32, i32, i32) {
    %c0_i32 = arith.constant 0 : i32
    %c0_i32_0 = arith.constant 0 : i32
    return %arg0, %arg1, %c0_i32 : i32, i32, i32
  }
}

module attributes {stable_mosaic.version = 11 : i64} {
  func.func @_decoder_kernel_merged(%arg0: i32, %arg1: i32, %arg2: memref<1x256x64xbf16, #tpu.memory_space<vmem>>, %arg3: memref<1x16x64xbf16, #tpu.memory_space<vmem>>, %arg4: memref<64x16xbf16, #tpu.memory_space<vmem>>, %arg5: memref<1x16xf32, #tpu.memory_space<vmem>>, %arg6: memref<64x64xbf16, #tpu.memory_space<vmem>>, %arg7: memref<1x64xf32, #tpu.memory_space<vmem>>, %arg8: memref<64x128xbf16, #tpu.memory_space<vmem>>, %arg9: memref<1x128xf32, #tpu.memory_space<vmem>>, %arg10: memref<1x256x128xbf16, #tpu.memory_space<vmem>>, %arg11: memref<16x16xf32, #tpu.memory_space<vmem>>) attributes {dimension_semantics = [#tpu.dimension_semantics<parallel>, #tpu.dimension_semantics<parallel>], iteration_bounds = array<i64: 2, 1>, scalar_prefetch = 0 : i64, scratch_operands = 1 : i64, tpu.core_type = #tpu.core_type<tc>, window_params = [{transform_indices = @transform_0, window_bounds = array<i64: 1, 256, 64>}, {transform_indices = @transform_1, window_bounds = array<i64: 1, 16, 64>}, {pipeline_mode = #tpu.pipeline_mode<synchronous>, transform_indices = @transform_2, window_bounds = array<i64: 64, 16>}, {pipeline_mode = #tpu.pipeline_mode<synchronous>, transform_indices = @transform_3, window_bounds = array<i64: 1, 16>}, {pipeline_mode = #tpu.pipeline_mode<synchronous>, transform_indices = @transform_4, window_bounds = array<i64: 64, 64>}, {pipeline_mode = #tpu.pipeline_mode<synchronous>, transform_indices = @transform_5, window_bounds = array<i64: 1, 64>}, {pipeline_mode = #tpu.pipeline_mode<synchronous>, transform_indices = @transform_6, window_bounds = array<i64: 64, 128>}, {pipeline_mode = #tpu.pipeline_mode<synchronous>, transform_indices = @transform_7, window_bounds = array<i64: 1, 128>}, {transform_indices = @transform_8, window_bounds = array<i64: 1, 256, 128>}]} {
    %c0 = arith.constant 0 : index
    %c0_0 = arith.constant 0 : index
    %0 = vector.load %arg4[%c0, %c0_0] : memref<64x16xbf16, #tpu.memory_space<vmem>>, vector<64x16xbf16>
    %c0_1 = arith.constant 0 : index
    %c0_2 = arith.constant 0 : index
    %1 = vector.load %arg5[%c0_1, %c0_2] : memref<1x16xf32, #tpu.memory_space<vmem>>, vector<1x16xf32>
    %c0_3 = arith.constant 0 : index
    %c0_4 = arith.constant 0 : index
    %c0_5 = arith.constant 0 : index
    %2 = vector.load %arg2[%c0_3, %c0_4, %c0_5] : memref<1x256x64xbf16, #tpu.memory_space<vmem>>, vector<1x256x64xbf16>
    %3 = vector.shape_cast %2 : vector<1x256x64xbf16> to vector<256x64xbf16>
    %cst = arith.constant dense<0.000000e+00> : vector<256x16xf32>
    %4 = tpu.matmul %3, %0, %cst {dimension_numbers = #tpu.dot_dimension_numbers<[1], [0], [0], [1], [0, 0, 1, 1], [], []>} : vector<256x64xbf16>, vector<64x16xbf16>, vector<256x16xf32> -> vector<256x16xf32>
    %5 = vector.broadcast %1 : vector<1x16xf32> to vector<256x16xf32>
    %6 = arith.addf %4, %5 : vector<256x16xf32>
    %cst_6 = arith.constant 0.000000e+00 : f32
    %7 = vector.broadcast %cst_6 : f32 to vector<256x16xf32>
    %8 = arith.maximumf %6, %7 : vector<256x16xf32>
    %c0_i32 = arith.constant 0 : i32
    %9 = arith.cmpi eq, %arg1, %c0_i32 : i32
    %10 = arith.extui %9 : i1 to i32
    %c0_i32_7 = arith.constant 0 : i32
    %11 = arith.cmpi ne, %10, %c0_i32_7 : i32
    scf.if %11 {
      %cst_34 = arith.constant 0.000000e+00 : f32
      %71 = vector.broadcast %cst_34 : f32 to vector<16x16xf32>
      %c0_35 = arith.constant 0 : index
      %c0_36 = arith.constant 0 : index
      %72 = vector.load %arg11[%c0_35, %c0_36] : memref<16x16xf32, #tpu.memory_space<vmem>>, vector<16x16xf32>
      tpu.vector_store %arg11[%c0_35, %c0_36], %71 {strides = array<i32>} : memref<16x16xf32, #tpu.memory_space<vmem>>, vector<16x16xf32>,
    } else {
    }
    %c0_i32_8 = arith.constant 0 : i32
    %12 = arith.cmpi slt, %arg1, %c0_i32_8 : i32
    %13 = arith.extui %12 : i1 to i32
    %c0_i32_9 = arith.constant 0 : i32
    %14 = arith.cmpi ne, %13, %c0_i32_9 : i32
    scf.if %14 {
      %c0_34 = arith.constant 0 : index
      %c0_35 = arith.constant 0 : index
      %c0_36 = arith.constant 0 : index
      %71 = vector.load %arg3[%c0_34, %c0_35, %c0_36] : memref<1x16x64xbf16, #tpu.memory_space<vmem>>, vector<1x16x64xbf16>
      %72 = vector.shape_cast %71 : vector<1x16x64xbf16> to vector<16x64xbf16>
      %cst_37 = arith.constant dense<0.000000e+00> : vector<16x16xf32>
      %73 = tpu.matmul %72, %0, %cst_37 {dimension_numbers = #tpu.dot_dimension_numbers<[1], [0], [0], [1], [0, 0, 1, 1], [], []>} : vector<16x64xbf16>, vector<64x16xbf16>, vector<16x16xf32> -> vector<16x16xf32>
      %74 = vector.broadcast %1 : vector<1x16xf32> to vector<16x16xf32>
      %75 = arith.addf %73, %74 : vector<16x16xf32>
      %cst_38 = arith.constant 0.000000e+00 : f32
      %76 = vector.broadcast %cst_38 : f32 to vector<16x16xf32>
      %77 = arith.maximumf %75, %76 : vector<16x16xf32>
      %c0_39 = arith.constant 0 : index
      %c0_40 = arith.constant 0 : index
      %78 = vector.load %arg11[%c0_39, %c0_40] : memref<16x16xf32, #tpu.memory_space<vmem>>, vector<16x16xf32>
      tpu.vector_store %arg11[%c0_39, %c0_40], %77 {strides = array<i32>} : memref<16x16xf32, #tpu.memory_space<vmem>>, vector<16x16xf32>,
    } else {
    }
    %c0_10 = arith.constant 0 : index
    %c0_11 = arith.constant 0 : index
    %15 = vector.load %arg11[%c0_10, %c0_11] : memref<16x16xf32, #tpu.memory_space<vmem>>, vector<16x16xf32>
    %16 = vector.extract_strided_slice %8 {offsets = [16, 0], sizes = [240, 16], strides = [1, 1]} : vector<256x16xf32> to vector<240x16xf32>
    %17 = tpu.concatenate %16, %15 in 0 : vector<240x16xf32>, vector<16x16xf32> -> vector<256x16xf32>
    %18 = tpu.iota {dimensions = array<i32: 0>} : vector<256x1xi32>
    %c16_i32 = arith.constant 16 : i32
    %c0_i32_12 = arith.constant 0 : i32
    %19 = arith.cmpi eq, %c16_i32, %c0_i32_12 : i32
    %c1_i32 = arith.constant 1 : i32
    %20 = arith.select %19, %c1_i32, %c16_i32 : i32
    %21 = vector.broadcast %20 : i32 to vector<256x1xi32>
    %22 = arith.remsi %18, %21 : vector<256x1xi32>
    %c0_i32_13 = arith.constant 0 : i32
    %23 = vector.broadcast %c0_i32_13 : i32 to vector<256x1xi32>
    %24 = arith.cmpi ne, %22, %23 : vector<256x1xi32>
    %c0_i32_14 = arith.constant 0 : i32
    %25 = vector.broadcast %c0_i32_14 : i32 to vector<256x1xi32>
    %26 = arith.cmpi slt, %22, %25 : vector<256x1xi32>
    %c0_i32_15 = arith.constant 0 : i32
    %27 = arith.cmpi slt, %20, %c0_i32_15 : i32
    %28 = vector.broadcast %27 : i1 to vector<256x1xi1>
    %29 = vector.broadcast %28 : vector<256x1xi1> to vector<256x1xi1>
    %30 = arith.xori %26, %29 : vector<256x1xi1>
    %31 = arith.andi %30, %24 : vector<256x1xi1>
    %32 = vector.broadcast %20 : i32 to vector<256x1xi32>
    %33 = arith.addi %22, %32 : vector<256x1xi32>
    %34 = arith.select %31, %33, %22 : vector<256x1xi1>, vector<256x1xi32>
    %c15_i32 = arith.constant 15 : i32
    %35 = vector.broadcast %c15_i32 : i32 to vector<256x1xi32>
    %36 = arith.cmpi eq, %34, %35 : vector<256x1xi32>
    %c255_i32 = arith.constant 255 : i32
    %37 = tpu.dynamic_rotate %8 by %c255_i32 dim 0 : vector<256x16xf32>, i32 -> vector<256x16xf32>
    %cst_16 = arith.constant 0.000000e+00 : f32
    %38 = vector.shape_cast %36 : vector<256x1xi1> to vector<256x1xi1>
    %39 = vector.broadcast %38 : vector<256x1xi1> to vector<256x16xi1>
    %40 = vector.broadcast %cst_16 : f32 to vector<256x16xf32>
    %41 = arith.select %39, %40, %37 : vector<256x16xi1>, vector<256x16xf32>
    %c255_i32_17 = arith.constant 255 : i32
    %42 = tpu.dynamic_rotate %17 by %c255_i32_17 dim 0 : vector<256x16xf32>, i32 -> vector<256x16xf32>
    %cst_18 = arith.constant 0.000000e+00 : f32
    %43 = vector.shape_cast %36 : vector<256x1xi1> to vector<256x1xi1>
    %44 = vector.broadcast %43 : vector<256x1xi1> to vector<256x16xi1>
    %45 = vector.broadcast %cst_18 : f32 to vector<256x16xf32>
    %46 = arith.select %44, %45, %42 : vector<256x16xi1>, vector<256x16xf32>
    %47 = arith.truncf %8 : vector<256x16xf32> to vector<256x16xbf16>
    %48 = arith.truncf %41 : vector<256x16xf32> to vector<256x16xbf16>
    %49 = arith.truncf %17 : vector<256x16xf32> to vector<256x16xbf16>
    %50 = arith.truncf %46 : vector<256x16xf32> to vector<256x16xbf16>
    %51 = tpu.concatenate %47, %48, %49, %50 in 1 : vector<256x16xbf16>, vector<256x16xbf16>, vector<256x16xbf16>, vector<256x16xbf16> -> vector<256x64xbf16>
    %c0_19 = arith.constant 0 : index
    %c0_20 = arith.constant 0 : index
    %52 = vector.load %arg6[%c0_19, %c0_20] : memref<64x64xbf16, #tpu.memory_space<vmem>>, vector<64x64xbf16>
    %cst_21 = arith.constant dense<0.000000e+00> : vector<256x64xf32>
    %53 = tpu.matmul %51, %52, %cst_21 {dimension_numbers = #tpu.dot_dimension_numbers<[1], [0], [0], [1], [0, 0, 1, 1], [], []>} : vector<256x64xbf16>, vector<64x64xbf16>, vector<256x64xf32> -> vector<256x64xf32>
    %c0_22 = arith.constant 0 : index
    %c0_23 = arith.constant 0 : index
    %54 = vector.load %arg7[%c0_22, %c0_23] : memref<1x64xf32, #tpu.memory_space<vmem>>, vector<1x64xf32>
    %55 = vector.broadcast %54 : vector<1x64xf32> to vector<256x64xf32>
    %56 = arith.addf %53, %55 : vector<256x64xf32>
    %cst_24 = arith.constant 0.000000e+00 : f32
    %57 = vector.broadcast %cst_24 : f32 to vector<256x64xf32>
    %58 = arith.maximumf %56, %57 : vector<256x64xf32>
    %59 = arith.truncf %58 : vector<256x64xf32> to vector<256x64xbf16>
    %c0_25 = arith.constant 0 : index
    %c0_26 = arith.constant 0 : index
    %60 = vector.load %arg8[%c0_25, %c0_26] : memref<64x128xbf16, #tpu.memory_space<vmem>>, vector<64x128xbf16>
    %cst_27 = arith.constant dense<0.000000e+00> : vector<256x128xf32>
    %61 = tpu.matmul %59, %60, %cst_27 {dimension_numbers = #tpu.dot_dimension_numbers<[1], [0], [0], [1], [0, 0, 1, 1], [], []>} : vector<256x64xbf16>, vector<64x128xbf16>, vector<256x128xf32> -> vector<256x128xf32>
    %c0_28 = arith.constant 0 : index
    %c0_29 = arith.constant 0 : index
    %62 = vector.load %arg9[%c0_28, %c0_29] : memref<1x128xf32, #tpu.memory_space<vmem>>, vector<1x128xf32>
    %63 = vector.broadcast %62 : vector<1x128xf32> to vector<256x128xf32>
    %64 = arith.addf %61, %63 : vector<256x128xf32>
    %cst_30 = arith.constant 0.000000e+00 : f32
    %65 = vector.broadcast %cst_30 : f32 to vector<256x128xf32>
    %66 = arith.maximumf %64, %65 : vector<256x128xf32>
    %67 = arith.truncf %66 : vector<256x128xf32> to vector<256x128xbf16>
    %c0_31 = arith.constant 0 : index
    %c0_32 = arith.constant 0 : index
    %c0_33 = arith.constant 0 : index
    %68 = vector.load %arg10[%c0_31, %c0_32, %c0_33] : memref<1x256x128xbf16, #tpu.memory_space<vmem>>, vector<1x256x128xbf16>
    %69 = vector.shape_cast %68 : vector<1x256x128xbf16> to vector<256x128xbf16>
    %70 = vector.shape_cast %67 : vector<256x128xbf16> to vector<1x256x128xbf16>
    tpu.vector_store %arg10[%c0_31, %c0_32, %c0_33], %70 {strides = array<i32>} : memref<1x256x128xbf16, #tpu.memory_space<vmem>>, vector<1x256x128xbf16>,
    return
  }
  func.func @transform_0(%arg0: i32, %arg1: i32) -> (i32, i32, i32) {
    %c0_i32 = arith.constant 0 : i32
    %c0_i32_0 = arith.constant 0 : i32
    return %arg0, %arg1, %c0_i32 : i32, i32, i32
  }
  func.func @transform_1(%arg0: i32, %arg1: i32) -> (i32, i32, i32) {
    %c1_i32 = arith.constant 1 : i32
    %0 = arith.addi %arg1, %c1_i32 : i32
    %c16_i32 = arith.constant 16 : i32
    %1 = arith.muli %0, %c16_i32 : i32
    %c15_i32 = arith.constant 15 : i32
    %2 = arith.minsi %1, %c15_i32 : i32
    %c0_i32 = arith.constant 0 : i32
    %c0_i32_0 = arith.constant 0 : i32
    return %arg0, %2, %c0_i32 : i32, i32, i32
  }
  func.func @transform_2(%arg0: i32, %arg1: i32) -> (i32, i32) {
    %c0_i32 = arith.constant 0 : i32
    %c0_i32_0 = arith.constant 0 : i32
    %c0_i32_1 = arith.constant 0 : i32
    return %c0_i32, %c0_i32_0 : i32, i32
  }
  func.func @transform_3(%arg0: i32, %arg1: i32) -> (i32, i32) {
    %c0_i32 = arith.constant 0 : i32
    %c0_i32_0 = arith.constant 0 : i32
    %c0_i32_1 = arith.constant 0 : i32
    return %c0_i32, %c0_i32_0 : i32, i32
  }
  func.func @transform_4(%arg0: i32, %arg1: i32) -> (i32, i32) {
    %c0_i32 = arith.constant 0 : i32
    %c0_i32_0 = arith.constant 0 : i32
    %c0_i32_1 = arith.constant 0 : i32
    return %c0_i32, %c0_i32_0 : i32, i32
  }
  func.func @transform_5(%arg0: i32, %arg1: i32) -> (i32, i32) {
    %c0_i32 = arith.constant 0 : i32
    %c0_i32_0 = arith.constant 0 : i32
    %c0_i32_1 = arith.constant 0 : i32
    return %c0_i32, %c0_i32_0 : i32, i32
  }
  func.func @transform_6(%arg0: i32, %arg1: i32) -> (i32, i32) {
    %c0_i32 = arith.constant 0 : i32
    %c0_i32_0 = arith.constant 0 : i32
    %c0_i32_1 = arith.constant 0 : i32
    return %c0_i32, %c0_i32_0 : i32, i32
  }
  func.func @transform_7(%arg0: i32, %arg1: i32) -> (i32, i32) {
    %c0_i32 = arith.constant 0 : i32
    %c0_i32_0 = arith.constant 0 : i32
    %c0_i32_1 = arith.constant 0 : i32
    return %c0_i32, %c0_i32_0 : i32, i32
  }
  func.func @transform_8(%arg0: i32, %arg1: i32) -> (i32, i32, i32) {
    %c0_i32 = arith.constant 0 : i32
    %c0_i32_0 = arith.constant 0 : i32
    return %arg0, %arg1, %c0_i32 : i32, i32, i32
  }
}

</mosaic_0001>

<llo_original>
// kernel: tpu_custom_call.1
$region0: #{tpu_custom_call.1}
  #allocation0 [shape = 'u32[]', space=smem, size = 0x4, offset = 0x4, fixed_abs, tag = 'smem constant byte address 0x4 - core index']
  #allocation1 [shape = 'u32[72,128]{1,0:T(1,128)}', space=vmem, size = 0x9000, scoped, tag = 'internal scratch']
  #allocation2 [shape = 'f32[16,16]{1,0:T(8,128)}', space=vmem, size = 0x2000, scoped, tag = 'scratch operand']
  %s0 = inlined_call_operand.vmem [shape: bf16[2,256,64], index: 0, kind: input, shape index: {}]
  %s1 = inlined_call_operand.vmem [shape: bf16[2,256,64], index: 1, kind: input, shape index: {}]
  %s2 = inlined_call_operand.vmem [shape: bf16[64,16], index: 2, kind: input, shape index: {}]
  %s3 = inlined_call_operand.vmem [shape: f32[1,16], index: 3, kind: input, shape index: {}]
  %s4 = inlined_call_operand.vmem [shape: bf16[64,64], index: 4, kind: input, shape index: {}]
  %s5 = inlined_call_operand.vmem [shape: f32[1,64], index: 5, kind: input, shape index: {}]
  %s6 = inlined_call_operand.vmem [shape: bf16[64,128], index: 6, kind: input, shape index: {}]
  %s7 = inlined_call_operand.vmem [shape: f32[1,128], index: 7, kind: input, shape index: {}]
  %s8 = inlined_call_operand.hbm [shape: bf16[2,256,128], index: 8, kind: output, shape index: {}]
  %s9 = sld [smem:[#allocation0]]
  $region73: #{tpu_custom_call.1} parent=0
    _
  %s11 = ssub.s32 1, %s9
  %s12 = scalar_select 0, %s11, %s9
  $region1: #{tpu_custom_call.1} parent=0
    #allocation3 [shape = 'u8[131072]{0}', space=vmem, size = 0x20000, scoped, tag = 'output window, operand 0']
    #allocation4 [shape = 's32[2]{0}', space=sflag, size = 0x8, scoped, tag = 'scoped memory for tpu_custom_call.1']
    %13 = vsyncpa [#allocation4], 0
    %s14 = scalar_lea.sflag [#allocation4], 1
    %15 = vsyncpa %s14, 0
    loop: start=0, step=1, limit=4
    $region2: #{tpu_custom_call.1} parent=1 // loop_pre_header
      _
    $region3: #{tpu_custom_call.1} parent=1 // loop_header
      %s17 = sphi 0, %s21
      %p18 = scmp.ge.s32.totalorder %s17, 4
      %s24 = sphi 0, %s36
      %s25 = sphi 0, %s32
      %s26 = sphi 0, %s24
      %s27 = sphi 0, %s25
      %s28 = sphi 0, %s26
      %s29 = sphi 0, %s27
      %s41 = sphi 0, %s43
      %s44 = sphi 0, %s41
      %s45 = sphi 0, %s44
      %s61 = sphi 0, %s45
      %s77 = sphi 0, %s79
      %s80 = sphi 0, %s77
      %s81 = sphi 0, %s80
      %s97 = sphi 0, %s81
      %s101 = sphi 0, %s101
      %s103 = sphi 0, %s101
      %s104 = sphi 0, %s103
      %s118 = sphi 0, %s104
      %s122 = sphi 0, %s122
      %s124 = sphi 0, %s122
      %s125 = sphi 0, %s124
      %s139 = sphi 0, %s125
      %s143 = sphi 0, %s143
      %s145 = sphi 0, %s143
      %s146 = sphi 0, %s145
      %s160 = sphi 0, %s146
      %s164 = sphi 0, %s164
      %s166 = sphi 0, %s164
      %s167 = sphi 0, %s166
      %s181 = sphi 0, %s167
      %s185 = sphi 0, %s185
      %s187 = sphi 0, %s185
      %s188 = sphi 0, %s187
      %s202 = sphi 0, %s188
      %s206 = sphi 0, %s206
      %s208 = sphi 0, %s206
      %s209 = sphi 0, %s208
      %s223 = sphi 0, %s209
      %s231 = sphi 0, %s233
      %s234 = sphi 0, %s231
      %s235 = sphi 0, %s234
      %s251 = sphi 0, %s235
    $region4: #{tpu_custom_call.1} parent=1 // loop_header_branch
      %20 = sbr.rel (%p18) target = $region8
    $region5: #{tpu_custom_call.1} parent=1 // loop_body
      %s22 = ssub.s32 %s17, 1
      %s23 = ssub.s32 %s17, 2
      %s30 = sadd.s32 1, %s25
      %p31 = scmp.ge.s32.totalorder %s30, 1
      %s32 = scalar_select %p31, 0, %s30
      %s33 = sadd.s32 1, %s24
      %s34 = scalar_select %p31, %s33, %s24
      %p35 = scmp.ge.s32.totalorder %s34, 2
      %s36 = scalar_select %p35, 0, %s34
      %s37 = ssub.s32 %s24, %s36
      %s38 = ssub.s32 %s25, %s32
      %s39 = sor.u32 %s37, %s38
      %p40 = scmp.eq.s32.totalorder %s39, 0
      %s42 = sadd.s32 %s41, 1
      %s43 = scalar_select %p40, %s41, %s42
      %p46 = pneg %p40
      %p47 = scmp.eq.s32.totalorder %s17, 1
      %p48 = por %p46, %p47
      %p49 = scmp.ne.s32.totalorder %s41, %s44
      %p50 = scmp.eq.s32.totalorder %s17, 0
      %p51 = por %p49, %p50
      %p52 = scmp.ne.s32.totalorder %s41, %s44
      %p53 = scmp.eq.s32.totalorder %s22, 1
      %p54 = por %p52, %p53
      %p55 = scmp.ne.s32.totalorder %s44, %s45
      %p56 = scmp.eq.s32.totalorder %s22, 0
      %p57 = por %p55, %p56
      %p58 = scmp.ne.s32.totalorder %s44, %s45
      %p59 = scmp.eq.s32.totalorder %s23, 1
      %p60 = por %p58, %p59
      %p62 = scmp.ne.s32.totalorder %s45, %s61
      %p63 = scmp.eq.s32.totalorder %s23, 0
      %p64 = por %p62, %p63
      %s65 = sadd.s32 %s25, 1
      %s66 = smul.u32 %s65, 16
      %p67 = scmp.lt.s32.totalorder %s66, 15
      %s68 = scalar_select %p67, %s66, 15
      %s69 = sadd.s32 %s32, 1
      %s70 = smul.u32 %s69, 16
      %p71 = scmp.lt.s32.totalorder %s70, 15
      %s72 = scalar_select %p71, %s70, 15
      %s73 = ssub.s32 %s24, %s36
      %s74 = ssub.s32 %s68, %s72
      %s75 = sor.u32 %s73, %s74
      %p76 = scmp.eq.s32.totalorder %s75, 0
      %s78 = sadd.s32 %s77, 1
      %s79 = scalar_select %p76, %s77, %s78
      %p82 = pneg %p76
      %p83 = scmp.eq.s32.totalorder %s17, 1
      %p84 = por %p82, %p83
      %p85 = scmp.ne.s32.totalorder %s77, %s80
      %p86 = scmp.eq.s32.totalorder %s17, 0
      %p87 = por %p85, %p86
      %p88 = scmp.ne.s32.totalorder %s77, %s80
      %p89 = scmp.eq.s32.totalorder %s22, 1
      %p90 = por %p88, %p89
      %p91 = scmp.ne.s32.totalorder %s80, %s81
      %p92 = scmp.eq.s32.totalorder %s22, 0
      %p93 = por %p91, %p92
      %p94 = scmp.ne.s32.totalorder %s80, %s81
      %p95 = scmp.eq.s32.totalorder %s23, 1
      %p96 = por %p94, %p95
      %p98 = scmp.ne.s32.totalorder %s81, %s97
      %p99 = scmp.eq.s32.totalorder %s23, 0
      %p100 = por %p98, %p99
      %s102 = sadd.s32 %s101, 1
      %p105 = scmp.eq.s32.totalorder %s17, 1
      %p106 = scmp.ne.s32.totalorder %s101, %s103
      %p107 = scmp.eq.s32.totalorder %s17, 0
      %p108 = por %p106, %p107
      %p109 = scmp.ne.s32.totalorder %s101, %s103
      %p110 = scmp.eq.s32.totalorder %s22, 1
      %p111 = por %p109, %p110
      %p112 = scmp.ne.s32.totalorder %s103, %s104
      %p113 = scmp.eq.s32.totalorder %s22, 0
      %p114 = por %p112, %p113
      %p115 = scmp.ne.s32.totalorder %s103, %s104
      %p116 = scmp.eq.s32.totalorder %s23, 1
      %p117 = por %p115, %p116
      %p119 = scmp.ne.s32.totalorder %s104, %s118
      %p120 = scmp.eq.s32.totalorder %s23, 0
      %p121 = por %p119, %p120
      %s123 = sadd.s32 %s122, 1
      %p126 = scmp.eq.s32.totalorder %s17, 1
      %p127 = scmp.ne.s32.totalorder %s122, %s124
      %p128 = scmp.eq.s32.totalorder %s17, 0
      %p129 = por %p127, %p128
      %p130 = scmp.ne.s32.totalorder %s122, %s124
      %p131 = scmp.eq.s32.totalorder %s22, 1
      %p132 = por %p130, %p131
      %p133 = scmp.ne.s32.totalorder %s124, %s125
      %p134 = scmp.eq.s32.totalorder %s22, 0
      %p135 = por %p133, %p134
      %p136 = scmp.ne.s32.totalorder %s124, %s125
      %p137 = scmp.eq.s32.totalorder %s23, 1
      %p138 = por %p136, %p137
      %p140 = scmp.ne.s32.totalorder %s125, %s139
      %p141 = scmp.eq.s32.totalorder %s23, 0
      %p142 = por %p140, %p141
      %s144 = sadd.s32 %s143, 1
      %p147 = scmp.eq.s32.totalorder %s17, 1
      %p148 = scmp.ne.s32.totalorder %s143, %s145
      %p149 = scmp.eq.s32.totalorder %s17, 0
      %p150 = por %p148, %p149
      %p151 = scmp.ne.s32.totalorder %s143, %s145
      %p152 = scmp.eq.s32.totalorder %s22, 1
      %p153 = por %p151, %p152
      %p154 = scmp.ne.s32.totalorder %s145, %s146
      %p155 = scmp.eq.s32.totalorder %s22, 0
      %p156 = por %p154, %p155
      %p157 = scmp.ne.s32.totalorder %s145, %s146
      %p158 = scmp.eq.s32.totalorder %s23, 1
      %p159 = por %p157, %p158
      %p161 = scmp.ne.s32.totalorder %s146, %s160
      %p162 = scmp.eq.s32.totalorder %s23, 0
      %p163 = por %p161, %p162
      %s165 = sadd.s32 %s164, 1
      %p168 = scmp.eq.s32.totalorder %s17, 1
      %p169 = scmp.ne.s32.totalorder %s164, %s166
      %p170 = scmp.eq.s32.totalorder %s17, 0
      %p171 = por %p169, %p170
      %p172 = scmp.ne.s32.totalorder %s164, %s166
      %p173 = scmp.eq.s32.totalorder %s22, 1
      %p174 = por %p172, %p173
      %p175 = scmp.ne.s32.totalorder %s166, %s167
      %p176 = scmp.eq.s32.totalorder %s22, 0
      %p177 = por %p175, %p176
      %p178 = scmp.ne.s32.totalorder %s166, %s167
      %p179 = scmp.eq.s32.totalorder %s23, 1
      %p180 = por %p178, %p179
      %p182 = scmp.ne.s32.totalorder %s167, %s181
      %p183 = scmp.eq.s32.totalorder %s23, 0
      %p184 = por %p182, %p183
      %s186 = sadd.s32 %s185, 1
      %p189 = scmp.eq.s32.totalorder %s17, 1
      %p190 = scmp.ne.s32.totalorder %s185, %s187
      %p191 = scmp.eq.s32.totalorder %s17, 0
      %p192 = por %p190, %p191
      %p193 = scmp.ne.s32.totalorder %s185, %s187
      %p194 = scmp.eq.s32.totalorder %s22, 1
      %p195 = por %p193, %p194
      %p196 = scmp.ne.s32.totalorder %s187, %s188
      %p197 = scmp.eq.s32.totalorder %s22, 0
      %p198 = por %p196, %p197
      %p199 = scmp.ne.s32.totalorder %s187, %s188
      %p200 = scmp.eq.s32.totalorder %s23, 1
      %p201 = por %p199, %p200
      %p203 = scmp.ne.s32.totalorder %s188, %s202
      %p204 = scmp.eq.s32.totalorder %s23, 0
      %p205 = por %p203, %p204
      %s207 = sadd.s32 %s206, 1
      %p210 = scmp.eq.s32.totalorder %s17, 1
      %p211 = scmp.ne.s32.totalorder %s206, %s208
      %p212 = scmp.eq.s32.totalorder %s17, 0
      %p213 = por %p211, %p212
      %p214 = scmp.ne.s32.totalorder %s206, %s208
      %p215 = scmp.eq.s32.totalorder %s22, 1
      %p216 = por %p214, %p215
      %p217 = scmp.ne.s32.totalorder %s208, %s209
      %p218 = scmp.eq.s32.totalorder %s22, 0
      %p219 = por %p217, %p218
      %p220 = scmp.ne.s32.totalorder %s208, %s209
      %p221 = scmp.eq.s32.totalorder %s23, 1
      %p222 = por %p220, %p221
      %p224 = scmp.ne.s32.totalorder %s209, %s223
      %p225 = scmp.eq.s32.totalorder %s23, 0
      %p226 = por %p224, %p225
      %s227 = ssub.s32 %s24, %s36
      %s228 = ssub.s32 %s25, %s32
      %s229 = sor.u32 %s227, %s228
      %p230 = scmp.eq.s32.totalorder %s229, 0
      %s232 = sadd.s32 %s231, 1
      %s233 = scalar_select %p230, %s231, %s232
      %p236 = pneg %p230
      %p237 = scmp.eq.s32.totalorder %s17, 1
      %p238 = por %p236, %p237
      %p239 = scmp.ne.s32.totalorder %s231, %s234
      %p240 = scmp.eq.s32.totalorder %s17, 0
      %p241 = por %p239, %p240
      %p242 = scmp.ne.s32.totalorder %s231, %s234
      %p243 = scmp.eq.s32.totalorder %s22, 1
      %p244 = por %p242, %p243
      %p245 = scmp.ne.s32.totalorder %s234, %s235
      %p246 = scmp.eq.s32.totalorder %s22, 0
      %p247 = por %p245, %p246
      %p248 = scmp.ne.s32.totalorder %s234, %s235
      %p249 = scmp.eq.s32.totalorder %s23, 1
      %p250 = por %p248, %p249
      %p252 = scmp.ne.s32.totalorder %s235, %s251
      %p253 = scmp.eq.s32.totalorder %s23, 0
      %p254 = por %p252, %p253
      %p255 = scmp.le.s32.totalorder 1, %s17
      %p256 = scmp.lt.s32.totalorder %s17, 3
      %p257 = pnand %p255, %p256
      %p258 = pneg %p257
      // Predicated region
      $region9: #{tpu_custom_call.1} parent=5 // pred_check
        _
      $region10: #{tpu_custom_call.1} parent=5 // pred_check_branch
        %260 = sbr.rel (%p257) target = $region12
      $region11: #{tpu_custom_call.1} parent=5 // pred_region
        %s261 = ssub.s32 %s17, 1
        // Predicated region
        $region13: #{tpu_custom_call.1} parent=11 // pred_check
          %p262 = pneg %p114
        $region14: #{tpu_custom_call.1} parent=11 // pred_check_branch
          %264 = sbr.rel (%p262) target = $region16
        $region15: #{tpu_custom_call.1} parent=11 // pred_region
          _
        $region16: #{tpu_custom_call.1} parent=11 // pred_fallthru
          _
        // Predicated region
        $region17: #{tpu_custom_call.1} parent=11 // pred_check
          %p265 = pneg %p135
        $region18: #{tpu_custom_call.1} parent=11 // pred_check_branch
          %267 = sbr.rel (%p265) target = $region20
        $region19: #{tpu_custom_call.1} parent=11 // pred_region
          _
        $region20: #{tpu_custom_call.1} parent=11 // pred_fallthru
          _
        // Predicated region
        $region21: #{tpu_custom_call.1} parent=11 // pred_check
          %p268 = pneg %p156
        $region22: #{tpu_custom_call.1} parent=11 // pred_check_branch
          %270 = sbr.rel (%p268) target = $region24
        $region23: #{tpu_custom_call.1} parent=11 // pred_region
          _
        $region24: #{tpu_custom_call.1} parent=11 // pred_fallthru
          _
        // Predicated region
        $region25: #{tpu_custom_call.1} parent=11 // pred_check
          %p271 = pneg %p177
        $region26: #{tpu_custom_call.1} parent=11 // pred_check_branch
          %273 = sbr.rel (%p271) target = $region28
        $region27: #{tpu_custom_call.1} parent=11 // pred_region
          _
        $region28: #{tpu_custom_call.1} parent=11 // pred_fallthru
          _
        // Predicated region
        $region29: #{tpu_custom_call.1} parent=11 // pred_check
          %p274 = pneg %p198
        $region30: #{tpu_custom_call.1} parent=11 // pred_check_branch
          %276 = sbr.rel (%p274) target = $region32
        $region31: #{tpu_custom_call.1} parent=11 // pred_region
          _
        $region32: #{tpu_custom_call.1} parent=11 // pred_fallthru
          _
        // Predicated region
        $region33: #{tpu_custom_call.1} parent=11 // pred_check
          %p277 = pneg %p219
        $region34: #{tpu_custom_call.1} parent=11 // pred_check_branch
          %279 = sbr.rel (%p277) target = $region36
        $region35: #{tpu_custom_call.1} parent=11 // pred_region
          _
        $region36: #{tpu_custom_call.1} parent=11 // pred_fallthru
          _
      $region12: #{tpu_custom_call.1} parent=5 // pred_fallthru
        _
      %p280 = scmp.lt.s32.totalorder %s17, 2
      // Predicated region
      $region37: #{tpu_custom_call.1} parent=5 // pred_check
        %p281 = pneg %p280
      $region38: #{tpu_custom_call.1} parent=5 // pred_check_branch
        %283 = sbr.rel (%p281) target = $region40
      $region39: #{tpu_custom_call.1} parent=5 // pred_region
        // Predicated region
        $region41: #{tpu_custom_call.1} parent=39 // pred_check
          %p284 = pneg %p51
        $region42: #{tpu_custom_call.1} parent=39 // pred_check_branch
          %286 = sbr.rel (%p284) target = $region44
        $region43: #{tpu_custom_call.1} parent=39 // pred_region
          %s287 = smul.u32 32, %s25
          %p288 = scmp.lt.s32.totalorder %s24, 1
          %s289 = scalar_select %p288, %s24, 1
          %p290 = scmp.lt.s32.totalorder %s287, 31
          %s291 = scalar_select %p290, %s287, 31
          %s292 = smul.addr %s289, 32
          %s293 = sadd.s32 %s291, %s292
          %s294 = smul.addr %s293, 4
          %s295 = scalar_lea.vmem %s0, %s294
          %s296 = smul.u32 32, %s25
        $region44: #{tpu_custom_call.1} parent=39 // pred_fallthru
          _
        // Predicated region
        $region45: #{tpu_custom_call.1} parent=39 // pred_check
          %p297 = pneg %p87
        $region46: #{tpu_custom_call.1} parent=39 // pred_check_branch
          %299 = sbr.rel (%p297) target = $region48
        $region47: #{tpu_custom_call.1} parent=39 // pred_region
          %s300 = sadd.s32 %s25, 1
          %s301 = smul.u32 %s300, 16
          %p302 = scmp.lt.s32.totalorder %s301, 15
          %s303 = scalar_select %p302, %s301, 15
          %s304 = smul.u32 2, %s303
          %p305 = scmp.lt.s32.totalorder %s24, 1
          %s306 = scalar_select %p305, %s24, 1
          %p307 = scmp.lt.s32.totalorder %s304, 31
          %s308 = scalar_select %p307, %s304, 31
          %s309 = smul.addr %s306, 32
          %s310 = sadd.s32 %s308, %s309
          %s311 = smul.addr %s310, 4
          %s312 = scalar_lea.vmem %s1, %s311
          %s313 = sadd.s32 %s25, 1
          %s314 = smul.u32 %s313, 16
          %p315 = scmp.lt.s32.totalorder %s314, 15
          %s316 = scalar_select %p315, %s314, 15
          %s317 = smul.u32 2, %s316
        $region48: #{tpu_custom_call.1} parent=39 // pred_fallthru
          _
      $region40: #{tpu_custom_call.1} parent=5 // pred_fallthru
        _
      %p318 = scmp.le.s32.totalorder 1, %s17
      %p319 = scmp.lt.s32.totalorder %s17, 3
      %p320 = pnand %p318, %p319
      %p321 = pneg %p320
      // Predicated region
      $region49: #{tpu_custom_call.1} parent=5 // pred_check
        _
      $region50: #{tpu_custom_call.1} parent=5 // pred_check_branch
        %323 = sbr.rel (%p320) target = $region52
      $region51: #{tpu_custom_call.1} parent=5 // pred_region
        %s324 = ssub.s32 %s17, 1
        %s325 = smul.u32 32, %s27
        %p326 = scmp.lt.s32.totalorder %s26, 1
        %s327 = scalar_select %p326, %s26, 1
        %p328 = scmp.lt.s32.totalorder %s325, 31
        %s329 = scalar_select %p328, %s325, 31
        %s330 = smul.addr %s327, 32
        %s331 = sadd.s32 %s329, %s330
        %s332 = smul.addr %s331, 4
        %s333 = scalar_lea.vmem %s0, %s332
        %p334 = pneg %p57
        %p335 = pneg %p54
        %s336 = sadd.s32 %s27, 1
        %s337 = smul.u32 %s336, 16
        %p338 = scmp.lt.s32.totalorder %s337, 15
        %s339 = scalar_select %p338, %s337, 15
        %s340 = smul.u32 2, %s339
        %p341 = scmp.lt.s32.totalorder %s26, 1
        %s342 = scalar_select %p341, %s26, 1
        %p343 = scmp.lt.s32.totalorder %s340, 31
        %s344 = scalar_select %p343, %s340, 31
        %s345 = smul.addr %s342, 32
        %s346 = sadd.s32 %s344, %s345
        %s347 = smul.addr %s346, 4
        %s348 = scalar_lea.vmem %s1, %s347
        %p349 = pneg %p93
        %p350 = pneg %p90
        %p351 = pneg %p114
        %p352 = pneg %p111
        %p353 = pneg %p135
        %p354 = pneg %p132
        %p355 = pneg %p156
        %p356 = pneg %p153
        %p357 = pneg %p177
        %p358 = pneg %p174
        %p359 = pneg %p198
        %p360 = pneg %p195
        %p361 = pneg %p219
        %p362 = pneg %p216
        %p363 = pneg %p247
        %p364 = pneg %p244
        %s365 = sand.u32 %s234, 1
        %s366 = scalar_lea.sflag [#allocation4], %s365
        %s367 = sand.u32 %s234, 1
        %s368 = smul.addr %s367, 128
        %s369 = scalar_lea.vmem [#allocation3], %s368
        %s370 = smul.u32 32, %s27
        %p371 = scmp.lt.s32.totalorder %s26, 1
        %s372 = scalar_select %p371, %s26, 1
        %p373 = scmp.lt.s32.totalorder %s370, 31
        %s374 = scalar_select %p373, %s370, 31
        %s375 = smul.addr %s372, 32
        %s376 = sadd.s32 %s374, %s375
        %s377 = smul.addr %s376, 4
        %s378 = scalar_lea.vmem %s0, %s377
        %s379 = smul.u32 32, %s27
        %s380 = sadd.s32 %s27, 1
        %s381 = smul.u32 %s380, 16
        %p382 = scmp.lt.s32.totalorder %s381, 15
        %s383 = scalar_select %p382, %s381, 15
        %s384 = smul.u32 2, %s383
        %p385 = scmp.lt.s32.totalorder %s26, 1
        %s386 = scalar_select %p385, %s26, 1
        %p387 = scmp.lt.s32.totalorder %s384, 31
        %s388 = scalar_select %p387, %s384, 31
        %s389 = smul.addr %s386, 32
        %s390 = sadd.s32 %s388, %s389
        %s391 = smul.addr %s390, 4
        %s392 = scalar_lea.vmem %s1, %s391
        %s393 = sadd.s32 %s27, 1
        %s394 = smul.u32 %s393, 16
        %p395 = scmp.lt.s32.totalorder %s394, 15
        %s396 = scalar_select %p395, %s394, 15
        %s397 = smul.u32 2, %s396
        %s398 = smul.u32 32, %s27
        %v400 = vld [vmem:[%s2] sm:$0xf]
        %v401 = vld [vmem:[%s2 + $0x4] sm:$0xf]
        %v402 = vld [vmem:[%s2 + $0x8] sm:$0xf]
        %v403 = vld [vmem:[%s2 + $0xc] sm:$0xf]
        %v404 = vld [vmem:[%s2 + $0x10] sm:$0xf]
        %v405 = vld [vmem:[%s2 + $0x14] sm:$0xf]
        %v406 = vld [vmem:[%s2 + $0x18] sm:$0xf]
        %v407 = vld [vmem:[%s2 + $0x1c] sm:$0xf]
        %v408 = vld [vmem:[%s3] sm:$0x1]
        %v409 = vld [vmem:[%s378] sm:$0xf]
        %v410 = vld [vmem:[%s378 + $0x4] sm:$0xf]
        %v411 = vld [vmem:[%s378 + $0x8] sm:$0xf]
        %v412 = vld [vmem:[%s378 + $0xc] sm:$0xf]
        %v413 = vld [vmem:[%s378 + $0x10] sm:$0xf]
        %v414 = vld [vmem:[%s378 + $0x14] sm:$0xf]
        %v415 = vld [vmem:[%s378 + $0x18] sm:$0xf]
        %v416 = vld [vmem:[%s378 + $0x1c] sm:$0xf]
        %v417 = vld [vmem:[%s378 + $0x20] sm:$0xf]
        %v418 = vld [vmem:[%s378 + $0x24] sm:$0xf]
        %v419 = vld [vmem:[%s378 + $0x28] sm:$0xf]
        %v420 = vld [vmem:[%s378 + $0x2c] sm:$0xf]
        %v421 = vld [vmem:[%s378 + $0x30] sm:$0xf]
        %v422 = vld [vmem:[%s378 + $0x34] sm:$0xf]
        %v423 = vld [vmem:[%s378 + $0x38] sm:$0xf]
        %v424 = vld [vmem:[%s378 + $0x3c] sm:$0xf]
        %v425 = vld [vmem:[%s378 + $0x40] sm:$0xf]
        %v426 = vld [vmem:[%s378 + $0x44] sm:$0xf]
        %v427 = vld [vmem:[%s378 + $0x48] sm:$0xf]
        %v428 = vld [vmem:[%s378 + $0x4c] sm:$0xf]
        %v429 = vld [vmem:[%s378 + $0x50] sm:$0xf]
        %v430 = vld [vmem:[%s378 + $0x54] sm:$0xf]
        %v431 = vld [vmem:[%s378 + $0x58] sm:$0xf]
        %v432 = vld [vmem:[%s378 + $0x5c] sm:$0xf]
        %v433 = vld [vmem:[%s378 + $0x60] sm:$0xf]
        %v434 = vld [vmem:[%s378 + $0x64] sm:$0xf]
        %v435 = vld [vmem:[%s378 + $0x68] sm:$0xf]
        %v436 = vld [vmem:[%s378 + $0x6c] sm:$0xf]
        %v437 = vld [vmem:[%s378 + $0x70] sm:$0xf]
        %v438 = vld [vmem:[%s378 + $0x74] sm:$0xf]
        %v439 = vld [vmem:[%s378 + $0x78] sm:$0xf]
        %v440 = vld [vmem:[%s378 + $0x7c] sm:$0xf]
        %v442 = vperm.slane %v408, 0
        %v476 = vunpack.c.l.b16 %v409
        %v477 = vunpack.c.l.b16 %v410
        %v478 = vunpack.c.l.b16 %v411
        %v479 = vunpack.c.l.b16 %v412
        %v480 = vunpack.c.l.b16 %v413
        %v481 = vunpack.c.l.b16 %v414
        %v482 = vunpack.c.l.b16 %v415
        %v483 = vunpack.c.l.b16 %v416
        %v484 = vunpack.c.l.b16 %v417
        %v485 = vunpack.c.l.b16 %v418
        %v486 = vunpack.c.l.b16 %v419
        %v487 = vunpack.c.l.b16 %v420
        %v488 = vunpack.c.l.b16 %v421
        %v489 = vunpack.c.l.b16 %v422
        %v490 = vunpack.c.l.b16 %v423
        %v491 = vunpack.c.l.b16 %v424
        %v492 = vunpack.c.l.b16 %v425
        %v493 = vunpack.c.l.b16 %v426
        %v494 = vunpack.c.l.b16 %v427
        %v495 = vunpack.c.l.b16 %v428
        %v496 = vunpack.c.l.b16 %v429
        %v497 = vunpack.c.l.b16 %v430
        %v498 = vunpack.c.l.b16 %v431
        %v499 = vunpack.c.l.b16 %v432
        %v500 = vunpack.c.l.b16 %v433
        %v501 = vunpack.c.l.b16 %v434
        %v502 = vunpack.c.l.b16 %v435
        %v503 = vunpack.c.l.b16 %v436
        %v504 = vunpack.c.l.b16 %v437
        %v505 = vunpack.c.l.b16 %v438
        %v506 = vunpack.c.l.b16 %v439
        %v507 = vunpack.c.l.b16 %v440
        %v508 = vpack.c.b16 %v477, %v476
        %v509 = vpack.c.b16 %v479, %v478
        %v510 = vpack.c.b16 %v481, %v480
        %v511 = vpack.c.b16 %v483, %v482
        %v512 = vpack.c.b16 %v485, %v484
        %v513 = vpack.c.b16 %v487, %v486
        %v514 = vpack.c.b16 %v489, %v488
        %v515 = vpack.c.b16 %v491, %v490
        %v516 = vpack.c.b16 %v493, %v492
        %v517 = vpack.c.b16 %v495, %v494
        %v518 = vpack.c.b16 %v497, %v496
        %v519 = vpack.c.b16 %v499, %v498
        %v520 = vpack.c.b16 %v501, %v500
        %v521 = vpack.c.b16 %v503, %v502
        %v522 = vpack.c.b16 %v505, %v504
        %v523 = vpack.c.b16 %v507, %v506
        %v532 = vunpack.c.l.b16 %v400
        %v533 = vunpack.c.l.b16 %v401
        %v534 = vunpack.c.l.b16 %v402
        %v535 = vunpack.c.l.b16 %v403
        %v536 = vunpack.c.l.b16 %v404
        %v537 = vunpack.c.l.b16 %v405
        %v538 = vunpack.c.l.b16 %v406
        %v539 = vunpack.c.l.b16 %v407
        %v540 = vpack.c.b16 %v533, %v532
        %v541 = vpack.c.b16 %v535, %v534
        %v542 = vpack.c.b16 %v537, %v536
        %v543 = vpack.c.b16 %v539, %v538
        %vm548 = vcmask 523264
        %v550 = vsel %vm548, %v508, 0
        %v553 = vsel %vm548, %v509, 0
        %v556 = vsel %vm548, %v510, 0
        %v559 = vsel %vm548, %v511, 0
        %v562 = vsel %vm548, %v512, 0
        %v565 = vsel %vm548, %v513, 0
        %v568 = vsel %vm548, %v514, 0
        %v571 = vsel %vm548, %v515, 0
        %v574 = vsel %vm548, %v516, 0
        %v577 = vsel %vm548, %v517, 0
        %v580 = vsel %vm548, %v518, 0
        %v583 = vsel %vm548, %v519, 0
        %v586 = vsel %vm548, %v520, 0
        %v589 = vsel %vm548, %v521, 0
        %v592 = vsel %vm548, %v522, 0
        %v595 = vsel %vm548, %v523, 0
        %597 = vmatpush.bf16.msra.mxu0 0
        %598 = vmatpush.bf16.msra.mxu0 0
        %599 = vmatpush.bf16.msra.mxu0 0
        %600 = vmatpush.bf16.msra.mxu0 0
        %601 = vmatpush.bf16.msra.mxu0 %v543
        %602 = vmatpush.bf16.msra.mxu0 %v542
        %603 = vmatpush.bf16.msra.mxu0 %v541
        %604 = vmatpush.bf16.msra.mxu0 %v540
        %605 = vmatmul.bf16.gmra.mxu0 %v550
        %v606 = vpop.f32.mrf.mxu0
        %v607 = vadd.f32 %v442, %v606
        %v608 = vpop.f32.mrf.mxu0
        %v609 = vadd.f32 %v442, %v608
        %610 = vmatmul.bf16.gmra.mxu0 %v553
        %v611 = vpop.f32.mrf.mxu0
        %v612 = vadd.f32 %v442, %v611
        %v613 = vpop.f32.mrf.mxu0
        %v614 = vadd.f32 %v442, %v613
        %615 = vmatmul.bf16.gmra.mxu0 %v556
        %v616 = vpop.f32.mrf.mxu0
        %v617 = vadd.f32 %v442, %v616
        %v618 = vpop.f32.mrf.mxu0
        %v619 = vadd.f32 %v442, %v618
        %620 = vmatmul.bf16.gmra.mxu0 %v559
        %v621 = vpop.f32.mrf.mxu0
        %v622 = vadd.f32 %v442, %v621
        %v623 = vpop.f32.mrf.mxu0
        %v624 = vadd.f32 %v442, %v623
        %625 = vmatmul.bf16.gmra.mxu0 %v562
        %v626 = vpop.f32.mrf.mxu0
        %v627 = vadd.f32 %v442, %v626
        %v628 = vpop.f32.mrf.mxu0
        %v629 = vadd.f32 %v442, %v628
        %630 = vmatmul.bf16.gmra.mxu0 %v565
        %v631 = vpop.f32.mrf.mxu0
        %v632 = vadd.f32 %v442, %v631
        %v633 = vpop.f32.mrf.mxu0
        %v634 = vadd.f32 %v442, %v633
        %635 = vmatmul.bf16.gmra.mxu0 %v568
        %v636 = vpop.f32.mrf.mxu0
        %v637 = vadd.f32 %v442, %v636
        %v638 = vpop.f32.mrf.mxu0
        %v639 = vadd.f32 %v442, %v638
        %640 = vmatmul.bf16.gmra.mxu0 %v571
        %v641 = vpop.f32.mrf.mxu0
        %v642 = vadd.f32 %v442, %v641
        %v643 = vpop.f32.mrf.mxu0
        %v644 = vadd.f32 %v442, %v643
        %645 = vmatmul.bf16.gmra.mxu0 %v574
        %v646 = vpop.f32.mrf.mxu0
        %v647 = vadd.f32 %v442, %v646
        %v648 = vpop.f32.mrf.mxu0
        %v649 = vadd.f32 %v442, %v648
        %650 = vmatmul.bf16.gmra.mxu0 %v577
        %v651 = vpop.f32.mrf.mxu0
        %v652 = vadd.f32 %v442, %v651
        %v653 = vpop.f32.mrf.mxu0
        %v654 = vadd.f32 %v442, %v653
        %655 = vmatmul.bf16.gmra.mxu0 %v580
        %v656 = vpop.f32.mrf.mxu0
        %v657 = vadd.f32 %v442, %v656
        %v658 = vpop.f32.mrf.mxu0
        %v659 = vadd.f32 %v442, %v658
        %660 = vmatmul.bf16.gmra.mxu0 %v583
        %v661 = vpop.f32.mrf.mxu0
        %v662 = vadd.f32 %v442, %v661
        %v663 = vpop.f32.mrf.mxu0
        %v664 = vadd.f32 %v442, %v663
        %665 = vmatmul.bf16.gmra.mxu0 %v586
        %v666 = vpop.f32.mrf.mxu0
        %v667 = vadd.f32 %v442, %v666
        %v668 = vpop.f32.mrf.mxu0
        %v669 = vadd.f32 %v442, %v668
        %670 = vmatmul.bf16.gmra.mxu0 %v589
        %v671 = vpop.f32.mrf.mxu0
        %v672 = vadd.f32 %v442, %v671
        %v673 = vpop.f32.mrf.mxu0
        %v674 = vadd.f32 %v442, %v673
        %675 = vmatmul.bf16.gmra.mxu0 %v592
        %v676 = vpop.f32.mrf.mxu0
        %v677 = vadd.f32 %v442, %v676
        %v678 = vpop.f32.mrf.mxu0
        %v679 = vadd.f32 %v442, %v678
        %680 = vmatmul.bf16.gmra.mxu0 %v595
        %v681 = vpop.f32.mrf.mxu0
        %v682 = vadd.f32 %v442, %v681
        %v683 = vpop.f32.mrf.mxu0
        %v684 = vadd.f32 %v442, %v683
        %685 = vdwg.mxu0
        %v686 = vmax.f32 %v607, 0.0
        %v687 = vmax.f32 %v609, 0.0
        %v688 = vmax.f32 %v612, 0.0
        %v689 = vmax.f32 %v614, 0.0
        %v690 = vmax.f32 %v617, 0.0
        %v691 = vmax.f32 %v619, 0.0
        %v692 = vmax.f32 %v622, 0.0
        %v693 = vmax.f32 %v624, 0.0
        %v694 = vmax.f32 %v627, 0.0
        %v695 = vmax.f32 %v629, 0.0
        %v696 = vmax.f32 %v632, 0.0
        %v697 = vmax.f32 %v634, 0.0
        %v698 = vmax.f32 %v637, 0.0
        %v699 = vmax.f32 %v639, 0.0
        %v700 = vmax.f32 %v642, 0.0
        %v701 = vmax.f32 %v644, 0.0
        %v702 = vmax.f32 %v647, 0.0
        %v703 = vmax.f32 %v649, 0.0
        %v704 = vmax.f32 %v652, 0.0
        %v705 = vmax.f32 %v654, 0.0
        %v706 = vmax.f32 %v657, 0.0
        %v707 = vmax.f32 %v659, 0.0
        %v708 = vmax.f32 %v662, 0.0
        %v709 = vmax.f32 %v664, 0.0
        %v710 = vmax.f32 %v667, 0.0
        %v711 = vmax.f32 %v669, 0.0
        %v712 = vmax.f32 %v672, 0.0
        %v713 = vmax.f32 %v674, 0.0
        %v714 = vmax.f32 %v677, 0.0
        %v715 = vmax.f32 %v679, 0.0
        %v716 = vmax.f32 %v682, 0.0
        %v717 = vmax.f32 %v684, 0.0
        %p718 = scmp.eq.s32.totalorder %s27, 0
        // Predicated region
        $region53: #{tpu_custom_call.1} parent=51 // pred_check
          %p719 = pneg %p718
        $region54: #{tpu_custom_call.1} parent=51 // pred_check_branch
          %721 = sbr.rel (%p719) target = $region56
        $region55: #{tpu_custom_call.1} parent=51 // pred_region
          %vm722 = vcmask 130048
          %723 = vst.msk [vmem:[#allocation2] sm:$0xff] %vm722, 0.0
          %724 = vst.msk [vmem:[#allocation2 + $0x8] sm:$0xff] %vm722, 0.0
        $region56: #{tpu_custom_call.1} parent=51 // pred_fallthru
          _
        %p725 = scmp.lt.s32.totalorder %s27, 0
        // Predicated region
        $region57: #{tpu_custom_call.1} parent=51 // pred_check
          %p726 = pneg %p725
        $region58: #{tpu_custom_call.1} parent=51 // pred_check_branch
          %728 = sbr.rel (%p726) target = $region60
        $region59: #{tpu_custom_call.1} parent=51 // pred_region
          %v729 = vld [vmem:[%s392] sm:$0xf]
          %v730 = vld [vmem:[%s392 + $0x4] sm:$0xf]
          %v733 = vunpack.c.l.b16 %v729
          %v734 = vunpack.c.l.b16 %v730
          %v735 = vpack.c.b16 %v734, %v733
          %v737 = vsel %vm548, %v735, 0
          %739 = vmatpush.bf16.msra.mxu0 0
          %740 = vmatpush.bf16.msra.mxu0 0
          %741 = vmatpush.bf16.msra.mxu0 0
          %742 = vmatpush.bf16.msra.mxu0 0
          %743 = vmatpush.bf16.msra.mxu0 %v543
          %744 = vmatpush.bf16.msra.mxu0 %v542
          %745 = vmatpush.bf16.msra.mxu0 %v541
          %746 = vmatpush.bf16.msra.mxu0 %v540
          %747 = vmatmul.bf16.gmra.mxu0 %v737
          %v748 = vpop.f32.mrf.mxu0
          %v749 = vadd.f32 %v442, %v748
          %v750 = vpop.f32.mrf.mxu0
          %v751 = vadd.f32 %v442, %v750
          %752 = vdwg.mxu0
          %v753 = vmax.f32 %v749, 0.0
          %v754 = vmax.f32 %v751, 0.0
          %vm755 = vcmask 130048
          %756 = vst.msk [vmem:[#allocation2] sm:$0xff] %vm755, %v753
          %757 = vst.msk [vmem:[#allocation2 + $0x8] sm:$0xff] %vm755, %v754
        $region60: #{tpu_custom_call.1} parent=51 // pred_fallthru
          _
        %v758 = vld [vmem:[#allocation2] sm:$0xff]
        %v759 = vld [vmem:[#allocation2 + $0x8] sm:$0xff]
        %v760 = vlaneseq
        %v761 = vshrl.u32 %v760, 7
        %v762 = vadd.s32 %v761, 8
        %v763 = vadd.s32 %v761, 16
        %v764 = vadd.s32 %v761, 24
        %v765 = vadd.s32 %v761, 32
        %v766 = vadd.s32 %v761, 40
        %v767 = vadd.s32 %v761, 48
        %v768 = vadd.s32 %v761, 56
        %v769 = vadd.s32 %v761, 64
        %v770 = vadd.s32 %v761, 72
        %v771 = vadd.s32 %v761, 80
        %v772 = vadd.s32 %v761, 88
        %v773 = vadd.s32 %v761, 96
        %v774 = vadd.s32 %v761, 104
        %v775 = vadd.s32 %v761, 112
        %v776 = vadd.s32 %v761, 120
        %v777 = vadd.s32 %v761, 128
        %v778 = vadd.s32 %v761, 136
        %v779 = vadd.s32 %v761, 144
        %v780 = vadd.s32 %v761, 152
        %v781 = vadd.s32 %v761, 160
        %v782 = vadd.s32 %v761, 168
        %v783 = vadd.s32 %v761, 176
        %v784 = vadd.s32 %v761, 184
        %v785 = vadd.s32 %v761, 192
        %v786 = vadd.s32 %v761, 200
        %v787 = vadd.s32 %v761, 208
        %v788 = vadd.s32 %v761, 216
        %v789 = vadd.s32 %v761, 224
        %v790 = vadd.s32 %v761, 232
        %v791 = vadd.s32 %v761, 240
        %v792 = vadd.s32 %v761, 248
        %vm793 = vcmp.lt.s32.totalorder %v761, 0
        %v794 = vsub.s32 0, %v761
        %v795 = vsel %vm793, %v794, %v761
        %v796 = vshrl.u32 %v795, 4
        %v797 = vand.u32 %v795, 15
        %v798 = vsub.s32 0, %v797
        %v799 = vsel %vm793, %v798, %v797
        %vm800 = vcmp.lt.s32.totalorder %v762, 0
        %v801 = vsub.s32 0, %v762
        %v802 = vsel %vm800, %v801, %v762
        %v803 = vshrl.u32 %v802, 4
        %v804 = vand.u32 %v802, 15
        %v805 = vsub.s32 0, %v804
        %v806 = vsel %vm800, %v805, %v804
        %vm807 = vcmp.lt.s32.totalorder %v763, 0
        %v808 = vsub.s32 0, %v763
        %v809 = vsel %vm807, %v808, %v763
        %v810 = vshrl.u32 %v809, 4
        %v811 = vand.u32 %v809, 15
        %v812 = vsub.s32 0, %v811
        %v813 = vsel %vm807, %v812, %v811
        %vm814 = vcmp.lt.s32.totalorder %v764, 0
        %v815 = vsub.s32 0, %v764
        %v816 = vsel %vm814, %v815, %v764
        %v817 = vshrl.u32 %v816, 4
        %v818 = vand.u32 %v816, 15
        %v819 = vsub.s32 0, %v818
        %v820 = vsel %vm814, %v819, %v818
        %vm821 = vcmp.lt.s32.totalorder %v765, 0
        %v822 = vsub.s32 0, %v765
        %v823 = vsel %vm821, %v822, %v765
        %v824 = vshrl.u32 %v823, 4
        %v825 = vand.u32 %v823, 15
        %v826 = vsub.s32 0, %v825
        %v827 = vsel %vm821, %v826, %v825
        %vm828 = vcmp.lt.s32.totalorder %v766, 0
        %v829 = vsub.s32 0, %v766
        %v830 = vsel %vm828, %v829, %v766
        %v831 = vshrl.u32 %v830, 4
        %v832 = vand.u32 %v830, 15
        %v833 = vsub.s32 0, %v832
        %v834 = vsel %vm828, %v833, %v832
        %vm835 = vcmp.lt.s32.totalorder %v767, 0
        %v836 = vsub.s32 0, %v767
        %v837 = vsel %vm835, %v836, %v767
        %v838 = vshrl.u32 %v837, 4
        %v839 = vand.u32 %v837, 15
        %v840 = vsub.s32 0, %v839
        %v841 = vsel %vm835, %v840, %v839
        %vm842 = vcmp.lt.s32.totalorder %v768, 0
        %v843 = vsub.s32 0, %v768
        %v844 = vsel %vm842, %v843, %v768
        %v845 = vshrl.u32 %v844, 4
        %v846 = vand.u32 %v844, 15
        %v847 = vsub.s32 0, %v846
        %v848 = vsel %vm842, %v847, %v846
        %vm849 = vcmp.lt.s32.totalorder %v769, 0
        %v850 = vsub.s32 0, %v769
        %v851 = vsel %vm849, %v850, %v769
        %v852 = vshrl.u32 %v851, 4
        %v853 = vand.u32 %v851, 15
        %v854 = vsub.s32 0, %v853
        %v855 = vsel %vm849, %v854, %v853
        %vm856 = vcmp.lt.s32.totalorder %v770, 0
        %v857 = vsub.s32 0, %v770
        %v858 = vsel %vm856, %v857, %v770
        %v859 = vshrl.u32 %v858, 4
        %v860 = vand.u32 %v858, 15
        %v861 = vsub.s32 0, %v860
        %v862 = vsel %vm856, %v861, %v860
        %vm863 = vcmp.lt.s32.totalorder %v771, 0
        %v864 = vsub.s32 0, %v771
        %v865 = vsel %vm863, %v864, %v771
        %v866 = vshrl.u32 %v865, 4
        %v867 = vand.u32 %v865, 15
        %v868 = vsub.s32 0, %v867
        %v869 = vsel %vm863, %v868, %v867
        %vm870 = vcmp.lt.s32.totalorder %v772, 0
        %v871 = vsub.s32 0, %v772
        %v872 = vsel %vm870, %v871, %v772
        %v873 = vshrl.u32 %v872, 4
        %v874 = vand.u32 %v872, 15
        %v875 = vsub.s32 0, %v874
        %v876 = vsel %vm870, %v875, %v874
        %vm877 = vcmp.lt.s32.totalorder %v773, 0
        %v878 = vsub.s32 0, %v773
        %v879 = vsel %vm877, %v878, %v773
        %v880 = vshrl.u32 %v879, 4
        %v881 = vand.u32 %v879, 15
        %v882 = vsub.s32 0, %v881
        %v883 = vsel %vm877, %v882, %v881
        %vm884 = vcmp.lt.s32.totalorder %v774, 0
        %v885 = vsub.s32 0, %v774
        %v886 = vsel %vm884, %v885, %v774
        %v887 = vshrl.u32 %v886, 4
        %v888 = vand.u32 %v886, 15
        %v889 = vsub.s32 0, %v888
        %v890 = vsel %vm884, %v889, %v888
        %vm891 = vcmp.lt.s32.totalorder %v775, 0
        %v892 = vsub.s32 0, %v775
        %v893 = vsel %vm891, %v892, %v775
        %v894 = vshrl.u32 %v893, 4
        %v895 = vand.u32 %v893, 15
        %v896 = vsub.s32 0, %v895
        %v897 = vsel %vm891, %v896, %v895
        %vm898 = vcmp.lt.s32.totalorder %v776, 0
        %v899 = vsub.s32 0, %v776
        %v900 = vsel %vm898, %v899, %v776
        %v901 = vshrl.u32 %v900, 4
        %v902 = vand.u32 %v900, 15
        %v903 = vsub.s32 0, %v902
        %v904 = vsel %vm898, %v903, %v902
        %vm905 = vcmp.lt.s32.totalorder %v777, 0
        %v906 = vsub.s32 0, %v777
        %v907 = vsel %vm905, %v906, %v777
        %v908 = vshrl.u32 %v907, 4
        %v909 = vand.u32 %v907, 15
        %v910 = vsub.s32 0, %v909
        %v911 = vsel %vm905, %v910, %v909
        %vm912 = vcmp.lt.s32.totalorder %v778, 0
        %v913 = vsub.s32 0, %v778
        %v914 = vsel %vm912, %v913, %v778
        %v915 = vshrl.u32 %v914, 4
        %v916 = vand.u32 %v914, 15
        %v917 = vsub.s32 0, %v916
        %v918 = vsel %vm912, %v917, %v916
        %vm919 = vcmp.lt.s32.totalorder %v779, 0
        %v920 = vsub.s32 0, %v779
        %v921 = vsel %vm919, %v920, %v779
        %v922 = vshrl.u32 %v921, 4
        %v923 = vand.u32 %v921, 15
        %v924 = vsub.s32 0, %v923
        %v925 = vsel %vm919, %v924, %v923
        %vm926 = vcmp.lt.s32.totalorder %v780, 0
        %v927 = vsub.s32 0, %v780
        %v928 = vsel %vm926, %v927, %v780
        %v929 = vshrl.u32 %v928, 4
        %v930 = vand.u32 %v928, 15
        %v931 = vsub.s32 0, %v930
        %v932 = vsel %vm926, %v931, %v930
        %vm933 = vcmp.lt.s32.totalorder %v781, 0
        %v934 = vsub.s32 0, %v781
        %v935 = vsel %vm933, %v934, %v781
        %v936 = vshrl.u32 %v935, 4
        %v937 = vand.u32 %v935, 15
        %v938 = vsub.s32 0, %v937
        %v939 = vsel %vm933, %v938, %v937
        %vm940 = vcmp.lt.s32.totalorder %v782, 0
        %v941 = vsub.s32 0, %v782
        %v942 = vsel %vm940, %v941, %v782
        %v943 = vshrl.u32 %v942, 4
        %v944 = vand.u32 %v942, 15
        %v945 = vsub.s32 0, %v944
        %v946 = vsel %vm940, %v945, %v944
        %vm947 = vcmp.lt.s32.totalorder %v783, 0
        %v948 = vsub.s32 0, %v783
        %v949 = vsel %vm947, %v948, %v783
        %v950 = vshrl.u32 %v949, 4
        %v951 = vand.u32 %v949, 15
        %v952 = vsub.s32 0, %v951
        %v953 = vsel %vm947, %v952, %v951
        %vm954 = vcmp.lt.s32.totalorder %v784, 0
        %v955 = vsub.s32 0, %v784
        %v956 = vsel %vm954, %v955, %v784
        %v957 = vshrl.u32 %v956, 4
        %v958 = vand.u32 %v956, 15
        %v959 = vsub.s32 0, %v958
        %v960 = vsel %vm954, %v959, %v958
        %vm961 = vcmp.lt.s32.totalorder %v785, 0
        %v962 = vsub.s32 0, %v785
        %v963 = vsel %vm961, %v962, %v785
        %v964 = vshrl.u32 %v963, 4
        %v965 = vand.u32 %v963, 15
        %v966 = vsub.s32 0, %v965
        %v967 = vsel %vm961, %v966, %v965
        %vm968 = vcmp.lt.s32.totalorder %v786, 0
        %v969 = vsub.s32 0, %v786
        %v970 = vsel %vm968, %v969, %v786
        %v971 = vshrl.u32 %v970, 4
        %v972 = vand.u32 %v970, 15
        %v973 = vsub.s32 0, %v972
        %v974 = vsel %vm968, %v973, %v972
        %vm975 = vcmp.lt.s32.totalorder %v787, 0
        %v976 = vsub.s32 0, %v787
        %v977 = vsel %vm975, %v976, %v787
        %v978 = vshrl.u32 %v977, 4
        %v979 = vand.u32 %v977, 15
        %v980 = vsub.s32 0, %v979
        %v981 = vsel %vm975, %v980, %v979
        %vm982 = vcmp.lt.s32.totalorder %v788, 0
        %v983 = vsub.s32 0, %v788
        %v984 = vsel %vm982, %v983, %v788
        %v985 = vshrl.u32 %v984, 4
        %v986 = vand.u32 %v984, 15
        %v987 = vsub.s32 0, %v986
        %v988 = vsel %vm982, %v987, %v986
        %vm989 = vcmp.lt.s32.totalorder %v789, 0
        %v990 = vsub.s32 0, %v789
        %v991 = vsel %vm989, %v990, %v789
        %v992 = vshrl.u32 %v991, 4
        %v993 = vand.u32 %v991, 15
        %v994 = vsub.s32 0, %v993
        %v995 = vsel %vm989, %v994, %v993
        %vm996 = vcmp.lt.s32.totalorder %v790, 0
        %v997 = vsub.s32 0, %v790
        %v998 = vsel %vm996, %v997, %v790
        %v999 = vshrl.u32 %v998, 4
        %v1000 = vand.u32 %v998, 15
        %v1001 = vsub.s32 0, %v1000
        %v1002 = vsel %vm996, %v1001, %v1000
        %vm1003 = vcmp.lt.s32.totalorder %v791, 0
        %v1004 = vsub.s32 0, %v791
        %v1005 = vsel %vm1003, %v1004, %v791
        %v1006 = vshrl.u32 %v1005, 4
        %v1007 = vand.u32 %v1005, 15
        %v1008 = vsub.s32 0, %v1007
        %v1009 = vsel %vm1003, %v1008, %v1007
        %vm1010 = vcmp.lt.s32.totalorder %v792, 0
        %v1011 = vsub.s32 0, %v792
        %v1012 = vsel %vm1010, %v1011, %v792
        %v1013 = vshrl.u32 %v1012, 4
        %v1014 = vand.u32 %v1012, 15
        %v1015 = vsub.s32 0, %v1014
        %v1016 = vsel %vm1010, %v1015, %v1014
        %vm1017 = vcmp.ne.s32.totalorder %v799, 0
        %vm1018 = vcmp.ne.s32.totalorder %v806, 0
        %vm1019 = vcmp.ne.s32.totalorder %v813, 0
        %vm1020 = vcmp.ne.s32.totalorder %v820, 0
        %vm1021 = vcmp.ne.s32.totalorder %v827, 0
        %vm1022 = vcmp.ne.s32.totalorder %v834, 0
        %vm1023 = vcmp.ne.s32.totalorder %v841, 0
        %vm1024 = vcmp.ne.s32.totalorder %v848, 0
        %vm1025 = vcmp.ne.s32.totalorder %v855, 0
        %vm1026 = vcmp.ne.s32.totalorder %v862, 0
        %vm1027 = vcmp.ne.s32.totalorder %v869, 0
        %vm1028 = vcmp.ne.s32.totalorder %v876, 0
        %vm1029 = vcmp.ne.s32.totalorder %v883, 0
        %vm1030 = vcmp.ne.s32.totalorder %v890, 0
        %vm1031 = vcmp.ne.s32.totalorder %v897, 0
        %vm1032 = vcmp.ne.s32.totalorder %v904, 0
        %vm1033 = vcmp.ne.s32.totalorder %v911, 0
        %vm1034 = vcmp.ne.s32.totalorder %v918, 0
        %vm1035 = vcmp.ne.s32.totalorder %v925, 0
        %vm1036 = vcmp.ne.s32.totalorder %v932, 0
        %vm1037 = vcmp.ne.s32.totalorder %v939, 0
        %vm1038 = vcmp.ne.s32.totalorder %v946, 0
        %vm1039 = vcmp.ne.s32.totalorder %v953, 0
        %vm1040 = vcmp.ne.s32.totalorder %v960, 0
        %vm1041 = vcmp.ne.s32.totalorder %v967, 0
        %vm1042 = vcmp.ne.s32.totalorder %v974, 0
        %vm1043 = vcmp.ne.s32.totalorder %v981, 0
        %vm1044 = vcmp.ne.s32.totalorder %v988, 0
        %vm1045 = vcmp.ne.s32.totalorder %v995, 0
        %vm1046 = vcmp.ne.s32.totalorder %v1002, 0
        %vm1047 = vcmp.ne.s32.totalorder %v1009, 0
        %vm1048 = vcmp.ne.s32.totalorder %v1016, 0
        %vm1049 = vcmp.lt.s32.totalorder %v799, 0
        %vm1050 = vcmp.lt.s32.totalorder %v806, 0
        %vm1051 = vcmp.lt.s32.totalorder %v813, 0
        %vm1052 = vcmp.lt.s32.totalorder %v820, 0
        %vm1053 = vcmp.lt.s32.totalorder %v827, 0
        %vm1054 = vcmp.lt.s32.totalorder %v834, 0
        %vm1055 = vcmp.lt.s32.totalorder %v841, 0
        %vm1056 = vcmp.lt.s32.totalorder %v848, 0
        %vm1057 = vcmp.lt.s32.totalorder %v855, 0
        %vm1058 = vcmp.lt.s32.totalorder %v862, 0
        %vm1059 = vcmp.lt.s32.totalorder %v869, 0
        %vm1060 = vcmp.lt.s32.totalorder %v876, 0
        %vm1061 = vcmp.lt.s32.totalorder %v883, 0
        %vm1062 = vcmp.lt.s32.totalorder %v890, 0
        %vm1063 = vcmp.lt.s32.totalorder %v897, 0
        %vm1064 = vcmp.lt.s32.totalorder %v904, 0
        %vm1065 = vcmp.lt.s32.totalorder %v911, 0
        %vm1066 = vcmp.lt.s32.totalorder %v918, 0
        %vm1067 = vcmp.lt.s32.totalorder %v925, 0
        %vm1068 = vcmp.lt.s32.totalorder %v932, 0
        %vm1069 = vcmp.lt.s32.totalorder %v939, 0
        %vm1070 = vcmp.lt.s32.totalorder %v946, 0
        %vm1071 = vcmp.lt.s32.totalorder %v953, 0
        %vm1072 = vcmp.lt.s32.totalorder %v960, 0
        %vm1073 = vcmp.lt.s32.totalorder %v967, 0
        %vm1074 = vcmp.lt.s32.totalorder %v974, 0
        %vm1075 = vcmp.lt.s32.totalorder %v981, 0
        %vm1076 = vcmp.lt.s32.totalorder %v988, 0
        %vm1077 = vcmp.lt.s32.totalorder %v995, 0
        %vm1078 = vcmp.lt.s32.totalorder %v1002, 0
        %vm1079 = vcmp.lt.s32.totalorder %v1009, 0
        %vm1080 = vcmp.lt.s32.totalorder %v1016, 0
        %vm1081 = vmand %vm1049, %vm1017
        %vm1082 = vmand %vm1050, %vm1018
        %vm1083 = vmand %vm1051, %vm1019
        %vm1084 = vmand %vm1052, %vm1020
        %vm1085 = vmand %vm1053, %vm1021
        %vm1086 = vmand %vm1054, %vm1022
        %vm1087 = vmand %vm1055, %vm1023
        %vm1088 = vmand %vm1056, %vm1024
        %vm1089 = vmand %vm1057, %vm1025
        %vm1090 = vmand %vm1058, %vm1026
        %vm1091 = vmand %vm1059, %vm1027
        %vm1092 = vmand %vm1060, %vm1028
        %vm1093 = vmand %vm1061, %vm1029
        %vm1094 = vmand %vm1062, %vm1030
        %vm1095 = vmand %vm1063, %vm1031
        %vm1096 = vmand %vm1064, %vm1032
        %vm1097 = vmand %vm1065, %vm1033
        %vm1098 = vmand %vm1066, %vm1034
        %vm1099 = vmand %vm1067, %vm1035
        %vm1100 = vmand %vm1068, %vm1036
        %vm1101 = vmand %vm1069, %vm1037
        %vm1102 = vmand %vm1070, %vm1038
        %vm1103 = vmand %vm1071, %vm1039
        %vm1104 = vmand %vm1072, %vm1040
        %vm1105 = vmand %vm1073, %vm1041
        %vm1106 = vmand %vm1074, %vm1042
        %vm1107 = vmand %vm1075, %vm1043
        %vm1108 = vmand %vm1076, %vm1044
        %vm1109 = vmand %vm1077, %vm1045
        %vm1110 = vmand %vm1078, %vm1046
        %vm1111 = vmand %vm1079, %vm1047
        %vm1112 = vmand %vm1080, %vm1048
        %v1113 = vadd.s32 %v799, 16
        %v1114 = vadd.s32 %v806, 16
        %v1115 = vadd.s32 %v813, 16
        %v1116 = vadd.s32 %v820, 16
        %v1117 = vadd.s32 %v827, 16
        %v1118 = vadd.s32 %v834, 16
        %v1119 = vadd.s32 %v841, 16
        %v1120 = vadd.s32 %v848, 16
        %v1121 = vadd.s32 %v855, 16
        %v1122 = vadd.s32 %v862, 16
        %v1123 = vadd.s32 %v869, 16
        %v1124 = vadd.s32 %v876, 16
        %v1125 = vadd.s32 %v883, 16
        %v1126 = vadd.s32 %v890, 16
        %v1127 = vadd.s32 %v897, 16
        %v1128 = vadd.s32 %v904, 16
        %v1129 = vadd.s32 %v911, 16
        %v1130 = vadd.s32 %v918, 16
        %v1131 = vadd.s32 %v925, 16
        %v1132 = vadd.s32 %v932, 16
        %v1133 = vadd.s32 %v939, 16
        %v1134 = vadd.s32 %v946, 16
        %v1135 = vadd.s32 %v953, 16
        %v1136 = vadd.s32 %v960, 16
        %v1137 = vadd.s32 %v967, 16
        %v1138 = vadd.s32 %v974, 16
        %v1139 = vadd.s32 %v981, 16
        %v1140 = vadd.s32 %v988, 16
        %v1141 = vadd.s32 %v995, 16
        %v1142 = vadd.s32 %v1002, 16
        %v1143 = vadd.s32 %v1009, 16
        %v1144 = vadd.s32 %v1016, 16
        %v1145 = vsel %vm1081, %v1113, %v799
        %v1146 = vsel %vm1082, %v1114, %v806
        %v1147 = vsel %vm1083, %v1115, %v813
        %v1148 = vsel %vm1084, %v1116, %v820
        %v1149 = vsel %vm1085, %v1117, %v827
        %v1150 = vsel %vm1086, %v1118, %v834
        %v1151 = vsel %vm1087, %v1119, %v841
        %v1152 = vsel %vm1088, %v1120, %v848
        %v1153 = vsel %vm1089, %v1121, %v855
        %v1154 = vsel %vm1090, %v1122, %v862
        %v1155 = vsel %vm1091, %v1123, %v869
        %v1156 = vsel %vm1092, %v1124, %v876
        %v1157 = vsel %vm1093, %v1125, %v883
        %v1158 = vsel %vm1094, %v1126, %v890
        %v1159 = vsel %vm1095, %v1127, %v897
        %v1160 = vsel %vm1096, %v1128, %v904
        %v1161 = vsel %vm1097, %v1129, %v911
        %v1162 = vsel %vm1098, %v1130, %v918
        %v1163 = vsel %vm1099, %v1131, %v925
        %v1164 = vsel %vm1100, %v1132, %v932
        %v1165 = vsel %vm1101, %v1133, %v939
        %v1166 = vsel %vm1102, %v1134, %v946
        %v1167 = vsel %vm1103, %v1135, %v953
        %v1168 = vsel %vm1104, %v1136, %v960
        %v1169 = vsel %vm1105, %v1137, %v967
        %v1170 = vsel %vm1106, %v1138, %v974
        %v1171 = vsel %vm1107, %v1139, %v981
        %v1172 = vsel %vm1108, %v1140, %v988
        %v1173 = vsel %vm1109, %v1141, %v995
        %v1174 = vsel %vm1110, %v1142, %v1002
        %v1175 = vsel %vm1111, %v1143, %v1009
        %v1176 = vsel %vm1112, %v1144, %v1016
        %vm1177 = vcmp.eq.s32.totalorder %v1145, 15
        %vm1178 = vcmp.eq.s32.totalorder %v1146, 15
        %vm1179 = vcmp.eq.s32.totalorder %v1147, 15
        %vm1180 = vcmp.eq.s32.totalorder %v1148, 15
        %vm1181 = vcmp.eq.s32.totalorder %v1149, 15
        %vm1182 = vcmp.eq.s32.totalorder %v1150, 15
        %vm1183 = vcmp.eq.s32.totalorder %v1151, 15
        %vm1184 = vcmp.eq.s32.totalorder %v1152, 15
        %vm1185 = vcmp.eq.s32.totalorder %v1153, 15
        %vm1186 = vcmp.eq.s32.totalorder %v1154, 15
        %vm1187 = vcmp.eq.s32.totalorder %v1155, 15
        %vm1188 = vcmp.eq.s32.totalorder %v1156, 15
        %vm1189 = vcmp.eq.s32.totalorder %v1157, 15
        %vm1190 = vcmp.eq.s32.totalorder %v1158, 15
        %vm1191 = vcmp.eq.s32.totalorder %v1159, 15
        %vm1192 = vcmp.eq.s32.totalorder %v1160, 15
        %vm1193 = vcmp.eq.s32.totalorder %v1161, 15
        %vm1194 = vcmp.eq.s32.totalorder %v1162, 15
        %vm1195 = vcmp.eq.s32.totalorder %v1163, 15
        %vm1196 = vcmp.eq.s32.totalorder %v1164, 15
        %vm1197 = vcmp.eq.s32.totalorder %v1165, 15
        %vm1198 = vcmp.eq.s32.totalorder %v1166, 15
        %vm1199 = vcmp.eq.s32.totalorder %v1167, 15
        %vm1200 = vcmp.eq.s32.totalorder %v1168, 15
        %vm1201 = vcmp.eq.s32.totalorder %v1169, 15
        %vm1202 = vcmp.eq.s32.totalorder %v1170, 15
        %vm1203 = vcmp.eq.s32.totalorder %v1171, 15
        %vm1204 = vcmp.eq.s32.totalorder %v1172, 15
        %vm1205 = vcmp.eq.s32.totalorder %v1173, 15
        %vm1206 = vcmp.eq.s32.totalorder %v1174, 15
        %vm1207 = vcmp.eq.s32.totalorder %v1175, 15
        %vm1208 = vcmp.eq.s32.totalorder %v1176, 15
        %v1209 = vrot.slane %v686, 1
        %v1210 = vrot.slane %v687, 1
        %v1211 = vrot.slane %v688, 1
        %v1212 = vrot.slane %v689, 1
        %v1213 = vrot.slane %v690, 1
        %v1214 = vrot.slane %v691, 1
        %v1215 = vrot.slane %v692, 1
        %v1216 = vrot.slane %v693, 1
        %v1217 = vrot.slane %v694, 1
        %v1218 = vrot.slane %v695, 1
        %v1219 = vrot.slane %v696, 1
        %v1220 = vrot.slane %v697, 1
        %v1221 = vrot.slane %v698, 1
        %v1222 = vrot.slane %v699, 1
        %v1223 = vrot.slane %v700, 1
        %v1224 = vrot.slane %v701, 1
        %v1225 = vrot.slane %v702, 1
        %v1226 = vrot.slane %v703, 1
        %v1227 = vrot.slane %v704, 1
        %v1228 = vrot.slane %v705, 1
        %v1229 = vrot.slane %v706, 1
        %v1230 = vrot.slane %v707, 1
        %v1231 = vrot.slane %v708, 1
        %v1232 = vrot.slane %v709, 1
        %v1233 = vrot.slane %v710, 1
        %v1234 = vrot.slane %v711, 1
        %v1235 = vrot.slane %v712, 1
        %v1236 = vrot.slane %v713, 1
        %v1237 = vrot.slane %v714, 1
        %v1238 = vrot.slane %v715, 1
        %v1239 = vrot.slane %v716, 1
        %v1240 = vrot.slane %v717, 1
        %vm1241 = vcmp.lt.s32.totalorder %v761, 7
        %v1242 = vsel %vm1241, %v1239, %v1240
        %v1243 = vsel %vm1241, %v1238, %v1239
        %v1244 = vsel %vm1241, %v1237, %v1238
        %v1245 = vsel %vm1241, %v1236, %v1237
        %v1246 = vsel %vm1241, %v1235, %v1236
        %v1247 = vsel %vm1241, %v1234, %v1235
        %v1248 = vsel %vm1241, %v1233, %v1234
        %v1249 = vsel %vm1241, %v1232, %v1233
        %v1250 = vsel %vm1241, %v1231, %v1232
        %v1251 = vsel %vm1241, %v1230, %v1231
        %v1252 = vsel %vm1241, %v1229, %v1230
        %v1253 = vsel %vm1241, %v1228, %v1229
        %v1254 = vsel %vm1241, %v1227, %v1228
        %v1255 = vsel %vm1241, %v1226, %v1227
        %v1256 = vsel %vm1241, %v1225, %v1226
        %v1257 = vsel %vm1241, %v1224, %v1225
        %v1258 = vsel %vm1241, %v1223, %v1224
        %v1259 = vsel %vm1241, %v1222, %v1223
        %v1260 = vsel %vm1241, %v1221, %v1222
        %v1261 = vsel %vm1241, %v1220, %v1221
        %v1262 = vsel %vm1241, %v1219, %v1220
        %v1263 = vsel %vm1241, %v1218, %v1219
        %v1264 = vsel %vm1241, %v1217, %v1218
        %v1265 = vsel %vm1241, %v1216, %v1217
        %v1266 = vsel %vm1241, %v1215, %v1216
        %v1267 = vsel %vm1241, %v1214, %v1215
        %v1268 = vsel %vm1241, %v1213, %v1214
        %v1269 = vsel %vm1241, %v1212, %v1213
        %v1270 = vsel %vm1241, %v1211, %v1212
        %v1271 = vsel %vm1241, %v1210, %v1211
        %v1272 = vsel %vm1241, %v1209, %v1210
        %v1273 = vsel %vm1241, %v1240, %v1209
        %v1274 = vsel %vm1177, 1, 0
        %v1275 = vsel %vm1178, 1, 0
        %v1276 = vsel %vm1179, 1, 0
        %v1277 = vsel %vm1180, 1, 0
        %v1278 = vsel %vm1181, 1, 0
        %v1279 = vsel %vm1182, 1, 0
        %v1280 = vsel %vm1183, 1, 0
        %v1281 = vsel %vm1184, 1, 0
        %v1282 = vsel %vm1185, 1, 0
        %v1283 = vsel %vm1186, 1, 0
        %v1284 = vsel %vm1187, 1, 0
        %v1285 = vsel %vm1188, 1, 0
        %v1286 = vsel %vm1189, 1, 0
        %v1287 = vsel %vm1190, 1, 0
        %v1288 = vsel %vm1191, 1, 0
        %v1289 = vsel %vm1192, 1, 0
        %v1290 = vsel %vm1193, 1, 0
        %v1291 = vsel %vm1194, 1, 0
        %v1292 = vsel %vm1195, 1, 0
        %v1293 = vsel %vm1196, 1, 0
        %v1294 = vsel %vm1197, 1, 0
        %v1295 = vsel %vm1198, 1, 0
        %v1296 = vsel %vm1199, 1, 0
        %v1297 = vsel %vm1200, 1, 0
        %v1298 = vsel %vm1201, 1, 0
        %v1299 = vsel %vm1202, 1, 0
        %v1300 = vsel %vm1203, 1, 0
        %v1301 = vsel %vm1204, 1, 0
        %v1302 = vsel %vm1205, 1, 0
        %v1303 = vsel %vm1206, 1, 0
        %v1304 = vsel %vm1207, 1, 0
        %v1305 = vsel %vm1208, 1, 0
        %vm1306 = vcmp.eq.s32.totalorder %v1274, 1
        %vm1307 = vcmp.eq.s32.totalorder %v1275, 1
        %vm1308 = vcmp.eq.s32.totalorder %v1276, 1
        %vm1309 = vcmp.eq.s32.totalorder %v1277, 1
        %vm1310 = vcmp.eq.s32.totalorder %v1278, 1
        %vm1311 = vcmp.eq.s32.totalorder %v1279, 1
        %vm1312 = vcmp.eq.s32.totalorder %v1280, 1
        %vm1313 = vcmp.eq.s32.totalorder %v1281, 1
        %vm1314 = vcmp.eq.s32.totalorder %v1282, 1
        %vm1315 = vcmp.eq.s32.totalorder %v1283, 1
        %vm1316 = vcmp.eq.s32.totalorder %v1284, 1
        %vm1317 = vcmp.eq.s32.totalorder %v1285, 1
        %vm1318 = vcmp.eq.s32.totalorder %v1286, 1
        %vm1319 = vcmp.eq.s32.totalorder %v1287, 1
        %vm1320 = vcmp.eq.s32.totalorder %v1288, 1
        %vm1321 = vcmp.eq.s32.totalorder %v1289, 1
        %vm1322 = vcmp.eq.s32.totalorder %v1290, 1
        %vm1323 = vcmp.eq.s32.totalorder %v1291, 1
        %vm1324 = vcmp.eq.s32.totalorder %v1292, 1
        %vm1325 = vcmp.eq.s32.totalorder %v1293, 1
        %vm1326 = vcmp.eq.s32.totalorder %v1294, 1
        %vm1327 = vcmp.eq.s32.totalorder %v1295, 1
        %vm1328 = vcmp.eq.s32.totalorder %v1296, 1
        %vm1329 = vcmp.eq.s32.totalorder %v1297, 1
        %vm1330 = vcmp.eq.s32.totalorder %v1298, 1
        %vm1331 = vcmp.eq.s32.totalorder %v1299, 1
        %vm1332 = vcmp.eq.s32.totalorder %v1300, 1
        %vm1333 = vcmp.eq.s32.totalorder %v1301, 1
        %vm1334 = vcmp.eq.s32.totalorder %v1302, 1
        %vm1335 = vcmp.eq.s32.totalorder %v1303, 1
        %vm1336 = vcmp.eq.s32.totalorder %v1304, 1
        %vm1337 = vcmp.eq.s32.totalorder %v1305, 1
        %v1338 = vsel %vm1306, 0.0, %v1272
        %v1339 = vsel %vm1307, 0.0, %v1271
        %v1340 = vsel %vm1308, 0.0, %v1270
        %v1341 = vsel %vm1309, 0.0, %v1269
        %v1342 = vsel %vm1310, 0.0, %v1268
        %v1343 = vsel %vm1311, 0.0, %v1267
        %v1344 = vsel %vm1312, 0.0, %v1266
        %v1345 = vsel %vm1313, 0.0, %v1265
        %v1346 = vsel %vm1314, 0.0, %v1264
        %v1347 = vsel %vm1315, 0.0, %v1263
        %v1348 = vsel %vm1316, 0.0, %v1262
        %v1349 = vsel %vm1317, 0.0, %v1261
        %v1350 = vsel %vm1318, 0.0, %v1260
        %v1351 = vsel %vm1319, 0.0, %v1259
        %v1352 = vsel %vm1320, 0.0, %v1258
        %v1353 = vsel %vm1321, 0.0, %v1257
        %v1354 = vsel %vm1322, 0.0, %v1256
        %v1355 = vsel %vm1323, 0.0, %v1255
        %v1356 = vsel %vm1324, 0.0, %v1254
        %v1357 = vsel %vm1325, 0.0, %v1253
        %v1358 = vsel %vm1326, 0.0, %v1252
        %v1359 = vsel %vm1327, 0.0, %v1251
        %v1360 = vsel %vm1328, 0.0, %v1250
        %v1361 = vsel %vm1329, 0.0, %v1249
        %v1362 = vsel %vm1330, 0.0, %v1248
        %v1363 = vsel %vm1331, 0.0, %v1247
        %v1364 = vsel %vm1332, 0.0, %v1246
        %v1365 = vsel %vm1333, 0.0, %v1245
        %v1366 = vsel %vm1334, 0.0, %v1244
        %v1367 = vsel %vm1335, 0.0, %v1243
        %v1368 = vsel %vm1336, 0.0, %v1242
        %v1369 = vsel %vm1337, 0.0, %v1273
        %v1370 = vrot.slane %v758, 1
        %v1371 = vrot.slane %v759, 1
        %v1372 = vsel %vm1241, %v1370, %v1371
        %v1373 = vsel %vm1241, %v1240, %v1370
        %v1374 = vsel %vm1241, %v1371, %v1211
        %v1375 = vsel %vm1306, 0.0, %v1270
        %v1376 = vsel %vm1307, 0.0, %v1269
        %v1377 = vsel %vm1308, 0.0, %v1268
        %v1378 = vsel %vm1309, 0.0, %v1267
        %v1379 = vsel %vm1310, 0.0, %v1266
        %v1380 = vsel %vm1311, 0.0, %v1265
        %v1381 = vsel %vm1312, 0.0, %v1264
        %v1382 = vsel %vm1313, 0.0, %v1263
        %v1383 = vsel %vm1314, 0.0, %v1262
        %v1384 = vsel %vm1315, 0.0, %v1261
        %v1385 = vsel %vm1316, 0.0, %v1260
        %v1386 = vsel %vm1317, 0.0, %v1259
        %v1387 = vsel %vm1318, 0.0, %v1258
        %v1388 = vsel %vm1319, 0.0, %v1257
        %v1389 = vsel %vm1320, 0.0, %v1256
        %v1390 = vsel %vm1321, 0.0, %v1255
        %v1391 = vsel %vm1322, 0.0, %v1254
        %v1392 = vsel %vm1323, 0.0, %v1253
        %v1393 = vsel %vm1324, 0.0, %v1252
        %v1394 = vsel %vm1325, 0.0, %v1251
        %v1395 = vsel %vm1326, 0.0, %v1250
        %v1396 = vsel %vm1327, 0.0, %v1249
        %v1397 = vsel %vm1328, 0.0, %v1248
        %v1398 = vsel %vm1329, 0.0, %v1247
        %v1399 = vsel %vm1330, 0.0, %v1246
        %v1400 = vsel %vm1331, 0.0, %v1245
        %v1401 = vsel %vm1332, 0.0, %v1244
        %v1402 = vsel %vm1333, 0.0, %v1243
        %v1403 = vsel %vm1334, 0.0, %v1242
        %v1404 = vsel %vm1335, 0.0, %v1373
        %v1405 = vsel %vm1336, 0.0, %v1372
        %v1406 = vsel %vm1337, 0.0, %v1374
        %v1407 = vpack.c.bf16 %v686, %v686
        %v1408 = vpack.c.bf16 %v687, %v687
        %v1409 = vpack.c.bf16 %v688, %v688
        %v1410 = vpack.c.bf16 %v689, %v689
        %v1411 = vpack.c.bf16 %v690, %v690
        %v1412 = vpack.c.bf16 %v691, %v691
        %v1413 = vpack.c.bf16 %v692, %v692
        %v1414 = vpack.c.bf16 %v693, %v693
        %v1415 = vpack.c.bf16 %v694, %v694
        %v1416 = vpack.c.bf16 %v695, %v695
        %v1417 = vpack.c.bf16 %v696, %v696
        %v1418 = vpack.c.bf16 %v697, %v697
        %v1419 = vpack.c.bf16 %v698, %v698
        %v1420 = vpack.c.bf16 %v699, %v699
        %v1421 = vpack.c.bf16 %v700, %v700
        %v1422 = vpack.c.bf16 %v701, %v701
        %v1423 = vpack.c.bf16 %v702, %v702
        %v1424 = vpack.c.bf16 %v703, %v703
        %v1425 = vpack.c.bf16 %v704, %v704
        %v1426 = vpack.c.bf16 %v705, %v705
        %v1427 = vpack.c.bf16 %v706, %v706
        %v1428 = vpack.c.bf16 %v707, %v707
        %v1429 = vpack.c.bf16 %v708, %v708
        %v1430 = vpack.c.bf16 %v709, %v709
        %v1431 = vpack.c.bf16 %v710, %v710
        %v1432 = vpack.c.bf16 %v711, %v711
        %v1433 = vpack.c.bf16 %v712, %v712
        %v1434 = vpack.c.bf16 %v713, %v713
        %v1435 = vpack.c.bf16 %v714, %v714
        %v1436 = vpack.c.bf16 %v715, %v715
        %v1437 = vpack.c.bf16 %v716, %v716
        %v1438 = vpack.c.bf16 %v717, %v717
        %v1439 = vpack.c.bf16 %v1338, %v1338
        %v1440 = vpack.c.bf16 %v1339, %v1339
        %v1441 = vpack.c.bf16 %v1340, %v1340
        %v1442 = vpack.c.bf16 %v1341, %v1341
        %v1443 = vpack.c.bf16 %v1342, %v1342
        %v1444 = vpack.c.bf16 %v1343, %v1343
        %v1445 = vpack.c.bf16 %v1344, %v1344
        %v1446 = vpack.c.bf16 %v1345, %v1345
        %v1447 = vpack.c.bf16 %v1346, %v1346
        %v1448 = vpack.c.bf16 %v1347, %v1347
        %v1449 = vpack.c.bf16 %v1348, %v1348
        %v1450 = vpack.c.bf16 %v1349, %v1349
        %v1451 = vpack.c.bf16 %v1350, %v1350
        %v1452 = vpack.c.bf16 %v1351, %v1351
        %v1453 = vpack.c.bf16 %v1352, %v1352
        %v1454 = vpack.c.bf16 %v1353, %v1353
        %v1455 = vpack.c.bf16 %v1354, %v1354
        %v1456 = vpack.c.bf16 %v1355, %v1355
        %v1457 = vpack.c.bf16 %v1356, %v1356
        %v1458 = vpack.c.bf16 %v1357, %v1357
        %v1459 = vpack.c.bf16 %v1358, %v1358
        %v1460 = vpack.c.bf16 %v1359, %v1359
        %v1461 = vpack.c.bf16 %v1360, %v1360
        %v1462 = vpack.c.bf16 %v1361, %v1361
        %v1463 = vpack.c.bf16 %v1362, %v1362
        %v1464 = vpack.c.bf16 %v1363, %v1363
        %v1465 = vpack.c.bf16 %v1364, %v1364
        %v1466 = vpack.c.bf16 %v1365, %v1365
        %v1467 = vpack.c.bf16 %v1366, %v1366
        %v1468 = vpack.c.bf16 %v1367, %v1367
        %v1469 = vpack.c.bf16 %v1368, %v1368
        %v1470 = vpack.c.bf16 %v1369, %v1369
        %v1471 = vpack.c.bf16 %v758, %v758
        %v1472 = vpack.c.bf16 %v759, %v759
        %v1473 = vpack.c.bf16 %v1375, %v1375
        %v1474 = vpack.c.bf16 %v1376, %v1376
        %v1475 = vpack.c.bf16 %v1377, %v1377
        %v1476 = vpack.c.bf16 %v1378, %v1378
        %v1477 = vpack.c.bf16 %v1379, %v1379
        %v1478 = vpack.c.bf16 %v1380, %v1380
        %v1479 = vpack.c.bf16 %v1381, %v1381
        %v1480 = vpack.c.bf16 %v1382, %v1382
        %v1481 = vpack.c.bf16 %v1383, %v1383
        %v1482 = vpack.c.bf16 %v1384, %v1384
        %v1483 = vpack.c.bf16 %v1385, %v1385
        %v1484 = vpack.c.bf16 %v1386, %v1386
        %v1485 = vpack.c.bf16 %v1387, %v1387
        %v1486 = vpack.c.bf16 %v1388, %v1388
        %v1487 = vpack.c.bf16 %v1389, %v1389
        %v1488 = vpack.c.bf16 %v1390, %v1390
        %v1489 = vpack.c.bf16 %v1391, %v1391
        %v1490 = vpack.c.bf16 %v1392, %v1392
        %v1491 = vpack.c.bf16 %v1393, %v1393
        %v1492 = vpack.c.bf16 %v1394, %v1394
        %v1493 = vpack.c.bf16 %v1395, %v1395
        %v1494 = vpack.c.bf16 %v1396, %v1396
        %v1495 = vpack.c.bf16 %v1397, %v1397
        %v1496 = vpack.c.bf16 %v1398, %v1398
        %v1497 = vpack.c.bf16 %v1399, %v1399
        %v1498 = vpack.c.bf16 %v1400, %v1400
        %v1499 = vpack.c.bf16 %v1401, %v1401
        %v1500 = vpack.c.bf16 %v1402, %v1402
        %v1501 = vpack.c.bf16 %v1403, %v1403
        %v1502 = vpack.c.bf16 %v1404, %v1404
        %v1503 = vpack.c.bf16 %v1405, %v1405
        %v1504 = vpack.c.bf16 %v1406, %v1406
        %v1537 = vunpack.c.l.b16 %v1407
        %v1538 = vunpack.c.l.b16 %v1408
        %v1539 = vunpack.c.l.b16 %v1409
        %v1540 = vunpack.c.l.b16 %v1410
        %v1541 = vunpack.c.l.b16 %v1411
        %v1542 = vunpack.c.l.b16 %v1412
        %v1543 = vunpack.c.l.b16 %v1413
        %v1544 = vunpack.c.l.b16 %v1414
        %v1545 = vunpack.c.l.b16 %v1415
        %v1546 = vunpack.c.l.b16 %v1416
        %v1547 = vunpack.c.l.b16 %v1417
        %v1548 = vunpack.c.l.b16 %v1418
        %v1549 = vunpack.c.l.b16 %v1419
        %v1550 = vunpack.c.l.b16 %v1420
        %v1551 = vunpack.c.l.b16 %v1421
        %v1552 = vunpack.c.l.b16 %v1422
        %v1553 = vunpack.c.l.b16 %v1423
        %v1554 = vunpack.c.l.b16 %v1424
        %v1555 = vunpack.c.l.b16 %v1425
        %v1556 = vunpack.c.l.b16 %v1426
        %v1557 = vunpack.c.l.b16 %v1427
        %v1558 = vunpack.c.l.b16 %v1428
        %v1559 = vunpack.c.l.b16 %v1429
        %v1560 = vunpack.c.l.b16 %v1430
        %v1561 = vunpack.c.l.b16 %v1431
        %v1562 = vunpack.c.l.b16 %v1432
        %v1563 = vunpack.c.l.b16 %v1433
        %v1564 = vunpack.c.l.b16 %v1434
        %v1565 = vunpack.c.l.b16 %v1435
        %v1566 = vunpack.c.l.b16 %v1436
        %v1567 = vunpack.c.l.b16 %v1437
        %v1568 = vunpack.c.l.b16 %v1438
        %v1569 = vpack.c.b16 %v1538, %v1537
        %v1570 = vpack.c.b16 %v1540, %v1539
        %v1571 = vpack.c.b16 %v1542, %v1541
        %v1572 = vpack.c.b16 %v1544, %v1543
        %v1573 = vpack.c.b16 %v1546, %v1545
        %v1574 = vpack.c.b16 %v1548, %v1547
        %v1575 = vpack.c.b16 %v1550, %v1549
        %v1576 = vpack.c.b16 %v1552, %v1551
        %v1577 = vpack.c.b16 %v1554, %v1553
        %v1578 = vpack.c.b16 %v1556, %v1555
        %v1579 = vpack.c.b16 %v1558, %v1557
        %v1580 = vpack.c.b16 %v1560, %v1559
        %v1581 = vpack.c.b16 %v1562, %v1561
        %v1582 = vpack.c.b16 %v1564, %v1563
        %v1583 = vpack.c.b16 %v1566, %v1565
        %v1584 = vpack.c.b16 %v1568, %v1567
        %v1617 = vunpack.c.l.b16 %v1439
        %v1618 = vunpack.c.l.b16 %v1440
        %v1619 = vunpack.c.l.b16 %v1441
        %v1620 = vunpack.c.l.b16 %v1442
        %v1621 = vunpack.c.l.b16 %v1443
        %v1622 = vunpack.c.l.b16 %v1444
        %v1623 = vunpack.c.l.b16 %v1445
        %v1624 = vunpack.c.l.b16 %v1446
        %v1625 = vunpack.c.l.b16 %v1447
        %v1626 = vunpack.c.l.b16 %v1448
        %v1627 = vunpack.c.l.b16 %v1449
        %v1628 = vunpack.c.l.b16 %v1450
        %v1629 = vunpack.c.l.b16 %v1451
        %v1630 = vunpack.c.l.b16 %v1452
        %v1631 = vunpack.c.l.b16 %v1453
        %v1632 = vunpack.c.l.b16 %v1454
        %v1633 = vunpack.c.l.b16 %v1455
        %v1634 = vunpack.c.l.b16 %v1456
        %v1635 = vunpack.c.l.b16 %v1457
        %v1636 = vunpack.c.l.b16 %v1458
        %v1637 = vunpack.c.l.b16 %v1459
        %v1638 = vunpack.c.l.b16 %v1460
        %v1639 = vunpack.c.l.b16 %v1461
        %v1640 = vunpack.c.l.b16 %v1462
        %v1641 = vunpack.c.l.b16 %v1463
        %v1642 = vunpack.c.l.b16 %v1464
        %v1643 = vunpack.c.l.b16 %v1465
        %v1644 = vunpack.c.l.b16 %v1466
        %v1645 = vunpack.c.l.b16 %v1467
        %v1646 = vunpack.c.l.b16 %v1468
        %v1647 = vunpack.c.l.b16 %v1469
        %v1648 = vunpack.c.l.b16 %v1470
        %v1649 = vpack.c.b16 %v1618, %v1617
        %v1650 = vpack.c.b16 %v1620, %v1619
        %v1651 = vpack.c.b16 %v1622, %v1621
        %v1652 = vpack.c.b16 %v1624, %v1623
        %v1653 = vpack.c.b16 %v1626, %v1625
        %v1654 = vpack.c.b16 %v1628, %v1627
        %v1655 = vpack.c.b16 %v1630, %v1629
        %v1656 = vpack.c.b16 %v1632, %v1631
        %v1657 = vpack.c.b16 %v1634, %v1633
        %v1658 = vpack.c.b16 %v1636, %v1635
        %v1659 = vpack.c.b16 %v1638, %v1637
        %v1660 = vpack.c.b16 %v1640, %v1639
        %v1661 = vpack.c.b16 %v1642, %v1641
        %v1662 = vpack.c.b16 %v1644, %v1643
        %v1663 = vpack.c.b16 %v1646, %v1645
        %v1664 = vpack.c.b16 %v1648, %v1647
        %1665 = vrot.lane.b32.xlu0 %v1649, 16
        %v1666 = vpop.permute.xlu0 %1665
        %1667 = vrot.lane.b32.xlu0 %v1650, 16
        %v1668 = vpop.permute.xlu0 %1667
        %1669 = vrot.lane.b32.xlu0 %v1651, 16
        %v1670 = vpop.permute.xlu0 %1669
        %1671 = vrot.lane.b32.xlu0 %v1652, 16
        %v1672 = vpop.permute.xlu0 %1671
        %1673 = vrot.lane.b32.xlu0 %v1653, 16
        %v1674 = vpop.permute.xlu0 %1673
        %1675 = vrot.lane.b32.xlu0 %v1654, 16
        %v1676 = vpop.permute.xlu0 %1675
        %1677 = vrot.lane.b32.xlu0 %v1655, 16
        %v1678 = vpop.permute.xlu0 %1677
        %1679 = vrot.lane.b32.xlu0 %v1656, 16
        %v1680 = vpop.permute.xlu0 %1679
        %1681 = vrot.lane.b32.xlu0 %v1657, 16
        %v1682 = vpop.permute.xlu0 %1681
        %1683 = vrot.lane.b32.xlu0 %v1658, 16
        %v1684 = vpop.permute.xlu0 %1683
        %1685 = vrot.lane.b32.xlu0 %v1659, 16
        %v1686 = vpop.permute.xlu0 %1685
        %1687 = vrot.lane.b32.xlu0 %v1660, 16
        %v1688 = vpop.permute.xlu0 %1687
        %1689 = vrot.lane.b32.xlu0 %v1661, 16
        %v1690 = vpop.permute.xlu0 %1689
        %1691 = vrot.lane.b32.xlu0 %v1662, 16
        %v1692 = vpop.permute.xlu0 %1691
        %1693 = vrot.lane.b32.xlu0 %v1663, 16
        %v1694 = vpop.permute.xlu0 %1693
        %1695 = vrot.lane.b32.xlu0 %v1664, 16
        %v1696 = vpop.permute.xlu0 %1695
        %v1699 = vunpack.c.l.b16 %v1471
        %v1700 = vunpack.c.l.b16 %v1472
        %v1701 = vpack.c.b16 %v1700, %v1699
        %1702 = vrot.lane.b32.xlu0 %v1570, 32
        %v1703 = vpop.permute.xlu0 %1702
        %1704 = vrot.lane.b32.xlu0 %v1571, 32
        %v1705 = vpop.permute.xlu0 %1704
        %1706 = vrot.lane.b32.xlu0 %v1572, 32
        %v1707 = vpop.permute.xlu0 %1706
        %1708 = vrot.lane.b32.xlu0 %v1573, 32
        %v1709 = vpop.permute.xlu0 %1708
        %1710 = vrot.lane.b32.xlu0 %v1574, 32
        %v1711 = vpop.permute.xlu0 %1710
        %1712 = vrot.lane.b32.xlu0 %v1575, 32
        %v1713 = vpop.permute.xlu0 %1712
        %1714 = vrot.lane.b32.xlu0 %v1576, 32
        %v1715 = vpop.permute.xlu0 %1714
        %1716 = vrot.lane.b32.xlu0 %v1577, 32
        %v1717 = vpop.permute.xlu0 %1716
        %1718 = vrot.lane.b32.xlu0 %v1578, 32
        %v1719 = vpop.permute.xlu0 %1718
        %1720 = vrot.lane.b32.xlu0 %v1579, 32
        %v1721 = vpop.permute.xlu0 %1720
        %1722 = vrot.lane.b32.xlu0 %v1580, 32
        %v1723 = vpop.permute.xlu0 %1722
        %1724 = vrot.lane.b32.xlu0 %v1581, 32
        %v1725 = vpop.permute.xlu0 %1724
        %1726 = vrot.lane.b32.xlu0 %v1582, 32
        %v1727 = vpop.permute.xlu0 %1726
        %1728 = vrot.lane.b32.xlu0 %v1583, 32
        %v1729 = vpop.permute.xlu0 %1728
        %1730 = vrot.lane.b32.xlu0 %v1584, 32
        %v1731 = vpop.permute.xlu0 %1730
        %1732 = vrot.lane.b32.xlu0 %v1701, 32
        %v1733 = vpop.permute.xlu0 %1732
        %v1766 = vunpack.c.l.b16 %v1473
        %v1767 = vunpack.c.l.b16 %v1474
        %v1768 = vunpack.c.l.b16 %v1475
        %v1769 = vunpack.c.l.b16 %v1476
        %v1770 = vunpack.c.l.b16 %v1477
        %v1771 = vunpack.c.l.b16 %v1478
        %v1772 = vunpack.c.l.b16 %v1479
        %v1773 = vunpack.c.l.b16 %v1480
        %v1774 = vunpack.c.l.b16 %v1481
        %v1775 = vunpack.c.l.b16 %v1482
        %v1776 = vunpack.c.l.b16 %v1483
        %v1777 = vunpack.c.l.b16 %v1484
        %v1778 = vunpack.c.l.b16 %v1485
        %v1779 = vunpack.c.l.b16 %v1486
        %v1780 = vunpack.c.l.b16 %v1487
        %v1781 = vunpack.c.l.b16 %v1488
        %v1782 = vunpack.c.l.b16 %v1489
        %v1783 = vunpack.c.l.b16 %v1490
        %v1784 = vunpack.c.l.b16 %v1491
        %v1785 = vunpack.c.l.b16 %v1492
        %v1786 = vunpack.c.l.b16 %v1493
        %v1787 = vunpack.c.l.b16 %v1494
        %v1788 = vunpack.c.l.b16 %v1495
        %v1789 = vunpack.c.l.b16 %v1496
        %v1790 = vunpack.c.l.b16 %v1497
        %v1791 = vunpack.c.l.b16 %v1498
        %v1792 = vunpack.c.l.b16 %v1499
        %v1793 = vunpack.c.l.b16 %v1500
        %v1794 = vunpack.c.l.b16 %v1501
        %v1795 = vunpack.c.l.b16 %v1502
        %v1796 = vunpack.c.l.b16 %v1503
        %v1797 = vunpack.c.l.b16 %v1504
        %v1798 = vpack.c.b16 %v1767, %v1766
        %v1799 = vpack.c.b16 %v1769, %v1768
        %v1800 = vpack.c.b16 %v1771, %v1770
        %v1801 = vpack.c.b16 %v1773, %v1772
        %v1802 = vpack.c.b16 %v1775, %v1774
        %v1803 = vpack.c.b16 %v1777, %v1776
        %v1804 = vpack.c.b16 %v1779, %v1778
        %v1805 = vpack.c.b16 %v1781, %v1780
        %v1806 = vpack.c.b16 %v1783, %v1782
        %v1807 = vpack.c.b16 %v1785, %v1784
        %v1808 = vpack.c.b16 %v1787, %v1786
        %v1809 = vpack.c.b16 %v1789, %v1788
        %v1810 = vpack.c.b16 %v1791, %v1790
        %v1811 = vpack.c.b16 %v1793, %v1792
        %v1812 = vpack.c.b16 %v1795, %v1794
        %v1813 = vpack.c.b16 %v1797, %v1796
        %1814 = vrot.lane.b32.xlu0 %v1798, 48
        %v1815 = vpop.permute.xlu0 %1814
        %1816 = vrot.lane.b32.xlu0 %v1799, 48
        %v1817 = vpop.permute.xlu0 %1816
        %1818 = vrot.lane.b32.xlu0 %v1800, 48
        %v1819 = vpop.permute.xlu0 %1818
        %1820 = vrot.lane.b32.xlu0 %v1801, 48
        %v1821 = vpop.permute.xlu0 %1820
        %1822 = vrot.lane.b32.xlu0 %v1802, 48
        %v1823 = vpop.permute.xlu0 %1822
        %1824 = vrot.lane.b32.xlu0 %v1803, 48
        %v1825 = vpop.permute.xlu0 %1824
        %1826 = vrot.lane.b32.xlu0 %v1804, 48
        %v1827 = vpop.permute.xlu0 %1826
        %1828 = vrot.lane.b32.xlu0 %v1805, 48
        %v1829 = vpop.permute.xlu0 %1828
        %1830 = vrot.lane.b32.xlu0 %v1806, 48
        %v1831 = vpop.permute.xlu0 %1830
        %1832 = vrot.lane.b32.xlu0 %v1807, 48
        %v1833 = vpop.permute.xlu0 %1832
        %1834 = vrot.lane.b32.xlu0 %v1808, 48
        %v1835 = vpop.permute.xlu0 %1834
        %1836 = vrot.lane.b32.xlu0 %v1809, 48
        %v1837 = vpop.permute.xlu0 %1836
        %1838 = vrot.lane.b32.xlu0 %v1810, 48
        %v1839 = vpop.permute.xlu0 %1838
        %1840 = vrot.lane.b32.xlu0 %v1811, 48
        %v1841 = vpop.permute.xlu0 %1840
        %1842 = vrot.lane.b32.xlu0 %v1812, 48
        %v1843 = vpop.permute.xlu0 %1842
        %1844 = vrot.lane.b32.xlu0 %v1813, 48
        %v1845 = vpop.permute.xlu0 %1844
        %vm1846 = vcmask 130048
        %v1849 = vsel %vm1846, %v1569, %v1666
        %v1852 = vsel %vm1846, %v1570, %v1668
        %v1855 = vsel %vm1846, %v1571, %v1670
        %v1858 = vsel %vm1846, %v1572, %v1672
        %v1861 = vsel %vm1846, %v1573, %v1674
        %v1864 = vsel %vm1846, %v1574, %v1676
        %v1867 = vsel %vm1846, %v1575, %v1678
        %v1870 = vsel %vm1846, %v1576, %v1680
        %v1873 = vsel %vm1846, %v1577, %v1682
        %v1876 = vsel %vm1846, %v1578, %v1684
        %v1879 = vsel %vm1846, %v1579, %v1686
        %v1882 = vsel %vm1846, %v1580, %v1688
        %v1885 = vsel %vm1846, %v1581, %v1690
        %v1888 = vsel %vm1846, %v1582, %v1692
        %v1891 = vsel %vm1846, %v1583, %v1694
        %v1894 = vsel %vm1846, %v1584, %v1696
        %vm1895 = vcmask 261120
        %v1897 = vsel %vm1895, %v1849, %v1703
        %v1899 = vsel %vm1895, %v1852, %v1705
        %v1901 = vsel %vm1895, %v1855, %v1707
        %v1903 = vsel %vm1895, %v1858, %v1709
        %v1905 = vsel %vm1895, %v1861, %v1711
        %v1907 = vsel %vm1895, %v1864, %v1713
        %v1909 = vsel %vm1895, %v1867, %v1715
        %v1911 = vsel %vm1895, %v1870, %v1717
        %v1913 = vsel %vm1895, %v1873, %v1719
        %v1915 = vsel %vm1895, %v1876, %v1721
        %v1917 = vsel %vm1895, %v1879, %v1723
        %v1919 = vsel %vm1895, %v1882, %v1725
        %v1921 = vsel %vm1895, %v1885, %v1727
        %v1923 = vsel %vm1895, %v1888, %v1729
        %v1925 = vsel %vm1895, %v1891, %v1731
        %v1927 = vsel %vm1895, %v1894, %v1733
        %vm1928 = vcmask 392192
        %v1930 = vsel %vm1928, %v1897, %v1815
        %v1932 = vsel %vm1928, %v1899, %v1817
        %v1934 = vsel %vm1928, %v1901, %v1819
        %v1936 = vsel %vm1928, %v1903, %v1821
        %v1938 = vsel %vm1928, %v1905, %v1823
        %v1940 = vsel %vm1928, %v1907, %v1825
        %v1942 = vsel %vm1928, %v1909, %v1827
        %v1944 = vsel %vm1928, %v1911, %v1829
        %v1946 = vsel %vm1928, %v1913, %v1831
        %v1948 = vsel %vm1928, %v1915, %v1833
        %v1950 = vsel %vm1928, %v1917, %v1835
        %v1952 = vsel %vm1928, %v1919, %v1837
        %v1954 = vsel %vm1928, %v1921, %v1839
        %v1956 = vsel %vm1928, %v1923, %v1841
        %v1958 = vsel %vm1928, %v1925, %v1843
        %v1960 = vsel %vm1928, %v1927, %v1845
        %v1961 = vld [vmem:[%s4] sm:$0xf]
        %v1962 = vld [vmem:[%s4 + $0x4] sm:$0xf]
        %v1963 = vld [vmem:[%s4 + $0x8] sm:$0xf]
        %v1964 = vld [vmem:[%s4 + $0xc] sm:$0xf]
        %v1965 = vld [vmem:[%s4 + $0x10] sm:$0xf]
        %v1966 = vld [vmem:[%s4 + $0x14] sm:$0xf]
        %v1967 = vld [vmem:[%s4 + $0x18] sm:$0xf]
        %v1968 = vld [vmem:[%s4 + $0x1c] sm:$0xf]
        %v1969 = vld [vmem:[%s5] sm:$0x1]
        %v1971 = vperm.slane %v1969, 0
        %v1981 = vunpack.c.l.b16 %v1961
        %v1982 = vunpack.c.l.b16 %v1962
        %v1983 = vunpack.c.l.b16 %v1963
        %v1984 = vunpack.c.l.b16 %v1964
        %v1985 = vunpack.c.l.b16 %v1965
        %v1986 = vunpack.c.l.b16 %v1966
        %v1987 = vunpack.c.l.b16 %v1967
        %v1988 = vunpack.c.l.b16 %v1968
        %v1989 = vpack.c.b16 %v1982, %v1981
        %v1990 = vpack.c.b16 %v1984, %v1983
        %v1991 = vpack.c.b16 %v1986, %v1985
        %v1992 = vpack.c.b16 %v1988, %v1987
        %v1997 = vsel %vm548, %v1930, 0
        %v1999 = vsel %vm548, %v1932, 0
        %v2001 = vsel %vm548, %v1934, 0
        %v2003 = vsel %vm548, %v1936, 0
        %v2005 = vsel %vm548, %v1938, 0
        %v2007 = vsel %vm548, %v1940, 0
        %v2009 = vsel %vm548, %v1942, 0
        %v2011 = vsel %vm548, %v1944, 0
        %v2013 = vsel %vm548, %v1946, 0
        %v2015 = vsel %vm548, %v1948, 0
        %v2017 = vsel %vm548, %v1950, 0
        %v2019 = vsel %vm548, %v1952, 0
        %v2021 = vsel %vm548, %v1954, 0
        %v2023 = vsel %vm548, %v1956, 0
        %v2025 = vsel %vm548, %v1958, 0
        %v2027 = vsel %vm548, %v1960, 0
        %2029 = vmatpush.bf16.msra.mxu0 0
        %2030 = vmatpush.bf16.msra.mxu0 0
        %2031 = vmatpush.bf16.msra.mxu0 0
        %2032 = vmatpush.bf16.msra.mxu0 0
        %2033 = vmatpush.bf16.msra.mxu0 %v1992
        %2034 = vmatpush.bf16.msra.mxu0 %v1991
        %2035 = vmatpush.bf16.msra.mxu0 %v1990
        %2036 = vmatpush.bf16.msra.mxu0 %v1989
        %2037 = vmatmul.bf16.gmra.mxu0 %v1997
        %v2038 = vpop.f32.mrf.mxu0
        %v2039 = vadd.f32 %v1971, %v2038
        %v2040 = vpop.f32.mrf.mxu0
        %v2041 = vadd.f32 %v1971, %v2040
        %2042 = vmatmul.bf16.gmra.mxu0 %v1999
        %v2043 = vpop.f32.mrf.mxu0
        %v2044 = vadd.f32 %v1971, %v2043
        %v2045 = vpop.f32.mrf.mxu0
        %v2046 = vadd.f32 %v1971, %v2045
        %2047 = vmatmul.bf16.gmra.mxu0 %v2001
        %v2048 = vpop.f32.mrf.mxu0
        %v2049 = vadd.f32 %v1971, %v2048
        %v2050 = vpop.f32.mrf.mxu0
        %v2051 = vadd.f32 %v1971, %v2050
        %2052 = vmatmul.bf16.gmra.mxu0 %v2003
        %v2053 = vpop.f32.mrf.mxu0
        %v2054 = vadd.f32 %v1971, %v2053
        %v2055 = vpop.f32.mrf.mxu0
        %v2056 = vadd.f32 %v1971, %v2055
        %2057 = vmatmul.bf16.gmra.mxu0 %v2005
        %v2058 = vpop.f32.mrf.mxu0
        %v2059 = vadd.f32 %v1971, %v2058
        %v2060 = vpop.f32.mrf.mxu0
        %v2061 = vadd.f32 %v1971, %v2060
        %2062 = vmatmul.bf16.gmra.mxu0 %v2007
        %v2063 = vpop.f32.mrf.mxu0
        %v2064 = vadd.f32 %v1971, %v2063
        %v2065 = vpop.f32.mrf.mxu0
        %v2066 = vadd.f32 %v1971, %v2065
        %2067 = vmatmul.bf16.gmra.mxu0 %v2009
        %v2068 = vpop.f32.mrf.mxu0
        %v2069 = vadd.f32 %v1971, %v2068
        %v2070 = vpop.f32.mrf.mxu0
        %v2071 = vadd.f32 %v1971, %v2070
        %2072 = vmatmul.bf16.gmra.mxu0 %v2011
        %v2073 = vpop.f32.mrf.mxu0
        %v2074 = vadd.f32 %v1971, %v2073
        %v2075 = vpop.f32.mrf.mxu0
        %v2076 = vadd.f32 %v1971, %v2075
        %2077 = vmatmul.bf16.gmra.mxu0 %v2013
        %v2078 = vpop.f32.mrf.mxu0
        %v2079 = vadd.f32 %v1971, %v2078
        %v2080 = vpop.f32.mrf.mxu0
        %v2081 = vadd.f32 %v1971, %v2080
        %2082 = vmatmul.bf16.gmra.mxu0 %v2015
        %v2083 = vpop.f32.mrf.mxu0
        %v2084 = vadd.f32 %v1971, %v2083
        %v2085 = vpop.f32.mrf.mxu0
        %v2086 = vadd.f32 %v1971, %v2085
        %2087 = vmatmul.bf16.gmra.mxu0 %v2017
        %v2088 = vpop.f32.mrf.mxu0
        %v2089 = vadd.f32 %v1971, %v2088
        %v2090 = vpop.f32.mrf.mxu0
        %v2091 = vadd.f32 %v1971, %v2090
        %2092 = vmatmul.bf16.gmra.mxu0 %v2019
        %v2093 = vpop.f32.mrf.mxu0
        %v2094 = vadd.f32 %v1971, %v2093
        %v2095 = vpop.f32.mrf.mxu0
        %v2096 = vadd.f32 %v1971, %v2095
        %2097 = vmatmul.bf16.gmra.mxu0 %v2021
        %v2098 = vpop.f32.mrf.mxu0
        %v2099 = vadd.f32 %v1971, %v2098
        %v2100 = vpop.f32.mrf.mxu0
        %v2101 = vadd.f32 %v1971, %v2100
        %2102 = vmatmul.bf16.gmra.mxu0 %v2023
        %v2103 = vpop.f32.mrf.mxu0
        %v2104 = vadd.f32 %v1971, %v2103
        %v2105 = vpop.f32.mrf.mxu0
        %v2106 = vadd.f32 %v1971, %v2105
        %2107 = vmatmul.bf16.gmra.mxu0 %v2025
        %v2108 = vpop.f32.mrf.mxu0
        %v2109 = vadd.f32 %v1971, %v2108
        %v2110 = vpop.f32.mrf.mxu0
        %v2111 = vadd.f32 %v1971, %v2110
        %2112 = vmatmul.bf16.gmra.mxu0 %v2027
        %v2113 = vpop.f32.mrf.mxu0
        %v2114 = vadd.f32 %v1971, %v2113
        %v2115 = vpop.f32.mrf.mxu0
        %v2116 = vadd.f32 %v1971, %v2115
        %2117 = vdwg.mxu0
        %v2118 = vmax.f32 %v2039, 0.0
        %v2119 = vmax.f32 %v2041, 0.0
        %v2120 = vmax.f32 %v2044, 0.0
        %v2121 = vmax.f32 %v2046, 0.0
        %v2122 = vmax.f32 %v2049, 0.0
        %v2123 = vmax.f32 %v2051, 0.0
        %v2124 = vmax.f32 %v2054, 0.0
        %v2125 = vmax.f32 %v2056, 0.0
        %v2126 = vmax.f32 %v2059, 0.0
        %v2127 = vmax.f32 %v2061, 0.0
        %v2128 = vmax.f32 %v2064, 0.0
        %v2129 = vmax.f32 %v2066, 0.0
        %v2130 = vmax.f32 %v2069, 0.0
        %v2131 = vmax.f32 %v2071, 0.0
        %v2132 = vmax.f32 %v2074, 0.0
        %v2133 = vmax.f32 %v2076, 0.0
        %v2134 = vmax.f32 %v2079, 0.0
        %v2135 = vmax.f32 %v2081, 0.0
        %v2136 = vmax.f32 %v2084, 0.0
        %v2137 = vmax.f32 %v2086, 0.0
        %v2138 = vmax.f32 %v2089, 0.0
        %v2139 = vmax.f32 %v2091, 0.0
        %v2140 = vmax.f32 %v2094, 0.0
        %v2141 = vmax.f32 %v2096, 0.0
        %v2142 = vmax.f32 %v2099, 0.0
        %v2143 = vmax.f32 %v2101, 0.0
        %v2144 = vmax.f32 %v2104, 0.0
        %v2145 = vmax.f32 %v2106, 0.0
        %v2146 = vmax.f32 %v2109, 0.0
        %v2147 = vmax.f32 %v2111, 0.0
        %v2148 = vmax.f32 %v2114, 0.0
        %v2149 = vmax.f32 %v2116, 0.0
        %v2150 = vpack.c.bf16 %v2119, %v2118
        %v2151 = vpack.c.bf16 %v2121, %v2120
        %v2152 = vpack.c.bf16 %v2123, %v2122
        %v2153 = vpack.c.bf16 %v2125, %v2124
        %v2154 = vpack.c.bf16 %v2127, %v2126
        %v2155 = vpack.c.bf16 %v2129, %v2128
        %v2156 = vpack.c.bf16 %v2131, %v2130
        %v2157 = vpack.c.bf16 %v2133, %v2132
        %v2158 = vpack.c.bf16 %v2135, %v2134
        %v2159 = vpack.c.bf16 %v2137, %v2136
        %v2160 = vpack.c.bf16 %v2139, %v2138
        %v2161 = vpack.c.bf16 %v2141, %v2140
        %v2162 = vpack.c.bf16 %v2143, %v2142
        %v2163 = vpack.c.bf16 %v2145, %v2144
        %v2164 = vpack.c.bf16 %v2147, %v2146
        %v2165 = vpack.c.bf16 %v2149, %v2148
        %v2166 = vld [vmem:[%s6] sm:$0xf]
        %v2167 = vld [vmem:[%s6 + $0x4] sm:$0xf]
        %v2168 = vld [vmem:[%s6 + $0x8] sm:$0xf]
        %v2169 = vld [vmem:[%s6 + $0xc] sm:$0xf]
        %v2170 = vld [vmem:[%s6 + $0x10] sm:$0xf]
        %v2171 = vld [vmem:[%s6 + $0x14] sm:$0xf]
        %v2172 = vld [vmem:[%s6 + $0x18] sm:$0xf]
        %v2173 = vld [vmem:[%s6 + $0x1c] sm:$0xf]
        %v2174 = vld [vmem:[%s7] sm:$0x1]
        %v2176 = vperm.slane %v2174, 0
        %v2186 = vunpack.c.l.b16 %v2166
        %v2187 = vunpack.c.l.b16 %v2167
        %v2188 = vunpack.c.l.b16 %v2168
        %v2189 = vunpack.c.l.b16 %v2169
        %v2190 = vunpack.c.l.b16 %v2170
        %v2191 = vunpack.c.l.b16 %v2171
        %v2192 = vunpack.c.l.b16 %v2172
        %v2193 = vunpack.c.l.b16 %v2173
        %v2194 = vpack.c.b16 %v2187, %v2186
        %v2195 = vpack.c.b16 %v2189, %v2188
        %v2196 = vpack.c.b16 %v2191, %v2190
        %v2197 = vpack.c.b16 %v2193, %v2192
        %v2203 = vsel %vm548, %v2150, 0
        %v2206 = vsel %vm548, %v2151, 0
        %v2209 = vsel %vm548, %v2152, 0
        %v2212 = vsel %vm548, %v2153, 0
        %v2215 = vsel %vm548, %v2154, 0
        %v2218 = vsel %vm548, %v2155, 0
        %v2221 = vsel %vm548, %v2156, 0
        %v2224 = vsel %vm548, %v2157, 0
        %v2227 = vsel %vm548, %v2158, 0
        %v2230 = vsel %vm548, %v2159, 0
        %v2233 = vsel %vm548, %v2160, 0
        %v2236 = vsel %vm548, %v2161, 0
        %v2239 = vsel %vm548, %v2162, 0
        %v2242 = vsel %vm548, %v2163, 0
        %v2245 = vsel %vm548, %v2164, 0
        %v2248 = vsel %vm548, %v2165, 0
        %2250 = vmatpush.bf16.msra.mxu0 0
        %2251 = vmatpush.bf16.msra.mxu0 0
        %2252 = vmatpush.bf16.msra.mxu0 0
        %2253 = vmatpush.bf16.msra.mxu0 0
        %2254 = vmatpush.bf16.msra.mxu0 %v2197
        %2255 = vmatpush.bf16.msra.mxu0 %v2196
        %2256 = vmatpush.bf16.msra.mxu0 %v2195
        %2257 = vmatpush.bf16.msra.mxu0 %v2194
        %2258 = vmatmul.bf16.gmra.mxu0 %v2203
        %v2259 = vpop.f32.mrf.mxu0
        %v2260 = vadd.f32 %v2176, %v2259
        %v2261 = vpop.f32.mrf.mxu0
        %v2262 = vadd.f32 %v2176, %v2261
        %2263 = vmatmul.bf16.gmra.mxu0 %v2206
        %v2264 = vpop.f32.mrf.mxu0
        %v2265 = vadd.f32 %v2176, %v2264
        %v2266 = vpop.f32.mrf.mxu0
        %v2267 = vadd.f32 %v2176, %v2266
        %2268 = vmatmul.bf16.gmra.mxu0 %v2209
        %v2269 = vpop.f32.mrf.mxu0
        %v2270 = vadd.f32 %v2176, %v2269
        %v2271 = vpop.f32.mrf.mxu0
        %v2272 = vadd.f32 %v2176, %v2271
        %2273 = vmatmul.bf16.gmra.mxu0 %v2212
        %v2274 = vpop.f32.mrf.mxu0
        %v2275 = vadd.f32 %v2176, %v2274
        %v2276 = vpop.f32.mrf.mxu0
        %v2277 = vadd.f32 %v2176, %v2276
        %2278 = vmatmul.bf16.gmra.mxu0 %v2215
        %v2279 = vpop.f32.mrf.mxu0
        %v2280 = vadd.f32 %v2176, %v2279
        %v2281 = vpop.f32.mrf.mxu0
        %v2282 = vadd.f32 %v2176, %v2281
        %2283 = vmatmul.bf16.gmra.mxu0 %v2218
        %v2284 = vpop.f32.mrf.mxu0
        %v2285 = vadd.f32 %v2176, %v2284
        %v2286 = vpop.f32.mrf.mxu0
        %v2287 = vadd.f32 %v2176, %v2286
        %2288 = vmatmul.bf16.gmra.mxu0 %v2221
        %v2289 = vpop.f32.mrf.mxu0
        %v2290 = vadd.f32 %v2176, %v2289
        %v2291 = vpop.f32.mrf.mxu0
        %v2292 = vadd.f32 %v2176, %v2291
        %2293 = vmatmul.bf16.gmra.mxu0 %v2224
        %v2294 = vpop.f32.mrf.mxu0
        %v2295 = vadd.f32 %v2176, %v2294
        %v2296 = vpop.f32.mrf.mxu0
        %v2297 = vadd.f32 %v2176, %v2296
        %2298 = vmatmul.bf16.gmra.mxu0 %v2227
        %v2299 = vpop.f32.mrf.mxu0
        %v2300 = vadd.f32 %v2176, %v2299
        %v2301 = vpop.f32.mrf.mxu0
        %v2302 = vadd.f32 %v2176, %v2301
        %2303 = vmatmul.bf16.gmra.mxu0 %v2230
        %v2304 = vpop.f32.mrf.mxu0
        %v2305 = vadd.f32 %v2176, %v2304
        %v2306 = vpop.f32.mrf.mxu0
        %v2307 = vadd.f32 %v2176, %v2306
        %2308 = vmatmul.bf16.gmra.mxu0 %v2233
        %v2309 = vpop.f32.mrf.mxu0
        %v2310 = vadd.f32 %v2176, %v2309
        %v2311 = vpop.f32.mrf.mxu0
        %v2312 = vadd.f32 %v2176, %v2311
        %2313 = vmatmul.bf16.gmra.mxu0 %v2236
        %v2314 = vpop.f32.mrf.mxu0
        %v2315 = vadd.f32 %v2176, %v2314
        %v2316 = vpop.f32.mrf.mxu0
        %v2317 = vadd.f32 %v2176, %v2316
        %2318 = vmatmul.bf16.gmra.mxu0 %v2239
        %v2319 = vpop.f32.mrf.mxu0
        %v2320 = vadd.f32 %v2176, %v2319
        %v2321 = vpop.f32.mrf.mxu0
        %v2322 = vadd.f32 %v2176, %v2321
        %2323 = vmatmul.bf16.gmra.mxu0 %v2242
        %v2324 = vpop.f32.mrf.mxu0
        %v2325 = vadd.f32 %v2176, %v2324
        %v2326 = vpop.f32.mrf.mxu0
        %v2327 = vadd.f32 %v2176, %v2326
        %2328 = vmatmul.bf16.gmra.mxu0 %v2245
        %v2329 = vpop.f32.mrf.mxu0
        %v2330 = vadd.f32 %v2176, %v2329
        %v2331 = vpop.f32.mrf.mxu0
        %v2332 = vadd.f32 %v2176, %v2331
        %2333 = vmatmul.bf16.gmra.mxu0 %v2248
        %v2334 = vpop.f32.mrf.mxu0
        %v2335 = vadd.f32 %v2176, %v2334
        %v2336 = vpop.f32.mrf.mxu0
        %v2337 = vadd.f32 %v2176, %v2336
        %2338 = vdwg.mxu0
        %v2339 = vmax.f32 %v2260, 0.0
        %v2340 = vmax.f32 %v2262, 0.0
        %v2341 = vmax.f32 %v2265, 0.0
        %v2342 = vmax.f32 %v2267, 0.0
        %v2343 = vmax.f32 %v2270, 0.0
        %v2344 = vmax.f32 %v2272, 0.0
        %v2345 = vmax.f32 %v2275, 0.0
        %v2346 = vmax.f32 %v2277, 0.0
        %v2347 = vmax.f32 %v2280, 0.0
        %v2348 = vmax.f32 %v2282, 0.0
        %v2349 = vmax.f32 %v2285, 0.0
        %v2350 = vmax.f32 %v2287, 0.0
        %v2351 = vmax.f32 %v2290, 0.0
        %v2352 = vmax.f32 %v2292, 0.0
        %v2353 = vmax.f32 %v2295, 0.0
        %v2354 = vmax.f32 %v2297, 0.0
        %v2355 = vmax.f32 %v2300, 0.0
        %v2356 = vmax.f32 %v2302, 0.0
        %v2357 = vmax.f32 %v2305, 0.0
        %v2358 = vmax.f32 %v2307, 0.0
        %v2359 = vmax.f32 %v2310, 0.0
        %v2360 = vmax.f32 %v2312, 0.0
        %v2361 = vmax.f32 %v2315, 0.0
        %v2362 = vmax.f32 %v2317, 0.0
        %v2363 = vmax.f32 %v2320, 0.0
        %v2364 = vmax.f32 %v2322, 0.0
        %v2365 = vmax.f32 %v2325, 0.0
        %v2366 = vmax.f32 %v2327, 0.0
        %v2367 = vmax.f32 %v2330, 0.0
        %v2368 = vmax.f32 %v2332, 0.0
        %v2369 = vmax.f32 %v2335, 0.0
        %v2370 = vmax.f32 %v2337, 0.0
        %v2371 = vpack.c.bf16 %v2339, %v2339
        %v2372 = vpack.c.bf16 %v2340, %v2340
        %v2373 = vpack.c.bf16 %v2341, %v2341
        %v2374 = vpack.c.bf16 %v2342, %v2342
        %v2375 = vpack.c.bf16 %v2343, %v2343
        %v2376 = vpack.c.bf16 %v2344, %v2344
        %v2377 = vpack.c.bf16 %v2345, %v2345
        %v2378 = vpack.c.bf16 %v2346, %v2346
        %v2379 = vpack.c.bf16 %v2347, %v2347
        %v2380 = vpack.c.bf16 %v2348, %v2348
        %v2381 = vpack.c.bf16 %v2349, %v2349
        %v2382 = vpack.c.bf16 %v2350, %v2350
        %v2383 = vpack.c.bf16 %v2351, %v2351
        %v2384 = vpack.c.bf16 %v2352, %v2352
        %v2385 = vpack.c.bf16 %v2353, %v2353
        %v2386 = vpack.c.bf16 %v2354, %v2354
        %v2387 = vpack.c.bf16 %v2355, %v2355
        %v2388 = vpack.c.bf16 %v2356, %v2356
        %v2389 = vpack.c.bf16 %v2357, %v2357
        %v2390 = vpack.c.bf16 %v2358, %v2358
        %v2391 = vpack.c.bf16 %v2359, %v2359
        %v2392 = vpack.c.bf16 %v2360, %v2360
        %v2393 = vpack.c.bf16 %v2361, %v2361
        %v2394 = vpack.c.bf16 %v2362, %v2362
        %v2395 = vpack.c.bf16 %v2363, %v2363
        %v2396 = vpack.c.bf16 %v2364, %v2364
        %v2397 = vpack.c.bf16 %v2365, %v2365
        %v2398 = vpack.c.bf16 %v2366, %v2366
        %v2399 = vpack.c.bf16 %v2367, %v2367
        %v2400 = vpack.c.bf16 %v2368, %v2368
        %v2401 = vpack.c.bf16 %v2369, %v2369
        %v2402 = vpack.c.bf16 %v2370, %v2370
        %2403 = vst [vmem:[%s369] sm:$0xf] %v2371
        %2404 = vst [vmem:[%s369 + $0x4] sm:$0xf] %v2372
        %2405 = vst [vmem:[%s369 + $0x8] sm:$0xf] %v2373
        %2406 = vst [vmem:[%s369 + $0xc] sm:$0xf] %v2374
        %2407 = vst [vmem:[%s369 + $0x10] sm:$0xf] %v2375
        %2408 = vst [vmem:[%s369 + $0x14] sm:$0xf] %v2376
        %2409 = vst [vmem:[%s369 + $0x18] sm:$0xf] %v2377
        %2410 = vst [vmem:[%s369 + $0x1c] sm:$0xf] %v2378
        %2411 = vst [vmem:[%s369 + $0x20] sm:$0xf] %v2379
        %2412 = vst [vmem:[%s369 + $0x24] sm:$0xf] %v2380
        %2413 = vst [vmem:[%s369 + $0x28] sm:$0xf] %v2381
        %2414 = vst [vmem:[%s369 + $0x2c] sm:$0xf] %v2382
        %2415 = vst [vmem:[%s369 + $0x30] sm:$0xf] %v2383
        %2416 = vst [vmem:[%s369 + $0x34] sm:$0xf] %v2384
        %2417 = vst [vmem:[%s369 + $0x38] sm:$0xf] %v2385
        %2418 = vst [vmem:[%s369 + $0x3c] sm:$0xf] %v2386
        %2419 = vst [vmem:[%s369 + $0x40] sm:$0xf] %v2387
        %2420 = vst [vmem:[%s369 + $0x44] sm:$0xf] %v2388
        %2421 = vst [vmem:[%s369 + $0x48] sm:$0xf] %v2389
        %2422 = vst [vmem:[%s369 + $0x4c] sm:$0xf] %v2390
        %2423 = vst [vmem:[%s369 + $0x50] sm:$0xf] %v2391
        %2424 = vst [vmem:[%s369 + $0x54] sm:$0xf] %v2392
        %2425 = vst [vmem:[%s369 + $0x58] sm:$0xf] %v2393
        %2426 = vst [vmem:[%s369 + $0x5c] sm:$0xf] %v2394
        %2427 = vst [vmem:[%s369 + $0x60] sm:$0xf] %v2395
        %2428 = vst [vmem:[%s369 + $0x64] sm:$0xf] %v2396
        %2429 = vst [vmem:[%s369 + $0x68] sm:$0xf] %v2397
        %2430 = vst [vmem:[%s369 + $0x6c] sm:$0xf] %v2398
        %2431 = vst [vmem:[%s369 + $0x70] sm:$0xf] %v2399
        %2432 = vst [vmem:[%s369 + $0x74] sm:$0xf] %v2400
        %2433 = vst [vmem:[%s369 + $0x78] sm:$0xf] %v2401
        %2434 = vst [vmem:[%s369 + $0x7c] sm:$0xf] %v2402
        %s2435 = sand.u32 %s234, 1
        %s2436 = scalar_lea.sflag [#allocation4], %s2435
        %s2437 = sand.u32 %s234, 1
        %s2438 = smul.addr %s2437, 128
        %s2439 = scalar_lea.vmem [#allocation3], %s2438
        // Predicated region
        $region61: #{tpu_custom_call.1} parent=51 // pred_check
          %p2440 = pneg %p244
        $region62: #{tpu_custom_call.1} parent=51 // pred_check_branch
          %2442 = sbr.rel (%p2440) target = $region64
        $region63: #{tpu_custom_call.1} parent=51 // pred_region
          %s2443 = smul.u32 32, %s27
          %2445 = vsyncadd %s2436, 0
          %s2446 = smul.addr %s26, 32
          %s2447 = sadd.s32 %s2443, %s2446
          %s2448 = smul.addr %s2447, 4
          %s2449 = scalar_lea.hbm %s8, %s2448
          %s2450 = sshll.u32 %s2439, 4
          %s2451 = int_to_ptr.vmem [resolvable:$true] %s2450
          %s2452 = sshll.u32 %s2449, 4
          %s2453 = int_to_ptr.hbm [resolvable:$true] %s2452
          %2458 = dma.vmem_to_hbm [thread:$0]  %s2451, 2048, %s2453, %s2436, 64, 64, 4
        $region64: #{tpu_custom_call.1} parent=51 // pred_fallthru
          _
      $region52: #{tpu_custom_call.1} parent=5 // pred_fallthru
        _
      %p2459 = scmp.le.s32.totalorder 2, %s17
      // Predicated region
      $region65: #{tpu_custom_call.1} parent=5 // pred_check
        %p2460 = pneg %p2459
      $region66: #{tpu_custom_call.1} parent=5 // pred_check_branch
        %2462 = sbr.rel (%p2460) target = $region68
      $region67: #{tpu_custom_call.1} parent=5 // pred_region
        %s2463 = ssub.s32 %s17, 2
        // Predicated region
        $region69: #{tpu_custom_call.1} parent=67 // pred_check
          %p2464 = pneg %p250
        $region70: #{tpu_custom_call.1} parent=67 // pred_check_branch
          %2466 = sbr.rel (%p2464) target = $region72
        $region71: #{tpu_custom_call.1} parent=67 // pred_region
          %s2467 = sand.u32 %s235, 1
          %s2468 = scalar_lea.sflag [#allocation4], %s2467
          %s2469 = sand.u32 %s235, 1
          %s2470 = smul.addr %s2469, 128
          %s2471 = scalar_lea.vmem [#allocation3], %s2470
          %2473 = dma.done %s2468, 2048
        $region72: #{tpu_custom_call.1} parent=67 // pred_fallthru
          _
      $region68: #{tpu_custom_call.1} parent=5 // pred_fallthru
        _
    $region6: #{tpu_custom_call.1} parent=1 // loop_footer
      %s21 = sadd.s32 1, %s17
    $region7: #{tpu_custom_call.1} parent=1 // loop_footer_branch
      %16 = sbr.rel target = $region3
    $region8: #{tpu_custom_call.1} parent=1 // loop_exit
      _
    %2474 = vsyncpa [#allocation4], 1
    %s2475 = scalar_lea.sflag [#allocation4], 1
    %2476 = vsyncpa %s2475, 1

// kernel: tpu_custom_call.1
$region0: #{tpu_custom_call.1}
  #allocation0 [shape = 'u32[]', space=smem, size = 0x4, offset = 0x4, fixed_abs, tag = 'smem constant byte address 0x4 - core index']
  #allocation1 [shape = 'u32[72,128]{1,0:T(1,128)}', space=vmem, size = 0x9000, scoped, tag = 'internal scratch']
  #allocation2 [shape = 'f32[16,16]{1,0:T(8,128)}', space=vmem, size = 0x2000, scoped, tag = 'scratch operand']
  %s0 = inlined_call_operand.vmem [shape: bf16[2,256,64], index: 0, kind: input, shape index: {}]
  %s1 = inlined_call_operand.vmem [shape: bf16[2,256,64], index: 1, kind: input, shape index: {}]
  %s2 = inlined_call_operand.vmem [shape: bf16[64,16], index: 2, kind: input, shape index: {}]
  %s3 = inlined_call_operand.vmem [shape: f32[1,16], index: 3, kind: input, shape index: {}]
  %s4 = inlined_call_operand.vmem [shape: bf16[64,64], index: 4, kind: input, shape index: {}]
  %s5 = inlined_call_operand.vmem [shape: f32[1,64], index: 5, kind: input, shape index: {}]
  %s6 = inlined_call_operand.vmem [shape: bf16[64,128], index: 6, kind: input, shape index: {}]
  %s7 = inlined_call_operand.vmem [shape: f32[1,128], index: 7, kind: input, shape index: {}]
  %s8 = inlined_call_operand.hbm [shape: bf16[2,256,128], index: 8, kind: output, shape index: {}]
  %s9 = sld [smem:[#allocation0]]
  $region73: #{tpu_custom_call.1} parent=0
    _
  %s11 = ssub.s32 1, %s9
  %s12 = scalar_select 0, %s11, %s9
  $region1: #{tpu_custom_call.1} parent=0
    #allocation3 [shape = 'u8[131072]{0}', space=vmem, size = 0x20000, scoped, tag = 'output window, operand 0']
    #allocation4 [shape = 's32[2]{0}', space=sflag, size = 0x8, scoped, tag = 'scoped memory for tpu_custom_call.1']
    %13 = vsyncpa [#allocation4], 0
    %s14 = scalar_lea.sflag [#allocation4], 1
    %15 = vsyncpa %s14, 0
    loop: start=0, step=1, limit=4
    $region2: #{tpu_custom_call.1} parent=1 // loop_pre_header
      _
    $region3: #{tpu_custom_call.1} parent=1 // loop_header
      %s17 = sphi 0, %s21
      %p18 = scmp.ge.s32.totalorder %s17, 4
      %s24 = sphi 0, %s36
      %s25 = sphi 0, %s32
      %s26 = sphi 0, %s24
      %s27 = sphi 0, %s25
      %s28 = sphi 0, %s26
      %s29 = sphi 0, %s27
      %s41 = sphi 0, %s43
      %s44 = sphi 0, %s41
      %s45 = sphi 0, %s44
      %s61 = sphi 0, %s45
      %s77 = sphi 0, %s79
      %s80 = sphi 0, %s77
      %s81 = sphi 0, %s80
      %s97 = sphi 0, %s81
      %s101 = sphi 0, %s101
      %s103 = sphi 0, %s101
      %s104 = sphi 0, %s103
      %s118 = sphi 0, %s104
      %s122 = sphi 0, %s122
      %s124 = sphi 0, %s122
      %s125 = sphi 0, %s124
      %s139 = sphi 0, %s125
      %s143 = sphi 0, %s143
      %s145 = sphi 0, %s143
      %s146 = sphi 0, %s145
      %s160 = sphi 0, %s146
      %s164 = sphi 0, %s164
      %s166 = sphi 0, %s164
      %s167 = sphi 0, %s166
      %s181 = sphi 0, %s167
      %s185 = sphi 0, %s185
      %s187 = sphi 0, %s185
      %s188 = sphi 0, %s187
      %s202 = sphi 0, %s188
      %s206 = sphi 0, %s206
      %s208 = sphi 0, %s206
      %s209 = sphi 0, %s208
      %s223 = sphi 0, %s209
      %s231 = sphi 0, %s233
      %s234 = sphi 0, %s231
      %s235 = sphi 0, %s234
      %s251 = sphi 0, %s235
    $region4: #{tpu_custom_call.1} parent=1 // loop_header_branch
      %20 = sbr.rel (%p18) target = $region8
    $region5: #{tpu_custom_call.1} parent=1 // loop_body
      %s22 = ssub.s32 %s17, 1
      %s23 = ssub.s32 %s17, 2
      %s30 = sadd.s32 1, %s25
      %p31 = scmp.ge.s32.totalorder %s30, 1
      %s32 = scalar_select %p31, 0, %s30
      %s33 = sadd.s32 1, %s24
      %s34 = scalar_select %p31, %s33, %s24
      %p35 = scmp.ge.s32.totalorder %s34, 2
      %s36 = scalar_select %p35, 0, %s34
      %s37 = ssub.s32 %s24, %s36
      %s38 = ssub.s32 %s25, %s32
      %s39 = sor.u32 %s37, %s38
      %p40 = scmp.eq.s32.totalorder %s39, 0
      %s42 = sadd.s32 %s41, 1
      %s43 = scalar_select %p40, %s41, %s42
      %p46 = pneg %p40
      %p47 = scmp.eq.s32.totalorder %s17, 1
      %p48 = por %p46, %p47
      %p49 = scmp.ne.s32.totalorder %s41, %s44
      %p50 = scmp.eq.s32.totalorder %s17, 0
      %p51 = por %p49, %p50
      %p52 = scmp.ne.s32.totalorder %s41, %s44
      %p53 = scmp.eq.s32.totalorder %s22, 1
      %p54 = por %p52, %p53
      %p55 = scmp.ne.s32.totalorder %s44, %s45
      %p56 = scmp.eq.s32.totalorder %s22, 0
      %p57 = por %p55, %p56
      %p58 = scmp.ne.s32.totalorder %s44, %s45
      %p59 = scmp.eq.s32.totalorder %s23, 1
      %p60 = por %p58, %p59
      %p62 = scmp.ne.s32.totalorder %s45, %s61
      %p63 = scmp.eq.s32.totalorder %s23, 0
      %p64 = por %p62, %p63
      %s65 = sadd.s32 %s25, 1
      %s66 = smul.u32 %s65, 16
      %p67 = scmp.lt.s32.totalorder %s66, 15
      %s68 = scalar_select %p67, %s66, 15
      %s69 = sadd.s32 %s32, 1
      %s70 = smul.u32 %s69, 16
      %p71 = scmp.lt.s32.totalorder %s70, 15
      %s72 = scalar_select %p71, %s70, 15
      %s73 = ssub.s32 %s24, %s36
      %s74 = ssub.s32 %s68, %s72
      %s75 = sor.u32 %s73, %s74
      %p76 = scmp.eq.s32.totalorder %s75, 0
      %s78 = sadd.s32 %s77, 1
      %s79 = scalar_select %p76, %s77, %s78
      %p82 = pneg %p76
      %p83 = scmp.eq.s32.totalorder %s17, 1
      %p84 = por %p82, %p83
      %p85 = scmp.ne.s32.totalorder %s77, %s80
      %p86 = scmp.eq.s32.totalorder %s17, 0
      %p87 = por %p85, %p86
      %p88 = scmp.ne.s32.totalorder %s77, %s80
      %p89 = scmp.eq.s32.totalorder %s22, 1
      %p90 = por %p88, %p89
      %p91 = scmp.ne.s32.totalorder %s80, %s81
      %p92 = scmp.eq.s32.totalorder %s22, 0
      %p93 = por %p91, %p92
      %p94 = scmp.ne.s32.totalorder %s80, %s81
      %p95 = scmp.eq.s32.totalorder %s23, 1
      %p96 = por %p94, %p95
      %p98 = scmp.ne.s32.totalorder %s81, %s97
      %p99 = scmp.eq.s32.totalorder %s23, 0
      %p100 = por %p98, %p99
      %s102 = sadd.s32 %s101, 1
      %p105 = scmp.eq.s32.totalorder %s17, 1
      %p106 = scmp.ne.s32.totalorder %s101, %s103
      %p107 = scmp.eq.s32.totalorder %s17, 0
      %p108 = por %p106, %p107
      %p109 = scmp.ne.s32.totalorder %s101, %s103
      %p110 = scmp.eq.s32.totalorder %s22, 1
      %p111 = por %p109, %p110
      %p112 = scmp.ne.s32.totalorder %s103, %s104
      %p113 = scmp.eq.s32.totalorder %s22, 0
      %p114 = por %p112, %p113
      %p115 = scmp.ne.s32.totalorder %s103, %s104
      %p116 = scmp.eq.s32.totalorder %s23, 1
      %p117 = por %p115, %p116
      %p119 = scmp.ne.s32.totalorder %s104, %s118
      %p120 = scmp.eq.s32.totalorder %s23, 0
      %p121 = por %p119, %p120
      %s123 = sadd.s32 %s122, 1
      %p126 = scmp.eq.s32.totalorder %s17, 1
      %p127 = scmp.ne.s32.totalorder %s122, %s124
      %p128 = scmp.eq.s32.totalorder %s17, 0
      %p129 = por %p127, %p128
      %p130 = scmp.ne.s32.totalorder %s122, %s124
      %p131 = scmp.eq.s32.totalorder %s22, 1
      %p132 = por %p130, %p131
      %p133 = scmp.ne.s32.totalorder %s124, %s125
      %p134 = scmp.eq.s32.totalorder %s22, 0
      %p135 = por %p133, %p134
      %p136 = scmp.ne.s32.totalorder %s124, %s125
      %p137 = scmp.eq.s32.totalorder %s23, 1
      %p138 = por %p136, %p137
      %p140 = scmp.ne.s32.totalorder %s125, %s139
      %p141 = scmp.eq.s32.totalorder %s23, 0
      %p142 = por %p140, %p141
      %s144 = sadd.s32 %s143, 1
      %p147 = scmp.eq.s32.totalorder %s17, 1
      %p148 = scmp.ne.s32.totalorder %s143, %s145
      %p149 = scmp.eq.s32.totalorder %s17, 0
      %p150 = por %p148, %p149
      %p151 = scmp.ne.s32.totalorder %s143, %s145
      %p152 = scmp.eq.s32.totalorder %s22, 1
      %p153 = por %p151, %p152
      %p154 = scmp.ne.s32.totalorder %s145, %s146
      %p155 = scmp.eq.s32.totalorder %s22, 0
      %p156 = por %p154, %p155
      %p157 = scmp.ne.s32.totalorder %s145, %s146
      %p158 = scmp.eq.s32.totalorder %s23, 1
      %p159 = por %p157, %p158
      %p161 = scmp.ne.s32.totalorder %s146, %s160
      %p162 = scmp.eq.s32.totalorder %s23, 0
      %p163 = por %p161, %p162
      %s165 = sadd.s32 %s164, 1
      %p168 = scmp.eq.s32.totalorder %s17, 1
      %p169 = scmp.ne.s32.totalorder %s164, %s166
      %p170 = scmp.eq.s32.totalorder %s17, 0
      %p171 = por %p169, %p170
      %p172 = scmp.ne.s32.totalorder %s164, %s166
      %p173 = scmp.eq.s32.totalorder %s22, 1
      %p174 = por %p172, %p173
      %p175 = scmp.ne.s32.totalorder %s166, %s167
      %p176 = scmp.eq.s32.totalorder %s22, 0
      %p177 = por %p175, %p176
      %p178 = scmp.ne.s32.totalorder %s166, %s167
      %p179 = scmp.eq.s32.totalorder %s23, 1
      %p180 = por %p178, %p179
      %p182 = scmp.ne.s32.totalorder %s167, %s181
      %p183 = scmp.eq.s32.totalorder %s23, 0
      %p184 = por %p182, %p183
      %s186 = sadd.s32 %s185, 1
      %p189 = scmp.eq.s32.totalorder %s17, 1
      %p190 = scmp.ne.s32.totalorder %s185, %s187
      %p191 = scmp.eq.s32.totalorder %s17, 0
      %p192 = por %p190, %p191
      %p193 = scmp.ne.s32.totalorder %s185, %s187
      %p194 = scmp.eq.s32.totalorder %s22, 1
      %p195 = por %p193, %p194
      %p196 = scmp.ne.s32.totalorder %s187, %s188
      %p197 = scmp.eq.s32.totalorder %s22, 0
      %p198 = por %p196, %p197
      %p199 = scmp.ne.s32.totalorder %s187, %s188
      %p200 = scmp.eq.s32.totalorder %s23, 1
      %p201 = por %p199, %p200
      %p203 = scmp.ne.s32.totalorder %s188, %s202
      %p204 = scmp.eq.s32.totalorder %s23, 0
      %p205 = por %p203, %p204
      %s207 = sadd.s32 %s206, 1
      %p210 = scmp.eq.s32.totalorder %s17, 1
      %p211 = scmp.ne.s32.totalorder %s206, %s208
      %p212 = scmp.eq.s32.totalorder %s17, 0
      %p213 = por %p211, %p212
      %p214 = scmp.ne.s32.totalorder %s206, %s208
      %p215 = scmp.eq.s32.totalorder %s22, 1
      %p216 = por %p214, %p215
      %p217 = scmp.ne.s32.totalorder %s208, %s209
      %p218 = scmp.eq.s32.totalorder %s22, 0
      %p219 = por %p217, %p218
      %p220 = scmp.ne.s32.totalorder %s208, %s209
      %p221 = scmp.eq.s32.totalorder %s23, 1
      %p222 = por %p220, %p221
      %p224 = scmp.ne.s32.totalorder %s209, %s223
      %p225 = scmp.eq.s32.totalorder %s23, 0
      %p226 = por %p224, %p225
      %s227 = ssub.s32 %s24, %s36
      %s228 = ssub.s32 %s25, %s32
      %s229 = sor.u32 %s227, %s228
      %p230 = scmp.eq.s32.totalorder %s229, 0
      %s232 = sadd.s32 %s231, 1
      %s233 = scalar_select %p230, %s231, %s232
      %p236 = pneg %p230
      %p237 = scmp.eq.s32.totalorder %s17, 1
      %p238 = por %p236, %p237
      %p239 = scmp.ne.s32.totalorder %s231, %s234
      %p240 = scmp.eq.s32.totalorder %s17, 0
      %p241 = por %p239, %p240
      %p242 = scmp.ne.s32.totalorder %s231, %s234
      %p243 = scmp.eq.s32.totalorder %s22, 1
      %p244 = por %p242, %p243
      %p245 = scmp.ne.s32.totalorder %s234, %s235
      %p246 = scmp.eq.s32.totalorder %s22, 0
      %p247 = por %p245, %p246
      %p248 = scmp.ne.s32.totalorder %s234, %s235
      %p249 = scmp.eq.s32.totalorder %s23, 1
      %p250 = por %p248, %p249
      %p252 = scmp.ne.s32.totalorder %s235, %s251
      %p253 = scmp.eq.s32.totalorder %s23, 0
      %p254 = por %p252, %p253
      %p255 = scmp.le.s32.totalorder 1, %s17
      %p256 = scmp.lt.s32.totalorder %s17, 3
      %p257 = pnand %p255, %p256
      %p258 = pneg %p257
      // Predicated region
      $region9: #{tpu_custom_call.1} parent=5 // pred_check
        _
      $region10: #{tpu_custom_call.1} parent=5 // pred_check_branch
        %260 = sbr.rel (%p257) target = $region12
      $region11: #{tpu_custom_call.1} parent=5 // pred_region
        %s261 = ssub.s32 %s17, 1
        // Predicated region
        $region13: #{tpu_custom_call.1} parent=11 // pred_check
          %p262 = pneg %p114
        $region14: #{tpu_custom_call.1} parent=11 // pred_check_branch
          %264 = sbr.rel (%p262) target = $region16
        $region15: #{tpu_custom_call.1} parent=11 // pred_region
          _
        $region16: #{tpu_custom_call.1} parent=11 // pred_fallthru
          _
        // Predicated region
        $region17: #{tpu_custom_call.1} parent=11 // pred_check
          %p265 = pneg %p135
        $region18: #{tpu_custom_call.1} parent=11 // pred_check_branch
          %267 = sbr.rel (%p265) target = $region20
        $region19: #{tpu_custom_call.1} parent=11 // pred_region
          _
        $region20: #{tpu_custom_call.1} parent=11 // pred_fallthru
          _
        // Predicated region
        $region21: #{tpu_custom_call.1} parent=11 // pred_check
          %p268 = pneg %p156
        $region22: #{tpu_custom_call.1} parent=11 // pred_check_branch
          %270 = sbr.rel (%p268) target = $region24
        $region23: #{tpu_custom_call.1} parent=11 // pred_region
          _
        $region24: #{tpu_custom_call.1} parent=11 // pred_fallthru
          _
        // Predicated region
        $region25: #{tpu_custom_call.1} parent=11 // pred_check
          %p271 = pneg %p177
        $region26: #{tpu_custom_call.1} parent=11 // pred_check_branch
          %273 = sbr.rel (%p271) target = $region28
        $region27: #{tpu_custom_call.1} parent=11 // pred_region
          _
        $region28: #{tpu_custom_call.1} parent=11 // pred_fallthru
          _
        // Predicated region
        $region29: #{tpu_custom_call.1} parent=11 // pred_check
          %p274 = pneg %p198
        $region30: #{tpu_custom_call.1} parent=11 // pred_check_branch
          %276 = sbr.rel (%p274) target = $region32
        $region31: #{tpu_custom_call.1} parent=11 // pred_region
          _
        $region32: #{tpu_custom_call.1} parent=11 // pred_fallthru
          _
        // Predicated region
        $region33: #{tpu_custom_call.1} parent=11 // pred_check
          %p277 = pneg %p219
        $region34: #{tpu_custom_call.1} parent=11 // pred_check_branch
          %279 = sbr.rel (%p277) target = $region36
        $region35: #{tpu_custom_call.1} parent=11 // pred_region
          _
        $region36: #{tpu_custom_call.1} parent=11 // pred_fallthru
          _
      $region12: #{tpu_custom_call.1} parent=5 // pred_fallthru
        _
      %p280 = scmp.lt.s32.totalorder %s17, 2
      // Predicated region
      $region37: #{tpu_custom_call.1} parent=5 // pred_check
        %p281 = pneg %p280
      $region38: #{tpu_custom_call.1} parent=5 // pred_check_branch
        %283 = sbr.rel (%p281) target = $region40
      $region39: #{tpu_custom_call.1} parent=5 // pred_region
        // Predicated region
        $region41: #{tpu_custom_call.1} parent=39 // pred_check
          %p284 = pneg %p51
        $region42: #{tpu_custom_call.1} parent=39 // pred_check_branch
          %286 = sbr.rel (%p284) target = $region44
        $region43: #{tpu_custom_call.1} parent=39 // pred_region
          %s287 = smul.u32 32, %s25
          %p288 = scmp.lt.s32.totalorder %s24, 1
          %s289 = scalar_select %p288, %s24, 1
          %p290 = scmp.lt.s32.totalorder %s287, 31
          %s291 = scalar_select %p290, %s287, 31
          %s292 = smul.addr %s289, 32
          %s293 = sadd.s32 %s291, %s292
          %s294 = smul.addr %s293, 4
          %s295 = scalar_lea.vmem %s0, %s294
          %s296 = smul.u32 32, %s25
        $region44: #{tpu_custom_call.1} parent=39 // pred_fallthru
          _
        // Predicated region
        $region45: #{tpu_custom_call.1} parent=39 // pred_check
          %p297 = pneg %p87
        $region46: #{tpu_custom_call.1} parent=39 // pred_check_branch
          %299 = sbr.rel (%p297) target = $region48
        $region47: #{tpu_custom_call.1} parent=39 // pred_region
          %s300 = sadd.s32 %s25, 1
          %s301 = smul.u32 %s300, 16
          %p302 = scmp.lt.s32.totalorder %s301, 15
          %s303 = scalar_select %p302, %s301, 15
          %s304 = smul.u32 2, %s303
          %p305 = scmp.lt.s32.totalorder %s24, 1
          %s306 = scalar_select %p305, %s24, 1
          %p307 = scmp.lt.s32.totalorder %s304, 31
          %s308 = scalar_select %p307, %s304, 31
          %s309 = smul.addr %s306, 32
          %s310 = sadd.s32 %s308, %s309
          %s311 = smul.addr %s310, 4
          %s312 = scalar_lea.vmem %s1, %s311
          %s313 = sadd.s32 %s25, 1
          %s314 = smul.u32 %s313, 16
          %p315 = scmp.lt.s32.totalorder %s314, 15
          %s316 = scalar_select %p315, %s314, 15
          %s317 = smul.u32 2, %s316
        $region48: #{tpu_custom_call.1} parent=39 // pred_fallthru
          _
      $region40: #{tpu_custom_call.1} parent=5 // pred_fallthru
        _
      %p318 = scmp.le.s32.totalorder 1, %s17
      %p319 = scmp.lt.s32.totalorder %s17, 3
      %p320 = pnand %p318, %p319
      %p321 = pneg %p320
      // Predicated region
      $region49: #{tpu_custom_call.1} parent=5 // pred_check
        _
      $region50: #{tpu_custom_call.1} parent=5 // pred_check_branch
        %323 = sbr.rel (%p320) target = $region52
      $region51: #{tpu_custom_call.1} parent=5 // pred_region
        %s324 = ssub.s32 %s17, 1
        %s325 = smul.u32 32, %s27
        %p326 = scmp.lt.s32.totalorder %s26, 1
        %s327 = scalar_select %p326, %s26, 1
        %p328 = scmp.lt.s32.totalorder %s325, 31
        %s329 = scalar_select %p328, %s325, 31
        %s330 = smul.addr %s327, 32
        %s331 = sadd.s32 %s329, %s330
        %s332 = smul.addr %s331, 4
        %s333 = scalar_lea.vmem %s0, %s332
        %p334 = pneg %p57
        %p335 = pneg %p54
        %s336 = sadd.s32 %s27, 1
        %s337 = smul.u32 %s336, 16
        %p338 = scmp.lt.s32.totalorder %s337, 15
        %s339 = scalar_select %p338, %s337, 15
        %s340 = smul.u32 2, %s339
        %p341 = scmp.lt.s32.totalorder %s26, 1
        %s342 = scalar_select %p341, %s26, 1
        %p343 = scmp.lt.s32.totalorder %s340, 31
        %s344 = scalar_select %p343, %s340, 31
        %s345 = smul.addr %s342, 32
        %s346 = sadd.s32 %s344, %s345
        %s347 = smul.addr %s346, 4
        %s348 = scalar_lea.vmem %s1, %s347
        %p349 = pneg %p93
        %p350 = pneg %p90
        %p351 = pneg %p114
        %p352 = pneg %p111
        %p353 = pneg %p135
        %p354 = pneg %p132
        %p355 = pneg %p156
        %p356 = pneg %p153
        %p357 = pneg %p177
        %p358 = pneg %p174
        %p359 = pneg %p198
        %p360 = pneg %p195
        %p361 = pneg %p219
        %p362 = pneg %p216
        %p363 = pneg %p247
        %p364 = pneg %p244
        %s365 = sand.u32 %s234, 1
        %s366 = scalar_lea.sflag [#allocation4], %s365
        %s367 = sand.u32 %s234, 1
        %s368 = smul.addr %s367, 128
        %s369 = scalar_lea.vmem [#allocation3], %s368
        %s370 = smul.u32 32, %s27
        %p371 = scmp.lt.s32.totalorder %s26, 1
        %s372 = scalar_select %p371, %s26, 1
        %p373 = scmp.lt.s32.totalorder %s370, 31
        %s374 = scalar_select %p373, %s370, 31
        %s375 = smul.addr %s372, 32
        %s376 = sadd.s32 %s374, %s375
        %s377 = smul.addr %s376, 4
        %s378 = scalar_lea.vmem %s0, %s377
        %s379 = smul.u32 32, %s27
        %s380 = sadd.s32 %s27, 1
        %s381 = smul.u32 %s380, 16
        %p382 = scmp.lt.s32.totalorder %s381, 15
        %s383 = scalar_select %p382, %s381, 15
        %s384 = smul.u32 2, %s383
        %p385 = scmp.lt.s32.totalorder %s26, 1
        %s386 = scalar_select %p385, %s26, 1
        %p387 = scmp.lt.s32.totalorder %s384, 31
        %s388 = scalar_select %p387, %s384, 31
        %s389 = smul.addr %s386, 32
        %s390 = sadd.s32 %s388, %s389
        %s391 = smul.addr %s390, 4
        %s392 = scalar_lea.vmem %s1, %s391
        %s393 = sadd.s32 %s27, 1
        %s394 = smul.u32 %s393, 16
        %p395 = scmp.lt.s32.totalorder %s394, 15
        %s396 = scalar_select %p395, %s394, 15
        %s397 = smul.u32 2, %s396
        %s398 = smul.u32 32, %s27
        %v400 = vld [vmem:[%s2] sm:$0xf]
        %v401 = vld [vmem:[%s2 + $0x4] sm:$0xf]
        %v402 = vld [vmem:[%s2 + $0x8] sm:$0xf]
        %v403 = vld [vmem:[%s2 + $0xc] sm:$0xf]
        %v404 = vld [vmem:[%s2 + $0x10] sm:$0xf]
        %v405 = vld [vmem:[%s2 + $0x14] sm:$0xf]
        %v406 = vld [vmem:[%s2 + $0x18] sm:$0xf]
        %v407 = vld [vmem:[%s2 + $0x1c] sm:$0xf]
        %v408 = vld [vmem:[%s3] sm:$0x1]
        %v409 = vld [vmem:[%s378] sm:$0xf]
        %v410 = vld [vmem:[%s378 + $0x4] sm:$0xf]
        %v411 = vld [vmem:[%s378 + $0x8] sm:$0xf]
        %v412 = vld [vmem:[%s378 + $0xc] sm:$0xf]
        %v413 = vld [vmem:[%s378 + $0x10] sm:$0xf]
        %v414 = vld [vmem:[%s378 + $0x14] sm:$0xf]
        %v415 = vld [vmem:[%s378 + $0x18] sm:$0xf]
        %v416 = vld [vmem:[%s378 + $0x1c] sm:$0xf]
        %v417 = vld [vmem:[%s378 + $0x20] sm:$0xf]
        %v418 = vld [vmem:[%s378 + $0x24] sm:$0xf]
        %v419 = vld [vmem:[%s378 + $0x28] sm:$0xf]
        %v420 = vld [vmem:[%s378 + $0x2c] sm:$0xf]
        %v421 = vld [vmem:[%s378 + $0x30] sm:$0xf]
        %v422 = vld [vmem:[%s378 + $0x34] sm:$0xf]
        %v423 = vld [vmem:[%s378 + $0x38] sm:$0xf]
        %v424 = vld [vmem:[%s378 + $0x3c] sm:$0xf]
        %v425 = vld [vmem:[%s378 + $0x40] sm:$0xf]
        %v426 = vld [vmem:[%s378 + $0x44] sm:$0xf]
        %v427 = vld [vmem:[%s378 + $0x48] sm:$0xf]
        %v428 = vld [vmem:[%s378 + $0x4c] sm:$0xf]
        %v429 = vld [vmem:[%s378 + $0x50] sm:$0xf]
        %v430 = vld [vmem:[%s378 + $0x54] sm:$0xf]
        %v431 = vld [vmem:[%s378 + $0x58] sm:$0xf]
        %v432 = vld [vmem:[%s378 + $0x5c] sm:$0xf]
        %v433 = vld [vmem:[%s378 + $0x60] sm:$0xf]
        %v434 = vld [vmem:[%s378 + $0x64] sm:$0xf]
        %v435 = vld [vmem:[%s378 + $0x68] sm:$0xf]
        %v436 = vld [vmem:[%s378 + $0x6c] sm:$0xf]
        %v437 = vld [vmem:[%s378 + $0x70] sm:$0xf]
        %v438 = vld [vmem:[%s378 + $0x74] sm:$0xf]
        %v439 = vld [vmem:[%s378 + $0x78] sm:$0xf]
        %v440 = vld [vmem:[%s378 + $0x7c] sm:$0xf]
        %v442 = vperm.slane %v408, 0
        %v476 = vunpack.c.l.b16 %v409
        %v477 = vunpack.c.l.b16 %v410
        %v478 = vunpack.c.l.b16 %v411
        %v479 = vunpack.c.l.b16 %v412
        %v480 = vunpack.c.l.b16 %v413
        %v481 = vunpack.c.l.b16 %v414
        %v482 = vunpack.c.l.b16 %v415
        %v483 = vunpack.c.l.b16 %v416
        %v484 = vunpack.c.l.b16 %v417
        %v485 = vunpack.c.l.b16 %v418
        %v486 = vunpack.c.l.b16 %v419
        %v487 = vunpack.c.l.b16 %v420
        %v488 = vunpack.c.l.b16 %v421
        %v489 = vunpack.c.l.b16 %v422
        %v490 = vunpack.c.l.b16 %v423
        %v491 = vunpack.c.l.b16 %v424
        %v492 = vunpack.c.l.b16 %v425
        %v493 = vunpack.c.l.b16 %v426
        %v494 = vunpack.c.l.b16 %v427
        %v495 = vunpack.c.l.b16 %v428
        %v496 = vunpack.c.l.b16 %v429
        %v497 = vunpack.c.l.b16 %v430
        %v498 = vunpack.c.l.b16 %v431
        %v499 = vunpack.c.l.b16 %v432
        %v500 = vunpack.c.l.b16 %v433
        %v501 = vunpack.c.l.b16 %v434
        %v502 = vunpack.c.l.b16 %v435
        %v503 = vunpack.c.l.b16 %v436
        %v504 = vunpack.c.l.b16 %v437
        %v505 = vunpack.c.l.b16 %v438
        %v506 = vunpack.c.l.b16 %v439
        %v507 = vunpack.c.l.b16 %v440
        %v508 = vpack.c.b16 %v477, %v476
        %v509 = vpack.c.b16 %v479, %v478
        %v510 = vpack.c.b16 %v481, %v480
        %v511 = vpack.c.b16 %v483, %v482
        %v512 = vpack.c.b16 %v485, %v484
        %v513 = vpack.c.b16 %v487, %v486
        %v514 = vpack.c.b16 %v489, %v488
        %v515 = vpack.c.b16 %v491, %v490
        %v516 = vpack.c.b16 %v493, %v492
        %v517 = vpack.c.b16 %v495, %v494
        %v518 = vpack.c.b16 %v497, %v496
        %v519 = vpack.c.b16 %v499, %v498
        %v520 = vpack.c.b16 %v501, %v500
        %v521 = vpack.c.b16 %v503, %v502
        %v522 = vpack.c.b16 %v505, %v504
        %v523 = vpack.c.b16 %v507, %v506
        %v532 = vunpack.c.l.b16 %v400
        %v533 = vunpack.c.l.b16 %v401
        %v534 = vunpack.c.l.b16 %v402
        %v535 = vunpack.c.l.b16 %v403
        %v536 = vunpack.c.l.b16 %v404
        %v537 = vunpack.c.l.b16 %v405
        %v538 = vunpack.c.l.b16 %v406
        %v539 = vunpack.c.l.b16 %v407
        %v540 = vpack.c.b16 %v533, %v532
        %v541 = vpack.c.b16 %v535, %v534
        %v542 = vpack.c.b16 %v537, %v536
        %v543 = vpack.c.b16 %v539, %v538
        %vm548 = vcmask 523264
        %v550 = vsel %vm548, %v508, 0
        %v553 = vsel %vm548, %v509, 0
        %v556 = vsel %vm548, %v510, 0
        %v559 = vsel %vm548, %v511, 0
        %v562 = vsel %vm548, %v512, 0
        %v565 = vsel %vm548, %v513, 0
        %v568 = vsel %vm548, %v514, 0
        %v571 = vsel %vm548, %v515, 0
        %v574 = vsel %vm548, %v516, 0
        %v577 = vsel %vm548, %v517, 0
        %v580 = vsel %vm548, %v518, 0
        %v583 = vsel %vm548, %v519, 0
        %v586 = vsel %vm548, %v520, 0
        %v589 = vsel %vm548, %v521, 0
        %v592 = vsel %vm548, %v522, 0
        %v595 = vsel %vm548, %v523, 0
        %597 = vmatpush.bf16.msra.mxu0 0
        %598 = vmatpush.bf16.msra.mxu0 0
        %599 = vmatpush.bf16.msra.mxu0 0
        %600 = vmatpush.bf16.msra.mxu0 0
        %601 = vmatpush.bf16.msra.mxu0 %v543
        %602 = vmatpush.bf16.msra.mxu0 %v542
        %603 = vmatpush.bf16.msra.mxu0 %v541
        %604 = vmatpush.bf16.msra.mxu0 %v540
        %605 = vmatmul.bf16.gmra.mxu0 %v550
        %v606 = vpop.f32.mrf.mxu0
        %v607 = vadd.f32 %v442, %v606
        %v608 = vpop.f32.mrf.mxu0
        %v609 = vadd.f32 %v442, %v608
        %610 = vmatmul.bf16.gmra.mxu0 %v553
        %v611 = vpop.f32.mrf.mxu0
        %v612 = vadd.f32 %v442, %v611
        %v613 = vpop.f32.mrf.mxu0
        %v614 = vadd.f32 %v442, %v613
        %615 = vmatmul.bf16.gmra.mxu0 %v556
        %v616 = vpop.f32.mrf.mxu0
        %v617 = vadd.f32 %v442, %v616
        %v618 = vpop.f32.mrf.mxu0
        %v619 = vadd.f32 %v442, %v618
        %620 = vmatmul.bf16.gmra.mxu0 %v559
        %v621 = vpop.f32.mrf.mxu0
        %v622 = vadd.f32 %v442, %v621
        %v623 = vpop.f32.mrf.mxu0
        %v624 = vadd.f32 %v442, %v623
        %625 = vmatmul.bf16.gmra.mxu0 %v562
        %v626 = vpop.f32.mrf.mxu0
        %v627 = vadd.f32 %v442, %v626
        %v628 = vpop.f32.mrf.mxu0
        %v629 = vadd.f32 %v442, %v628
        %630 = vmatmul.bf16.gmra.mxu0 %v565
        %v631 = vpop.f32.mrf.mxu0
        %v632 = vadd.f32 %v442, %v631
        %v633 = vpop.f32.mrf.mxu0
        %v634 = vadd.f32 %v442, %v633
        %635 = vmatmul.bf16.gmra.mxu0 %v568
        %v636 = vpop.f32.mrf.mxu0
        %v637 = vadd.f32 %v442, %v636
        %v638 = vpop.f32.mrf.mxu0
        %v639 = vadd.f32 %v442, %v638
        %640 = vmatmul.bf16.gmra.mxu0 %v571
        %v641 = vpop.f32.mrf.mxu0
        %v642 = vadd.f32 %v442, %v641
        %v643 = vpop.f32.mrf.mxu0
        %v644 = vadd.f32 %v442, %v643
        %645 = vmatmul.bf16.gmra.mxu0 %v574
        %v646 = vpop.f32.mrf.mxu0
        %v647 = vadd.f32 %v442, %v646
        %v648 = vpop.f32.mrf.mxu0
        %v649 = vadd.f32 %v442, %v648
        %650 = vmatmul.bf16.gmra.mxu0 %v577
        %v651 = vpop.f32.mrf.mxu0
        %v652 = vadd.f32 %v442, %v651
        %v653 = vpop.f32.mrf.mxu0
        %v654 = vadd.f32 %v442, %v653
        %655 = vmatmul.bf16.gmra.mxu0 %v580
        %v656 = vpop.f32.mrf.mxu0
        %v657 = vadd.f32 %v442, %v656
        %v658 = vpop.f32.mrf.mxu0
        %v659 = vadd.f32 %v442, %v658
        %660 = vmatmul.bf16.gmra.mxu0 %v583
        %v661 = vpop.f32.mrf.mxu0
        %v662 = vadd.f32 %v442, %v661
        %v663 = vpop.f32.mrf.mxu0
        %v664 = vadd.f32 %v442, %v663
        %665 = vmatmul.bf16.gmra.mxu0 %v586
        %v666 = vpop.f32.mrf.mxu0
        %v667 = vadd.f32 %v442, %v666
        %v668 = vpop.f32.mrf.mxu0
        %v669 = vadd.f32 %v442, %v668
        %670 = vmatmul.bf16.gmra.mxu0 %v589
        %v671 = vpop.f32.mrf.mxu0
        %v672 = vadd.f32 %v442, %v671
        %v673 = vpop.f32.mrf.mxu0
        %v674 = vadd.f32 %v442, %v673
        %675 = vmatmul.bf16.gmra.mxu0 %v592
        %v676 = vpop.f32.mrf.mxu0
        %v677 = vadd.f32 %v442, %v676
        %v678 = vpop.f32.mrf.mxu0
        %v679 = vadd.f32 %v442, %v678
        %680 = vmatmul.bf16.gmra.mxu0 %v595
        %v681 = vpop.f32.mrf.mxu0
        %v682 = vadd.f32 %v442, %v681
        %v683 = vpop.f32.mrf.mxu0
        %v684 = vadd.f32 %v442, %v683
        %685 = vdwg.mxu0
        %v686 = vmax.f32 %v607, 0.0
        %v687 = vmax.f32 %v609, 0.0
        %v688 = vmax.f32 %v612, 0.0
        %v689 = vmax.f32 %v614, 0.0
        %v690 = vmax.f32 %v617, 0.0
        %v691 = vmax.f32 %v619, 0.0
        %v692 = vmax.f32 %v622, 0.0
        %v693 = vmax.f32 %v624, 0.0
        %v694 = vmax.f32 %v627, 0.0
        %v695 = vmax.f32 %v629, 0.0
        %v696 = vmax.f32 %v632, 0.0
        %v697 = vmax.f32 %v634, 0.0
        %v698 = vmax.f32 %v637, 0.0
        %v699 = vmax.f32 %v639, 0.0
        %v700 = vmax.f32 %v642, 0.0
        %v701 = vmax.f32 %v644, 0.0
        %v702 = vmax.f32 %v647, 0.0
        %v703 = vmax.f32 %v649, 0.0
        %v704 = vmax.f32 %v652, 0.0
        %v705 = vmax.f32 %v654, 0.0
        %v706 = vmax.f32 %v657, 0.0
        %v707 = vmax.f32 %v659, 0.0
        %v708 = vmax.f32 %v662, 0.0
        %v709 = vmax.f32 %v664, 0.0
        %v710 = vmax.f32 %v667, 0.0
        %v711 = vmax.f32 %v669, 0.0
        %v712 = vmax.f32 %v672, 0.0
        %v713 = vmax.f32 %v674, 0.0
        %v714 = vmax.f32 %v677, 0.0
        %v715 = vmax.f32 %v679, 0.0
        %v716 = vmax.f32 %v682, 0.0
        %v717 = vmax.f32 %v684, 0.0
        %p718 = scmp.eq.s32.totalorder %s27, 0
        // Predicated region
        $region53: #{tpu_custom_call.1} parent=51 // pred_check
          %p719 = pneg %p718
        $region54: #{tpu_custom_call.1} parent=51 // pred_check_branch
          %721 = sbr.rel (%p719) target = $region56
        $region55: #{tpu_custom_call.1} parent=51 // pred_region
          %vm722 = vcmask 130048
          %723 = vst.msk [vmem:[#allocation2] sm:$0xff] %vm722, 0.0
          %724 = vst.msk [vmem:[#allocation2 + $0x8] sm:$0xff] %vm722, 0.0
        $region56: #{tpu_custom_call.1} parent=51 // pred_fallthru
          _
        %p725 = scmp.lt.s32.totalorder %s27, 0
        // Predicated region
        $region57: #{tpu_custom_call.1} parent=51 // pred_check
          %p726 = pneg %p725
        $region58: #{tpu_custom_call.1} parent=51 // pred_check_branch
          %728 = sbr.rel (%p726) target = $region60
        $region59: #{tpu_custom_call.1} parent=51 // pred_region
          %v729 = vld [vmem:[%s392] sm:$0xf]
          %v730 = vld [vmem:[%s392 + $0x4] sm:$0xf]
          %v733 = vunpack.c.l.b16 %v729
          %v734 = vunpack.c.l.b16 %v730
          %v735 = vpack.c.b16 %v734, %v733
          %v737 = vsel %vm548, %v735, 0
          %739 = vmatpush.bf16.msra.mxu0 0
          %740 = vmatpush.bf16.msra.mxu0 0
          %741 = vmatpush.bf16.msra.mxu0 0
          %742 = vmatpush.bf16.msra.mxu0 0
          %743 = vmatpush.bf16.msra.mxu0 %v543
          %744 = vmatpush.bf16.msra.mxu0 %v542
          %745 = vmatpush.bf16.msra.mxu0 %v541
          %746 = vmatpush.bf16.msra.mxu0 %v540
          %747 = vmatmul.bf16.gmra.mxu0 %v737
          %v748 = vpop.f32.mrf.mxu0
          %v749 = vadd.f32 %v442, %v748
          %v750 = vpop.f32.mrf.mxu0
          %v751 = vadd.f32 %v442, %v750
          %752 = vdwg.mxu0
          %v753 = vmax.f32 %v749, 0.0
          %v754 = vmax.f32 %v751, 0.0
          %vm755 = vcmask 130048
          %756 = vst.msk [vmem:[#allocation2] sm:$0xff] %vm755, %v753
          %757 = vst.msk [vmem:[#allocation2 + $0x8] sm:$0xff] %vm755, %v754
        $region60: #{tpu_custom_call.1} parent=51 // pred_fallthru
          _
        %v758 = vld [vmem:[#allocation2] sm:$0xff]
        %v759 = vld [vmem:[#allocation2 + $0x8] sm:$0xff]
        %v760 = vlaneseq
        %v761 = vshrl.u32 %v760, 7
        %v762 = vadd.s32 %v761, 8
        %v763 = vadd.s32 %v761, 16
        %v764 = vadd.s32 %v761, 24
        %v765 = vadd.s32 %v761, 32
        %v766 = vadd.s32 %v761, 40
        %v767 = vadd.s32 %v761, 48
        %v768 = vadd.s32 %v761, 56
        %v769 = vadd.s32 %v761, 64
        %v770 = vadd.s32 %v761, 72
        %v771 = vadd.s32 %v761, 80
        %v772 = vadd.s32 %v761, 88
        %v773 = vadd.s32 %v761, 96
        %v774 = vadd.s32 %v761, 104
        %v775 = vadd.s32 %v761, 112
        %v776 = vadd.s32 %v761, 120
        %v777 = vadd.s32 %v761, 128
        %v778 = vadd.s32 %v761, 136
        %v779 = vadd.s32 %v761, 144
        %v780 = vadd.s32 %v761, 152
        %v781 = vadd.s32 %v761, 160
        %v782 = vadd.s32 %v761, 168
        %v783 = vadd.s32 %v761, 176
        %v784 = vadd.s32 %v761, 184
        %v785 = vadd.s32 %v761, 192
        %v786 = vadd.s32 %v761, 200
        %v787 = vadd.s32 %v761, 208
        %v788 = vadd.s32 %v761, 216
        %v789 = vadd.s32 %v761, 224
        %v790 = vadd.s32 %v761, 232
        %v791 = vadd.s32 %v761, 240
        %v792 = vadd.s32 %v761, 248
        %vm793 = vcmp.lt.s32.totalorder %v761, 0
        %v794 = vsub.s32 0, %v761
        %v795 = vsel %vm793, %v794, %v761
        %v796 = vshrl.u32 %v795, 4
        %v797 = vand.u32 %v795, 15
        %v798 = vsub.s32 0, %v797
        %v799 = vsel %vm793, %v798, %v797
        %vm800 = vcmp.lt.s32.totalorder %v762, 0
        %v801 = vsub.s32 0, %v762
        %v802 = vsel %vm800, %v801, %v762
        %v803 = vshrl.u32 %v802, 4
        %v804 = vand.u32 %v802, 15
        %v805 = vsub.s32 0, %v804
        %v806 = vsel %vm800, %v805, %v804
        %vm807 = vcmp.lt.s32.totalorder %v763, 0
        %v808 = vsub.s32 0, %v763
        %v809 = vsel %vm807, %v808, %v763
        %v810 = vshrl.u32 %v809, 4
        %v811 = vand.u32 %v809, 15
        %v812 = vsub.s32 0, %v811
        %v813 = vsel %vm807, %v812, %v811
        %vm814 = vcmp.lt.s32.totalorder %v764, 0
        %v815 = vsub.s32 0, %v764
        %v816 = vsel %vm814, %v815, %v764
        %v817 = vshrl.u32 %v816, 4
        %v818 = vand.u32 %v816, 15
        %v819 = vsub.s32 0, %v818
        %v820 = vsel %vm814, %v819, %v818
        %vm821 = vcmp.lt.s32.totalorder %v765, 0
        %v822 = vsub.s32 0, %v765
        %v823 = vsel %vm821, %v822, %v765
        %v824 = vshrl.u32 %v823, 4
        %v825 = vand.u32 %v823, 15
        %v826 = vsub.s32 0, %v825
        %v827 = vsel %vm821, %v826, %v825
        %vm828 = vcmp.lt.s32.totalorder %v766, 0
        %v829 = vsub.s32 0, %v766
        %v830 = vsel %vm828, %v829, %v766
        %v831 = vshrl.u32 %v830, 4
        %v832 = vand.u32 %v830, 15
        %v833 = vsub.s32 0, %v832
        %v834 = vsel %vm828, %v833, %v832
        %vm835 = vcmp.lt.s32.totalorder %v767, 0
        %v836 = vsub.s32 0, %v767
        %v837 = vsel %vm835, %v836, %v767
        %v838 = vshrl.u32 %v837, 4
        %v839 = vand.u32 %v837, 15
        %v840 = vsub.s32 0, %v839
        %v841 = vsel %vm835, %v840, %v839
        %vm842 = vcmp.lt.s32.totalorder %v768, 0
        %v843 = vsub.s32 0, %v768
        %v844 = vsel %vm842, %v843, %v768
        %v845 = vshrl.u32 %v844, 4
        %v846 = vand.u32 %v844, 15
        %v847 = vsub.s32 0, %v846
        %v848 = vsel %vm842, %v847, %v846
        %vm849 = vcmp.lt.s32.totalorder %v769, 0
        %v850 = vsub.s32 0, %v769
        %v851 = vsel %vm849, %v850, %v769
        %v852 = vshrl.u32 %v851, 4
        %v853 = vand.u32 %v851, 15
        %v854 = vsub.s32 0, %v853
        %v855 = vsel %vm849, %v854, %v853
        %vm856 = vcmp.lt.s32.totalorder %v770, 0
        %v857 = vsub.s32 0, %v770
        %v858 = vsel %vm856, %v857, %v770
        %v859 = vshrl.u32 %v858, 4
        %v860 = vand.u32 %v858, 15
        %v861 = vsub.s32 0, %v860
        %v862 = vsel %vm856, %v861, %v860
        %vm863 = vcmp.lt.s32.totalorder %v771, 0
        %v864 = vsub.s32 0, %v771
        %v865 = vsel %vm863, %v864, %v771
        %v866 = vshrl.u32 %v865, 4
        %v867 = vand.u32 %v865, 15
        %v868 = vsub.s32 0, %v867
        %v869 = vsel %vm863, %v868, %v867
        %vm870 = vcmp.lt.s32.totalorder %v772, 0
        %v871 = vsub.s32 0, %v772
        %v872 = vsel %vm870, %v871, %v772
        %v873 = vshrl.u32 %v872, 4
        %v874 = vand.u32 %v872, 15
        %v875 = vsub.s32 0, %v874
        %v876 = vsel %vm870, %v875, %v874
        %vm877 = vcmp.lt.s32.totalorder %v773, 0
        %v878 = vsub.s32 0, %v773
        %v879 = vsel %vm877, %v878, %v773
        %v880 = vshrl.u32 %v879, 4
        %v881 = vand.u32 %v879, 15
        %v882 = vsub.s32 0, %v881
        %v883 = vsel %vm877, %v882, %v881
        %vm884 = vcmp.lt.s32.totalorder %v774, 0
        %v885 = vsub.s32 0, %v774
        %v886 = vsel %vm884, %v885, %v774
        %v887 = vshrl.u32 %v886, 4
        %v888 = vand.u32 %v886, 15
        %v889 = vsub.s32 0, %v888
        %v890 = vsel %vm884, %v889, %v888
        %vm891 = vcmp.lt.s32.totalorder %v775, 0
        %v892 = vsub.s32 0, %v775
        %v893 = vsel %vm891, %v892, %v775
        %v894 = vshrl.u32 %v893, 4
        %v895 = vand.u32 %v893, 15
        %v896 = vsub.s32 0, %v895
        %v897 = vsel %vm891, %v896, %v895
        %vm898 = vcmp.lt.s32.totalorder %v776, 0
        %v899 = vsub.s32 0, %v776
        %v900 = vsel %vm898, %v899, %v776
        %v901 = vshrl.u32 %v900, 4
        %v902 = vand.u32 %v900, 15
        %v903 = vsub.s32 0, %v902
        %v904 = vsel %vm898, %v903, %v902
        %vm905 = vcmp.lt.s32.totalorder %v777, 0
        %v906 = vsub.s32 0, %v777
        %v907 = vsel %vm905, %v906, %v777
        %v908 = vshrl.u32 %v907, 4
        %v909 = vand.u32 %v907, 15
        %v910 = vsub.s32 0, %v909
        %v911 = vsel %vm905, %v910, %v909
        %vm912 = vcmp.lt.s32.totalorder %v778, 0
        %v913 = vsub.s32 0, %v778
        %v914 = vsel %vm912, %v913, %v778
        %v915 = vshrl.u32 %v914, 4
        %v916 = vand.u32 %v914, 15
        %v917 = vsub.s32 0, %v916
        %v918 = vsel %vm912, %v917, %v916
        %vm919 = vcmp.lt.s32.totalorder %v779, 0
        %v920 = vsub.s32 0, %v779
        %v921 = vsel %vm919, %v920, %v779
        %v922 = vshrl.u32 %v921, 4
        %v923 = vand.u32 %v921, 15
        %v924 = vsub.s32 0, %v923
        %v925 = vsel %vm919, %v924, %v923
        %vm926 = vcmp.lt.s32.totalorder %v780, 0
        %v927 = vsub.s32 0, %v780
        %v928 = vsel %vm926, %v927, %v780
        %v929 = vshrl.u32 %v928, 4
        %v930 = vand.u32 %v928, 15
        %v931 = vsub.s32 0, %v930
        %v932 = vsel %vm926, %v931, %v930
        %vm933 = vcmp.lt.s32.totalorder %v781, 0
        %v934 = vsub.s32 0, %v781
        %v935 = vsel %vm933, %v934, %v781
        %v936 = vshrl.u32 %v935, 4
        %v937 = vand.u32 %v935, 15
        %v938 = vsub.s32 0, %v937
        %v939 = vsel %vm933, %v938, %v937
        %vm940 = vcmp.lt.s32.totalorder %v782, 0
        %v941 = vsub.s32 0, %v782
        %v942 = vsel %vm940, %v941, %v782
        %v943 = vshrl.u32 %v942, 4
        %v944 = vand.u32 %v942, 15
        %v945 = vsub.s32 0, %v944
        %v946 = vsel %vm940, %v945, %v944
        %vm947 = vcmp.lt.s32.totalorder %v783, 0
        %v948 = vsub.s32 0, %v783
        %v949 = vsel %vm947, %v948, %v783
        %v950 = vshrl.u32 %v949, 4
        %v951 = vand.u32 %v949, 15
        %v952 = vsub.s32 0, %v951
        %v953 = vsel %vm947, %v952, %v951
        %vm954 = vcmp.lt.s32.totalorder %v784, 0
        %v955 = vsub.s32 0, %v784
        %v956 = vsel %vm954, %v955, %v784
        %v957 = vshrl.u32 %v956, 4
        %v958 = vand.u32 %v956, 15
        %v959 = vsub.s32 0, %v958
        %v960 = vsel %vm954, %v959, %v958
        %vm961 = vcmp.lt.s32.totalorder %v785, 0
        %v962 = vsub.s32 0, %v785
        %v963 = vsel %vm961, %v962, %v785
        %v964 = vshrl.u32 %v963, 4
        %v965 = vand.u32 %v963, 15
        %v966 = vsub.s32 0, %v965
        %v967 = vsel %vm961, %v966, %v965
        %vm968 = vcmp.lt.s32.totalorder %v786, 0
        %v969 = vsub.s32 0, %v786
        %v970 = vsel %vm968, %v969, %v786
        %v971 = vshrl.u32 %v970, 4
        %v972 = vand.u32 %v970, 15
        %v973 = vsub.s32 0, %v972
        %v974 = vsel %vm968, %v973, %v972
        %vm975 = vcmp.lt.s32.totalorder %v787, 0
        %v976 = vsub.s32 0, %v787
        %v977 = vsel %vm975, %v976, %v787
        %v978 = vshrl.u32 %v977, 4
        %v979 = vand.u32 %v977, 15
        %v980 = vsub.s32 0, %v979
        %v981 = vsel %vm975, %v980, %v979
        %vm982 = vcmp.lt.s32.totalorder %v788, 0
        %v983 = vsub.s32 0, %v788
        %v984 = vsel %vm982, %v983, %v788
        %v985 = vshrl.u32 %v984, 4
        %v986 = vand.u32 %v984, 15
        %v987 = vsub.s32 0, %v986
        %v988 = vsel %vm982, %v987, %v986
        %vm989 = vcmp.lt.s32.totalorder %v789, 0
        %v990 = vsub.s32 0, %v789
        %v991 = vsel %vm989, %v990, %v789
        %v992 = vshrl.u32 %v991, 4
        %v993 = vand.u32 %v991, 15
        %v994 = vsub.s32 0, %v993
        %v995 = vsel %vm989, %v994, %v993
        %vm996 = vcmp.lt.s32.totalorder %v790, 0
        %v997 = vsub.s32 0, %v790
        %v998 = vsel %vm996, %v997, %v790
        %v999 = vshrl.u32 %v998, 4
        %v1000 = vand.u32 %v998, 15
        %v1001 = vsub.s32 0, %v1000
        %v1002 = vsel %vm996, %v1001, %v1000
        %vm1003 = vcmp.lt.s32.totalorder %v791, 0
        %v1004 = vsub.s32 0, %v791
        %v1005 = vsel %vm1003, %v1004, %v791
        %v1006 = vshrl.u32 %v1005, 4
        %v1007 = vand.u32 %v1005, 15
        %v1008 = vsub.s32 0, %v1007
        %v1009 = vsel %vm1003, %v1008, %v1007
        %vm1010 = vcmp.lt.s32.totalorder %v792, 0
        %v1011 = vsub.s32 0, %v792
        %v1012 = vsel %vm1010, %v1011, %v792
        %v1013 = vshrl.u32 %v1012, 4
        %v1014 = vand.u32 %v1012, 15
        %v1015 = vsub.s32 0, %v1014
        %v1016 = vsel %vm1010, %v1015, %v1014
        %vm1017 = vcmp.ne.s32.totalorder %v799, 0
        %vm1018 = vcmp.ne.s32.totalorder %v806, 0
        %vm1019 = vcmp.ne.s32.totalorder %v813, 0
        %vm1020 = vcmp.ne.s32.totalorder %v820, 0
        %vm1021 = vcmp.ne.s32.totalorder %v827, 0
        %vm1022 = vcmp.ne.s32.totalorder %v834, 0
        %vm1023 = vcmp.ne.s32.totalorder %v841, 0
        %vm1024 = vcmp.ne.s32.totalorder %v848, 0
        %vm1025 = vcmp.ne.s32.totalorder %v855, 0
        %vm1026 = vcmp.ne.s32.totalorder %v862, 0
        %vm1027 = vcmp.ne.s32.totalorder %v869, 0
        %vm1028 = vcmp.ne.s32.totalorder %v876, 0
        %vm1029 = vcmp.ne.s32.totalorder %v883, 0
        %vm1030 = vcmp.ne.s32.totalorder %v890, 0
        %vm1031 = vcmp.ne.s32.totalorder %v897, 0
        %vm1032 = vcmp.ne.s32.totalorder %v904, 0
        %vm1033 = vcmp.ne.s32.totalorder %v911, 0
        %vm1034 = vcmp.ne.s32.totalorder %v918, 0
        %vm1035 = vcmp.ne.s32.totalorder %v925, 0
        %vm1036 = vcmp.ne.s32.totalorder %v932, 0
        %vm1037 = vcmp.ne.s32.totalorder %v939, 0
        %vm1038 = vcmp.ne.s32.totalorder %v946, 0
        %vm1039 = vcmp.ne.s32.totalorder %v953, 0
        %vm1040 = vcmp.ne.s32.totalorder %v960, 0
        %vm1041 = vcmp.ne.s32.totalorder %v967, 0
        %vm1042 = vcmp.ne.s32.totalorder %v974, 0
        %vm1043 = vcmp.ne.s32.totalorder %v981, 0
        %vm1044 = vcmp.ne.s32.totalorder %v988, 0
        %vm1045 = vcmp.ne.s32.totalorder %v995, 0
        %vm1046 = vcmp.ne.s32.totalorder %v1002, 0
        %vm1047 = vcmp.ne.s32.totalorder %v1009, 0
        %vm1048 = vcmp.ne.s32.totalorder %v1016, 0
        %vm1049 = vcmp.lt.s32.totalorder %v799, 0
        %vm1050 = vcmp.lt.s32.totalorder %v806, 0
        %vm1051 = vcmp.lt.s32.totalorder %v813, 0
        %vm1052 = vcmp.lt.s32.totalorder %v820, 0
        %vm1053 = vcmp.lt.s32.totalorder %v827, 0
        %vm1054 = vcmp.lt.s32.totalorder %v834, 0
        %vm1055 = vcmp.lt.s32.totalorder %v841, 0
        %vm1056 = vcmp.lt.s32.totalorder %v848, 0
        %vm1057 = vcmp.lt.s32.totalorder %v855, 0
        %vm1058 = vcmp.lt.s32.totalorder %v862, 0
        %vm1059 = vcmp.lt.s32.totalorder %v869, 0
        %vm1060 = vcmp.lt.s32.totalorder %v876, 0
        %vm1061 = vcmp.lt.s32.totalorder %v883, 0
        %vm1062 = vcmp.lt.s32.totalorder %v890, 0
        %vm1063 = vcmp.lt.s32.totalorder %v897, 0
        %vm1064 = vcmp.lt.s32.totalorder %v904, 0
        %vm1065 = vcmp.lt.s32.totalorder %v911, 0
        %vm1066 = vcmp.lt.s32.totalorder %v918, 0
        %vm1067 = vcmp.lt.s32.totalorder %v925, 0
        %vm1068 = vcmp.lt.s32.totalorder %v932, 0
        %vm1069 = vcmp.lt.s32.totalorder %v939, 0
        %vm1070 = vcmp.lt.s32.totalorder %v946, 0
        %vm1071 = vcmp.lt.s32.totalorder %v953, 0
        %vm1072 = vcmp.lt.s32.totalorder %v960, 0
        %vm1073 = vcmp.lt.s32.totalorder %v967, 0
        %vm1074 = vcmp.lt.s32.totalorder %v974, 0
        %vm1075 = vcmp.lt.s32.totalorder %v981, 0
        %vm1076 = vcmp.lt.s32.totalorder %v988, 0
        %vm1077 = vcmp.lt.s32.totalorder %v995, 0
        %vm1078 = vcmp.lt.s32.totalorder %v1002, 0
        %vm1079 = vcmp.lt.s32.totalorder %v1009, 0
        %vm1080 = vcmp.lt.s32.totalorder %v1016, 0
        %vm1081 = vmand %vm1049, %vm1017
        %vm1082 = vmand %vm1050, %vm1018
        %vm1083 = vmand %vm1051, %vm1019
        %vm1084 = vmand %vm1052, %vm1020
        %vm1085 = vmand %vm1053, %vm1021
        %vm1086 = vmand %vm1054, %vm1022
        %vm1087 = vmand %vm1055, %vm1023
        %vm1088 = vmand %vm1056, %vm1024
        %vm1089 = vmand %vm1057, %vm1025
        %vm1090 = vmand %vm1058, %vm1026
        %vm1091 = vmand %vm1059, %vm1027
        %vm1092 = vmand %vm1060, %vm1028
        %vm1093 = vmand %vm1061, %vm1029
        %vm1094 = vmand %vm1062, %vm1030
        %vm1095 = vmand %vm1063, %vm1031
        %vm1096 = vmand %vm1064, %vm1032
        %vm1097 = vmand %vm1065, %vm1033
        %vm1098 = vmand %vm1066, %vm1034
        %vm1099 = vmand %vm1067, %vm1035
        %vm1100 = vmand %vm1068, %vm1036
        %vm1101 = vmand %vm1069, %vm1037
        %vm1102 = vmand %vm1070, %vm1038
        %vm1103 = vmand %vm1071, %vm1039
        %vm1104 = vmand %vm1072, %vm1040
        %vm1105 = vmand %vm1073, %vm1041
        %vm1106 = vmand %vm1074, %vm1042
        %vm1107 = vmand %vm1075, %vm1043
        %vm1108 = vmand %vm1076, %vm1044
        %vm1109 = vmand %vm1077, %vm1045
        %vm1110 = vmand %vm1078, %vm1046
        %vm1111 = vmand %vm1079, %vm1047
        %vm1112 = vmand %vm1080, %vm1048
        %v1113 = vadd.s32 %v799, 16
        %v1114 = vadd.s32 %v806, 16
        %v1115 = vadd.s32 %v813, 16
        %v1116 = vadd.s32 %v820, 16
        %v1117 = vadd.s32 %v827, 16
        %v1118 = vadd.s32 %v834, 16
        %v1119 = vadd.s32 %v841, 16
        %v1120 = vadd.s32 %v848, 16
        %v1121 = vadd.s32 %v855, 16
        %v1122 = vadd.s32 %v862, 16
        %v1123 = vadd.s32 %v869, 16
        %v1124 = vadd.s32 %v876, 16
        %v1125 = vadd.s32 %v883, 16
        %v1126 = vadd.s32 %v890, 16
        %v1127 = vadd.s32 %v897, 16
        %v1128 = vadd.s32 %v904, 16
        %v1129 = vadd.s32 %v911, 16
        %v1130 = vadd.s32 %v918, 16
        %v1131 = vadd.s32 %v925, 16
        %v1132 = vadd.s32 %v932, 16
        %v1133 = vadd.s32 %v939, 16
        %v1134 = vadd.s32 %v946, 16
        %v1135 = vadd.s32 %v953, 16
        %v1136 = vadd.s32 %v960, 16
        %v1137 = vadd.s32 %v967, 16
        %v1138 = vadd.s32 %v974, 16
        %v1139 = vadd.s32 %v981, 16
        %v1140 = vadd.s32 %v988, 16
        %v1141 = vadd.s32 %v995, 16
        %v1142 = vadd.s32 %v1002, 16
        %v1143 = vadd.s32 %v1009, 16
        %v1144 = vadd.s32 %v1016, 16
        %v1145 = vsel %vm1081, %v1113, %v799
        %v1146 = vsel %vm1082, %v1114, %v806
        %v1147 = vsel %vm1083, %v1115, %v813
        %v1148 = vsel %vm1084, %v1116, %v820
        %v1149 = vsel %vm1085, %v1117, %v827
        %v1150 = vsel %vm1086, %v1118, %v834
        %v1151 = vsel %vm1087, %v1119, %v841
        %v1152 = vsel %vm1088, %v1120, %v848
        %v1153 = vsel %vm1089, %v1121, %v855
        %v1154 = vsel %vm1090, %v1122, %v862
        %v1155 = vsel %vm1091, %v1123, %v869
        %v1156 = vsel %vm1092, %v1124, %v876
        %v1157 = vsel %vm1093, %v1125, %v883
        %v1158 = vsel %vm1094, %v1126, %v890
        %v1159 = vsel %vm1095, %v1127, %v897
        %v1160 = vsel %vm1096, %v1128, %v904
        %v1161 = vsel %vm1097, %v1129, %v911
        %v1162 = vsel %vm1098, %v1130, %v918
        %v1163 = vsel %vm1099, %v1131, %v925
        %v1164 = vsel %vm1100, %v1132, %v932
        %v1165 = vsel %vm1101, %v1133, %v939
        %v1166 = vsel %vm1102, %v1134, %v946
        %v1167 = vsel %vm1103, %v1135, %v953
        %v1168 = vsel %vm1104, %v1136, %v960
        %v1169 = vsel %vm1105, %v1137, %v967
        %v1170 = vsel %vm1106, %v1138, %v974
        %v1171 = vsel %vm1107, %v1139, %v981
        %v1172 = vsel %vm1108, %v1140, %v988
        %v1173 = vsel %vm1109, %v1141, %v995
        %v1174 = vsel %vm1110, %v1142, %v1002
        %v1175 = vsel %vm1111, %v1143, %v1009
        %v1176 = vsel %vm1112, %v1144, %v1016
        %vm1177 = vcmp.eq.s32.totalorder %v1145, 15
        %vm1178 = vcmp.eq.s32.totalorder %v1146, 15
        %vm1179 = vcmp.eq.s32.totalorder %v1147, 15
        %vm1180 = vcmp.eq.s32.totalorder %v1148, 15
        %vm1181 = vcmp.eq.s32.totalorder %v1149, 15
        %vm1182 = vcmp.eq.s32.totalorder %v1150, 15
        %vm1183 = vcmp.eq.s32.totalorder %v1151, 15
        %vm1184 = vcmp.eq.s32.totalorder %v1152, 15
        %vm1185 = vcmp.eq.s32.totalorder %v1153, 15
        %vm1186 = vcmp.eq.s32.totalorder %v1154, 15
        %vm1187 = vcmp.eq.s32.totalorder %v1155, 15
        %vm1188 = vcmp.eq.s32.totalorder %v1156, 15
        %vm1189 = vcmp.eq.s32.totalorder %v1157, 15
        %vm1190 = vcmp.eq.s32.totalorder %v1158, 15
        %vm1191 = vcmp.eq.s32.totalorder %v1159, 15
        %vm1192 = vcmp.eq.s32.totalorder %v1160, 15
        %vm1193 = vcmp.eq.s32.totalorder %v1161, 15
        %vm1194 = vcmp.eq.s32.totalorder %v1162, 15
        %vm1195 = vcmp.eq.s32.totalorder %v1163, 15
        %vm1196 = vcmp.eq.s32.totalorder %v1164, 15
        %vm1197 = vcmp.eq.s32.totalorder %v1165, 15
        %vm1198 = vcmp.eq.s32.totalorder %v1166, 15
        %vm1199 = vcmp.eq.s32.totalorder %v1167, 15
        %vm1200 = vcmp.eq.s32.totalorder %v1168, 15
        %vm1201 = vcmp.eq.s32.totalorder %v1169, 15
        %vm1202 = vcmp.eq.s32.totalorder %v1170, 15
        %vm1203 = vcmp.eq.s32.totalorder %v1171, 15
        %vm1204 = vcmp.eq.s32.totalorder %v1172, 15
        %vm1205 = vcmp.eq.s32.totalorder %v1173, 15
        %vm1206 = vcmp.eq.s32.totalorder %v1174, 15
        %vm1207 = vcmp.eq.s32.totalorder %v1175, 15
        %vm1208 = vcmp.eq.s32.totalorder %v1176, 15
        %v1209 = vrot.slane %v686, 1
        %v1210 = vrot.slane %v687, 1
        %v1211 = vrot.slane %v688, 1
        %v1212 = vrot.slane %v689, 1
        %v1213 = vrot.slane %v690, 1
        %v1214 = vrot.slane %v691, 1
        %v1215 = vrot.slane %v692, 1
        %v1216 = vrot.slane %v693, 1
        %v1217 = vrot.slane %v694, 1
        %v1218 = vrot.slane %v695, 1
        %v1219 = vrot.slane %v696, 1
        %v1220 = vrot.slane %v697, 1
        %v1221 = vrot.slane %v698, 1
        %v1222 = vrot.slane %v699, 1
        %v1223 = vrot.slane %v700, 1
        %v1224 = vrot.slane %v701, 1
        %v1225 = vrot.slane %v702, 1
        %v1226 = vrot.slane %v703, 1
        %v1227 = vrot.slane %v704, 1
        %v1228 = vrot.slane %v705, 1
        %v1229 = vrot.slane %v706, 1
        %v1230 = vrot.slane %v707, 1
        %v1231 = vrot.slane %v708, 1
        %v1232 = vrot.slane %v709, 1
        %v1233 = vrot.slane %v710, 1
        %v1234 = vrot.slane %v711, 1
        %v1235 = vrot.slane %v712, 1
        %v1236 = vrot.slane %v713, 1
        %v1237 = vrot.slane %v714, 1
        %v1238 = vrot.slane %v715, 1
        %v1239 = vrot.slane %v716, 1
        %v1240 = vrot.slane %v717, 1
        %vm1241 = vcmp.lt.s32.totalorder %v761, 7
        %v1242 = vsel %vm1241, %v1239, %v1240
        %v1243 = vsel %vm1241, %v1238, %v1239
        %v1244 = vsel %vm1241, %v1237, %v1238
        %v1245 = vsel %vm1241, %v1236, %v1237
        %v1246 = vsel %vm1241, %v1235, %v1236
        %v1247 = vsel %vm1241, %v1234, %v1235
        %v1248 = vsel %vm1241, %v1233, %v1234
        %v1249 = vsel %vm1241, %v1232, %v1233
        %v1250 = vsel %vm1241, %v1231, %v1232
        %v1251 = vsel %vm1241, %v1230, %v1231
        %v1252 = vsel %vm1241, %v1229, %v1230
        %v1253 = vsel %vm1241, %v1228, %v1229
        %v1254 = vsel %vm1241, %v1227, %v1228
        %v1255 = vsel %vm1241, %v1226, %v1227
        %v1256 = vsel %vm1241, %v1225, %v1226
        %v1257 = vsel %vm1241, %v1224, %v1225
        %v1258 = vsel %vm1241, %v1223, %v1224
        %v1259 = vsel %vm1241, %v1222, %v1223
        %v1260 = vsel %vm1241, %v1221, %v1222
        %v1261 = vsel %vm1241, %v1220, %v1221
        %v1262 = vsel %vm1241, %v1219, %v1220
        %v1263 = vsel %vm1241, %v1218, %v1219
        %v1264 = vsel %vm1241, %v1217, %v1218
        %v1265 = vsel %vm1241, %v1216, %v1217
        %v1266 = vsel %vm1241, %v1215, %v1216
        %v1267 = vsel %vm1241, %v1214, %v1215
        %v1268 = vsel %vm1241, %v1213, %v1214
        %v1269 = vsel %vm1241, %v1212, %v1213
        %v1270 = vsel %vm1241, %v1211, %v1212
        %v1271 = vsel %vm1241, %v1210, %v1211
        %v1272 = vsel %vm1241, %v1209, %v1210
        %v1273 = vsel %vm1241, %v1240, %v1209
        %v1274 = vsel %vm1177, 1, 0
        %v1275 = vsel %vm1178, 1, 0
        %v1276 = vsel %vm1179, 1, 0
        %v1277 = vsel %vm1180, 1, 0
        %v1278 = vsel %vm1181, 1, 0
        %v1279 = vsel %vm1182, 1, 0
        %v1280 = vsel %vm1183, 1, 0
        %v1281 = vsel %vm1184, 1, 0
        %v1282 = vsel %vm1185, 1, 0
        %v1283 = vsel %vm1186, 1, 0
        %v1284 = vsel %vm1187, 1, 0
        %v1285 = vsel %vm1188, 1, 0
        %v1286 = vsel %vm1189, 1, 0
        %v1287 = vsel %vm1190, 1, 0
        %v1288 = vsel %vm1191, 1, 0
        %v1289 = vsel %vm1192, 1, 0
        %v1290 = vsel %vm1193, 1, 0
        %v1291 = vsel %vm1194, 1, 0
        %v1292 = vsel %vm1195, 1, 0
        %v1293 = vsel %vm1196, 1, 0
        %v1294 = vsel %vm1197, 1, 0
        %v1295 = vsel %vm1198, 1, 0
        %v1296 = vsel %vm1199, 1, 0
        %v1297 = vsel %vm1200, 1, 0
        %v1298 = vsel %vm1201, 1, 0
        %v1299 = vsel %vm1202, 1, 0
        %v1300 = vsel %vm1203, 1, 0
        %v1301 = vsel %vm1204, 1, 0
        %v1302 = vsel %vm1205, 1, 0
        %v1303 = vsel %vm1206, 1, 0
        %v1304 = vsel %vm1207, 1, 0
        %v1305 = vsel %vm1208, 1, 0
        %vm1306 = vcmp.eq.s32.totalorder %v1274, 1
        %vm1307 = vcmp.eq.s32.totalorder %v1275, 1
        %vm1308 = vcmp.eq.s32.totalorder %v1276, 1
        %vm1309 = vcmp.eq.s32.totalorder %v1277, 1
        %vm1310 = vcmp.eq.s32.totalorder %v1278, 1
        %vm1311 = vcmp.eq.s32.totalorder %v1279, 1
        %vm1312 = vcmp.eq.s32.totalorder %v1280, 1
        %vm1313 = vcmp.eq.s32.totalorder %v1281, 1
        %vm1314 = vcmp.eq.s32.totalorder %v1282, 1
        %vm1315 = vcmp.eq.s32.totalorder %v1283, 1
        %vm1316 = vcmp.eq.s32.totalorder %v1284, 1
        %vm1317 = vcmp.eq.s32.totalorder %v1285, 1
        %vm1318 = vcmp.eq.s32.totalorder %v1286, 1
        %vm1319 = vcmp.eq.s32.totalorder %v1287, 1
        %vm1320 = vcmp.eq.s32.totalorder %v1288, 1
        %vm1321 = vcmp.eq.s32.totalorder %v1289, 1
        %vm1322 = vcmp.eq.s32.totalorder %v1290, 1
        %vm1323 = vcmp.eq.s32.totalorder %v1291, 1
        %vm1324 = vcmp.eq.s32.totalorder %v1292, 1
        %vm1325 = vcmp.eq.s32.totalorder %v1293, 1
        %vm1326 = vcmp.eq.s32.totalorder %v1294, 1
        %vm1327 = vcmp.eq.s32.totalorder %v1295, 1
        %vm1328 = vcmp.eq.s32.totalorder %v1296, 1
        %vm1329 = vcmp.eq.s32.totalorder %v1297, 1
        %vm1330 = vcmp.eq.s32.totalorder %v1298, 1
        %vm1331 = vcmp.eq.s32.totalorder %v1299, 1
        %vm1332 = vcmp.eq.s32.totalorder %v1300, 1
        %vm1333 = vcmp.eq.s32.totalorder %v1301, 1
        %vm1334 = vcmp.eq.s32.totalorder %v1302, 1
        %vm1335 = vcmp.eq.s32.totalorder %v1303, 1
        %vm1336 = vcmp.eq.s32.totalorder %v1304, 1
        %vm1337 = vcmp.eq.s32.totalorder %v1305, 1
        %v1338 = vsel %vm1306, 0.0, %v1272
        %v1339 = vsel %vm1307, 0.0, %v1271
        %v1340 = vsel %vm1308, 0.0, %v1270
        %v1341 = vsel %vm1309, 0.0, %v1269
        %v1342 = vsel %vm1310, 0.0, %v1268
        %v1343 = vsel %vm1311, 0.0, %v1267
        %v1344 = vsel %vm1312, 0.0, %v1266
        %v1345 = vsel %vm1313, 0.0, %v1265
        %v1346 = vsel %vm1314, 0.0, %v1264
        %v1347 = vsel %vm1315, 0.0, %v1263
        %v1348 = vsel %vm1316, 0.0, %v1262
        %v1349 = vsel %vm1317, 0.0, %v1261
        %v1350 = vsel %vm1318, 0.0, %v1260
        %v1351 = vsel %vm1319, 0.0, %v1259
        %v1352 = vsel %vm1320, 0.0, %v1258
        %v1353 = vsel %vm1321, 0.0, %v1257
        %v1354 = vsel %vm1322, 0.0, %v1256
        %v1355 = vsel %vm1323, 0.0, %v1255
        %v1356 = vsel %vm1324, 0.0, %v1254
        %v1357 = vsel %vm1325, 0.0, %v1253
        %v1358 = vsel %vm1326, 0.0, %v1252
        %v1359 = vsel %vm1327, 0.0, %v1251
        %v1360 = vsel %vm1328, 0.0, %v1250
        %v1361 = vsel %vm1329, 0.0, %v1249
        %v1362 = vsel %vm1330, 0.0, %v1248
        %v1363 = vsel %vm1331, 0.0, %v1247
        %v1364 = vsel %vm1332, 0.0, %v1246
        %v1365 = vsel %vm1333, 0.0, %v1245
        %v1366 = vsel %vm1334, 0.0, %v1244
        %v1367 = vsel %vm1335, 0.0, %v1243
        %v1368 = vsel %vm1336, 0.0, %v1242
        %v1369 = vsel %vm1337, 0.0, %v1273
        %v1370 = vrot.slane %v758, 1
        %v1371 = vrot.slane %v759, 1
        %v1372 = vsel %vm1241, %v1370, %v1371
        %v1373 = vsel %vm1241, %v1240, %v1370
        %v1374 = vsel %vm1241, %v1371, %v1211
        %v1375 = vsel %vm1306, 0.0, %v1270
        %v1376 = vsel %vm1307, 0.0, %v1269
        %v1377 = vsel %vm1308, 0.0, %v1268
        %v1378 = vsel %vm1309, 0.0, %v1267
        %v1379 = vsel %vm1310, 0.0, %v1266
        %v1380 = vsel %vm1311, 0.0, %v1265
        %v1381 = vsel %vm1312, 0.0, %v1264
        %v1382 = vsel %vm1313, 0.0, %v1263
        %v1383 = vsel %vm1314, 0.0, %v1262
        %v1384 = vsel %vm1315, 0.0, %v1261
        %v1385 = vsel %vm1316, 0.0, %v1260
        %v1386 = vsel %vm1317, 0.0, %v1259
        %v1387 = vsel %vm1318, 0.0, %v1258
        %v1388 = vsel %vm1319, 0.0, %v1257
        %v1389 = vsel %vm1320, 0.0, %v1256
        %v1390 = vsel %vm1321, 0.0, %v1255
        %v1391 = vsel %vm1322, 0.0, %v1254
        %v1392 = vsel %vm1323, 0.0, %v1253
        %v1393 = vsel %vm1324, 0.0, %v1252
        %v1394 = vsel %vm1325, 0.0, %v1251
        %v1395 = vsel %vm1326, 0.0, %v1250
        %v1396 = vsel %vm1327, 0.0, %v1249
        %v1397 = vsel %vm1328, 0.0, %v1248
        %v1398 = vsel %vm1329, 0.0, %v1247
        %v1399 = vsel %vm1330, 0.0, %v1246
        %v1400 = vsel %vm1331, 0.0, %v1245
        %v1401 = vsel %vm1332, 0.0, %v1244
        %v1402 = vsel %vm1333, 0.0, %v1243
        %v1403 = vsel %vm1334, 0.0, %v1242
        %v1404 = vsel %vm1335, 0.0, %v1373
        %v1405 = vsel %vm1336, 0.0, %v1372
        %v1406 = vsel %vm1337, 0.0, %v1374
        %v1407 = vpack.c.bf16 %v686, %v686
        %v1408 = vpack.c.bf16 %v687, %v687
        %v1409 = vpack.c.bf16 %v688, %v688
        %v1410 = vpack.c.bf16 %v689, %v689
        %v1411 = vpack.c.bf16 %v690, %v690
        %v1412 = vpack.c.bf16 %v691, %v691
        %v1413 = vpack.c.bf16 %v692, %v692
        %v1414 = vpack.c.bf16 %v693, %v693
        %v1415 = vpack.c.bf16 %v694, %v694
        %v1416 = vpack.c.bf16 %v695, %v695
        %v1417 = vpack.c.bf16 %v696, %v696
        %v1418 = vpack.c.bf16 %v697, %v697
        %v1419 = vpack.c.bf16 %v698, %v698
        %v1420 = vpack.c.bf16 %v699, %v699
        %v1421 = vpack.c.bf16 %v700, %v700
        %v1422 = vpack.c.bf16 %v701, %v701
        %v1423 = vpack.c.bf16 %v702, %v702
        %v1424 = vpack.c.bf16 %v703, %v703
        %v1425 = vpack.c.bf16 %v704, %v704
        %v1426 = vpack.c.bf16 %v705, %v705
        %v1427 = vpack.c.bf16 %v706, %v706
        %v1428 = vpack.c.bf16 %v707, %v707
        %v1429 = vpack.c.bf16 %v708, %v708
        %v1430 = vpack.c.bf16 %v709, %v709
        %v1431 = vpack.c.bf16 %v710, %v710
        %v1432 = vpack.c.bf16 %v711, %v711
        %v1433 = vpack.c.bf16 %v712, %v712
        %v1434 = vpack.c.bf16 %v713, %v713
        %v1435 = vpack.c.bf16 %v714, %v714
        %v1436 = vpack.c.bf16 %v715, %v715
        %v1437 = vpack.c.bf16 %v716, %v716
        %v1438 = vpack.c.bf16 %v717, %v717
        %v1439 = vpack.c.bf16 %v1338, %v1338
        %v1440 = vpack.c.bf16 %v1339, %v1339
        %v1441 = vpack.c.bf16 %v1340, %v1340
        %v1442 = vpack.c.bf16 %v1341, %v1341
        %v1443 = vpack.c.bf16 %v1342, %v1342
        %v1444 = vpack.c.bf16 %v1343, %v1343
        %v1445 = vpack.c.bf16 %v1344, %v1344
        %v1446 = vpack.c.bf16 %v1345, %v1345
        %v1447 = vpack.c.bf16 %v1346, %v1346
        %v1448 = vpack.c.bf16 %v1347, %v1347
        %v1449 = vpack.c.bf16 %v1348, %v1348
        %v1450 = vpack.c.bf16 %v1349, %v1349
        %v1451 = vpack.c.bf16 %v1350, %v1350
        %v1452 = vpack.c.bf16 %v1351, %v1351
        %v1453 = vpack.c.bf16 %v1352, %v1352
        %v1454 = vpack.c.bf16 %v1353, %v1353
        %v1455 = vpack.c.bf16 %v1354, %v1354
        %v1456 = vpack.c.bf16 %v1355, %v1355
        %v1457 = vpack.c.bf16 %v1356, %v1356
        %v1458 = vpack.c.bf16 %v1357, %v1357
        %v1459 = vpack.c.bf16 %v1358, %v1358
        %v1460 = vpack.c.bf16 %v1359, %v1359
        %v1461 = vpack.c.bf16 %v1360, %v1360
        %v1462 = vpack.c.bf16 %v1361, %v1361
        %v1463 = vpack.c.bf16 %v1362, %v1362
        %v1464 = vpack.c.bf16 %v1363, %v1363
        %v1465 = vpack.c.bf16 %v1364, %v1364
        %v1466 = vpack.c.bf16 %v1365, %v1365
        %v1467 = vpack.c.bf16 %v1366, %v1366
        %v1468 = vpack.c.bf16 %v1367, %v1367
        %v1469 = vpack.c.bf16 %v1368, %v1368
        %v1470 = vpack.c.bf16 %v1369, %v1369
        %v1471 = vpack.c.bf16 %v758, %v758
        %v1472 = vpack.c.bf16 %v759, %v759
        %v1473 = vpack.c.bf16 %v1375, %v1375
        %v1474 = vpack.c.bf16 %v1376, %v1376
        %v1475 = vpack.c.bf16 %v1377, %v1377
        %v1476 = vpack.c.bf16 %v1378, %v1378
        %v1477 = vpack.c.bf16 %v1379, %v1379
        %v1478 = vpack.c.bf16 %v1380, %v1380
        %v1479 = vpack.c.bf16 %v1381, %v1381
        %v1480 = vpack.c.bf16 %v1382, %v1382
        %v1481 = vpack.c.bf16 %v1383, %v1383
        %v1482 = vpack.c.bf16 %v1384, %v1384
        %v1483 = vpack.c.bf16 %v1385, %v1385
        %v1484 = vpack.c.bf16 %v1386, %v1386
        %v1485 = vpack.c.bf16 %v1387, %v1387
        %v1486 = vpack.c.bf16 %v1388, %v1388
        %v1487 = vpack.c.bf16 %v1389, %v1389
        %v1488 = vpack.c.bf16 %v1390, %v1390
        %v1489 = vpack.c.bf16 %v1391, %v1391
        %v1490 = vpack.c.bf16 %v1392, %v1392
        %v1491 = vpack.c.bf16 %v1393, %v1393
        %v1492 = vpack.c.bf16 %v1394, %v1394
        %v1493 = vpack.c.bf16 %v1395, %v1395
        %v1494 = vpack.c.bf16 %v1396, %v1396
        %v1495 = vpack.c.bf16 %v1397, %v1397
        %v1496 = vpack.c.bf16 %v1398, %v1398
        %v1497 = vpack.c.bf16 %v1399, %v1399
        %v1498 = vpack.c.bf16 %v1400, %v1400
        %v1499 = vpack.c.bf16 %v1401, %v1401
        %v1500 = vpack.c.bf16 %v1402, %v1402
        %v1501 = vpack.c.bf16 %v1403, %v1403
        %v1502 = vpack.c.bf16 %v1404, %v1404
        %v1503 = vpack.c.bf16 %v1405, %v1405
        %v1504 = vpack.c.bf16 %v1406, %v1406
        %v1537 = vunpack.c.l.b16 %v1407
        %v1538 = vunpack.c.l.b16 %v1408
        %v1539 = vunpack.c.l.b16 %v1409
        %v1540 = vunpack.c.l.b16 %v1410
        %v1541 = vunpack.c.l.b16 %v1411
        %v1542 = vunpack.c.l.b16 %v1412
        %v1543 = vunpack.c.l.b16 %v1413
        %v1544 = vunpack.c.l.b16 %v1414
        %v1545 = vunpack.c.l.b16 %v1415
        %v1546 = vunpack.c.l.b16 %v1416
        %v1547 = vunpack.c.l.b16 %v1417
        %v1548 = vunpack.c.l.b16 %v1418
        %v1549 = vunpack.c.l.b16 %v1419
        %v1550 = vunpack.c.l.b16 %v1420
        %v1551 = vunpack.c.l.b16 %v1421
        %v1552 = vunpack.c.l.b16 %v1422
        %v1553 = vunpack.c.l.b16 %v1423
        %v1554 = vunpack.c.l.b16 %v1424
        %v1555 = vunpack.c.l.b16 %v1425
        %v1556 = vunpack.c.l.b16 %v1426
        %v1557 = vunpack.c.l.b16 %v1427
        %v1558 = vunpack.c.l.b16 %v1428
        %v1559 = vunpack.c.l.b16 %v1429
        %v1560 = vunpack.c.l.b16 %v1430
        %v1561 = vunpack.c.l.b16 %v1431
        %v1562 = vunpack.c.l.b16 %v1432
        %v1563 = vunpack.c.l.b16 %v1433
        %v1564 = vunpack.c.l.b16 %v1434
        %v1565 = vunpack.c.l.b16 %v1435
        %v1566 = vunpack.c.l.b16 %v1436
        %v1567 = vunpack.c.l.b16 %v1437
        %v1568 = vunpack.c.l.b16 %v1438
        %v1569 = vpack.c.b16 %v1538, %v1537
        %v1570 = vpack.c.b16 %v1540, %v1539
        %v1571 = vpack.c.b16 %v1542, %v1541
        %v1572 = vpack.c.b16 %v1544, %v1543
        %v1573 = vpack.c.b16 %v1546, %v1545
        %v1574 = vpack.c.b16 %v1548, %v1547
        %v1575 = vpack.c.b16 %v1550, %v1549
        %v1576 = vpack.c.b16 %v1552, %v1551
        %v1577 = vpack.c.b16 %v1554, %v1553
        %v1578 = vpack.c.b16 %v1556, %v1555
        %v1579 = vpack.c.b16 %v1558, %v1557
        %v1580 = vpack.c.b16 %v1560, %v1559
        %v1581 = vpack.c.b16 %v1562, %v1561
        %v1582 = vpack.c.b16 %v1564, %v1563
        %v1583 = vpack.c.b16 %v1566, %v1565
        %v1584 = vpack.c.b16 %v1568, %v1567
        %v1617 = vunpack.c.l.b16 %v1439
        %v1618 = vunpack.c.l.b16 %v1440
        %v1619 = vunpack.c.l.b16 %v1441
        %v1620 = vunpack.c.l.b16 %v1442
        %v1621 = vunpack.c.l.b16 %v1443
        %v1622 = vunpack.c.l.b16 %v1444
        %v1623 = vunpack.c.l.b16 %v1445
        %v1624 = vunpack.c.l.b16 %v1446
        %v1625 = vunpack.c.l.b16 %v1447
        %v1626 = vunpack.c.l.b16 %v1448
        %v1627 = vunpack.c.l.b16 %v1449
        %v1628 = vunpack.c.l.b16 %v1450
        %v1629 = vunpack.c.l.b16 %v1451
        %v1630 = vunpack.c.l.b16 %v1452
        %v1631 = vunpack.c.l.b16 %v1453
        %v1632 = vunpack.c.l.b16 %v1454
        %v1633 = vunpack.c.l.b16 %v1455
        %v1634 = vunpack.c.l.b16 %v1456
        %v1635 = vunpack.c.l.b16 %v1457
        %v1636 = vunpack.c.l.b16 %v1458
        %v1637 = vunpack.c.l.b16 %v1459
        %v1638 = vunpack.c.l.b16 %v1460
        %v1639 = vunpack.c.l.b16 %v1461
        %v1640 = vunpack.c.l.b16 %v1462
        %v1641 = vunpack.c.l.b16 %v1463
        %v1642 = vunpack.c.l.b16 %v1464
        %v1643 = vunpack.c.l.b16 %v1465
        %v1644 = vunpack.c.l.b16 %v1466
        %v1645 = vunpack.c.l.b16 %v1467
        %v1646 = vunpack.c.l.b16 %v1468
        %v1647 = vunpack.c.l.b16 %v1469
        %v1648 = vunpack.c.l.b16 %v1470
        %v1649 = vpack.c.b16 %v1618, %v1617
        %v1650 = vpack.c.b16 %v1620, %v1619
        %v1651 = vpack.c.b16 %v1622, %v1621
        %v1652 = vpack.c.b16 %v1624, %v1623
        %v1653 = vpack.c.b16 %v1626, %v1625
        %v1654 = vpack.c.b16 %v1628, %v1627
        %v1655 = vpack.c.b16 %v1630, %v1629
        %v1656 = vpack.c.b16 %v1632, %v1631
        %v1657 = vpack.c.b16 %v1634, %v1633
        %v1658 = vpack.c.b16 %v1636, %v1635
        %v1659 = vpack.c.b16 %v1638, %v1637
        %v1660 = vpack.c.b16 %v1640, %v1639
        %v1661 = vpack.c.b16 %v1642, %v1641
        %v1662 = vpack.c.b16 %v1644, %v1643
        %v1663 = vpack.c.b16 %v1646, %v1645
        %v1664 = vpack.c.b16 %v1648, %v1647
        %1665 = vrot.lane.b32.xlu0 %v1649, 16
        %v1666 = vpop.permute.xlu0 %1665
        %1667 = vrot.lane.b32.xlu0 %v1650, 16
        %v1668 = vpop.permute.xlu0 %1667
        %1669 = vrot.lane.b32.xlu0 %v1651, 16
        %v1670 = vpop.permute.xlu0 %1669
        %1671 = vrot.lane.b32.xlu0 %v1652, 16
        %v1672 = vpop.permute.xlu0 %1671
        %1673 = vrot.lane.b32.xlu0 %v1653, 16
        %v1674 = vpop.permute.xlu0 %1673
        %1675 = vrot.lane.b32.xlu0 %v1654, 16
        %v1676 = vpop.permute.xlu0 %1675
        %1677 = vrot.lane.b32.xlu0 %v1655, 16
        %v1678 = vpop.permute.xlu0 %1677
        %1679 = vrot.lane.b32.xlu0 %v1656, 16
        %v1680 = vpop.permute.xlu0 %1679
        %1681 = vrot.lane.b32.xlu0 %v1657, 16
        %v1682 = vpop.permute.xlu0 %1681
        %1683 = vrot.lane.b32.xlu0 %v1658, 16
        %v1684 = vpop.permute.xlu0 %1683
        %1685 = vrot.lane.b32.xlu0 %v1659, 16
        %v1686 = vpop.permute.xlu0 %1685
        %1687 = vrot.lane.b32.xlu0 %v1660, 16
        %v1688 = vpop.permute.xlu0 %1687
        %1689 = vrot.lane.b32.xlu0 %v1661, 16
        %v1690 = vpop.permute.xlu0 %1689
        %1691 = vrot.lane.b32.xlu0 %v1662, 16
        %v1692 = vpop.permute.xlu0 %1691
        %1693 = vrot.lane.b32.xlu0 %v1663, 16
        %v1694 = vpop.permute.xlu0 %1693
        %1695 = vrot.lane.b32.xlu0 %v1664, 16
        %v1696 = vpop.permute.xlu0 %1695
        %v1699 = vunpack.c.l.b16 %v1471
        %v1700 = vunpack.c.l.b16 %v1472
        %v1701 = vpack.c.b16 %v1700, %v1699
        %1702 = vrot.lane.b32.xlu0 %v1570, 32
        %v1703 = vpop.permute.xlu0 %1702
        %1704 = vrot.lane.b32.xlu0 %v1571, 32
        %v1705 = vpop.permute.xlu0 %1704
        %1706 = vrot.lane.b32.xlu0 %v1572, 32
        %v1707 = vpop.permute.xlu0 %1706
        %1708 = vrot.lane.b32.xlu0 %v1573, 32
        %v1709 = vpop.permute.xlu0 %1708
        %1710 = vrot.lane.b32.xlu0 %v1574, 32
        %v1711 = vpop.permute.xlu0 %1710
        %1712 = vrot.lane.b32.xlu0 %v1575, 32
        %v1713 = vpop.permute.xlu0 %1712
        %1714 = vrot.lane.b32.xlu0 %v1576, 32
        %v1715 = vpop.permute.xlu0 %1714
        %1716 = vrot.lane.b32.xlu0 %v1577, 32
        %v1717 = vpop.permute.xlu0 %1716
        %1718 = vrot.lane.b32.xlu0 %v1578, 32
        %v1719 = vpop.permute.xlu0 %1718
        %1720 = vrot.lane.b32.xlu0 %v1579, 32
        %v1721 = vpop.permute.xlu0 %1720
        %1722 = vrot.lane.b32.xlu0 %v1580, 32
        %v1723 = vpop.permute.xlu0 %1722
        %1724 = vrot.lane.b32.xlu0 %v1581, 32
        %v1725 = vpop.permute.xlu0 %1724
        %1726 = vrot.lane.b32.xlu0 %v1582, 32
        %v1727 = vpop.permute.xlu0 %1726
        %1728 = vrot.lane.b32.xlu0 %v1583, 32
        %v1729 = vpop.permute.xlu0 %1728
        %1730 = vrot.lane.b32.xlu0 %v1584, 32
        %v1731 = vpop.permute.xlu0 %1730
        %1732 = vrot.lane.b32.xlu0 %v1701, 32
        %v1733 = vpop.permute.xlu0 %1732
        %v1766 = vunpack.c.l.b16 %v1473
        %v1767 = vunpack.c.l.b16 %v1474
        %v1768 = vunpack.c.l.b16 %v1475
        %v1769 = vunpack.c.l.b16 %v1476
        %v1770 = vunpack.c.l.b16 %v1477
        %v1771 = vunpack.c.l.b16 %v1478
        %v1772 = vunpack.c.l.b16 %v1479
        %v1773 = vunpack.c.l.b16 %v1480
        %v1774 = vunpack.c.l.b16 %v1481
        %v1775 = vunpack.c.l.b16 %v1482
        %v1776 = vunpack.c.l.b16 %v1483
        %v1777 = vunpack.c.l.b16 %v1484
        %v1778 = vunpack.c.l.b16 %v1485
        %v1779 = vunpack.c.l.b16 %v1486
        %v1780 = vunpack.c.l.b16 %v1487
        %v1781 = vunpack.c.l.b16 %v1488
        %v1782 = vunpack.c.l.b16 %v1489
        %v1783 = vunpack.c.l.b16 %v1490
        %v1784 = vunpack.c.l.b16 %v1491
        %v1785 = vunpack.c.l.b16 %v1492
        %v1786 = vunpack.c.l.b16 %v1493
        %v1787 = vunpack.c.l.b16 %v1494
        %v1788 = vunpack.c.l.b16 %v1495
        %v1789 = vunpack.c.l.b16 %v1496
        %v1790 = vunpack.c.l.b16 %v1497
        %v1791 = vunpack.c.l.b16 %v1498
        %v1792 = vunpack.c.l.b16 %v1499
        %v1793 = vunpack.c.l.b16 %v1500
        %v1794 = vunpack.c.l.b16 %v1501
        %v1795 = vunpack.c.l.b16 %v1502
        %v1796 = vunpack.c.l.b16 %v1503
        %v1797 = vunpack.c.l.b16 %v1504
        %v1798 = vpack.c.b16 %v1767, %v1766
        %v1799 = vpack.c.b16 %v1769, %v1768
        %v1800 = vpack.c.b16 %v1771, %v1770
        %v1801 = vpack.c.b16 %v1773, %v1772
        %v1802 = vpack.c.b16 %v1775, %v1774
        %v1803 = vpack.c.b16 %v1777, %v1776
        %v1804 = vpack.c.b16 %v1779, %v1778
        %v1805 = vpack.c.b16 %v1781, %v1780
        %v1806 = vpack.c.b16 %v1783, %v1782
        %v1807 = vpack.c.b16 %v1785, %v1784
        %v1808 = vpack.c.b16 %v1787, %v1786
        %v1809 = vpack.c.b16 %v1789, %v1788
        %v1810 = vpack.c.b16 %v1791, %v1790
        %v1811 = vpack.c.b16 %v1793, %v1792
        %v1812 = vpack.c.b16 %v1795, %v1794
        %v1813 = vpack.c.b16 %v1797, %v1796
        %1814 = vrot.lane.b32.xlu0 %v1798, 48
        %v1815 = vpop.permute.xlu0 %1814
        %1816 = vrot.lane.b32.xlu0 %v1799, 48
        %v1817 = vpop.permute.xlu0 %1816
        %1818 = vrot.lane.b32.xlu0 %v1800, 48
        %v1819 = vpop.permute.xlu0 %1818
        %1820 = vrot.lane.b32.xlu0 %v1801, 48
        %v1821 = vpop.permute.xlu0 %1820
        %1822 = vrot.lane.b32.xlu0 %v1802, 48
        %v1823 = vpop.permute.xlu0 %1822
        %1824 = vrot.lane.b32.xlu0 %v1803, 48
        %v1825 = vpop.permute.xlu0 %1824
        %1826 = vrot.lane.b32.xlu0 %v1804, 48
        %v1827 = vpop.permute.xlu0 %1826
        %1828 = vrot.lane.b32.xlu0 %v1805, 48
        %v1829 = vpop.permute.xlu0 %1828
        %1830 = vrot.lane.b32.xlu0 %v1806, 48
        %v1831 = vpop.permute.xlu0 %1830
        %1832 = vrot.lane.b32.xlu0 %v1807, 48
        %v1833 = vpop.permute.xlu0 %1832
        %1834 = vrot.lane.b32.xlu0 %v1808, 48
        %v1835 = vpop.permute.xlu0 %1834
        %1836 = vrot.lane.b32.xlu0 %v1809, 48
        %v1837 = vpop.permute.xlu0 %1836
        %1838 = vrot.lane.b32.xlu0 %v1810, 48
        %v1839 = vpop.permute.xlu0 %1838
        %1840 = vrot.lane.b32.xlu0 %v1811, 48
        %v1841 = vpop.permute.xlu0 %1840
        %1842 = vrot.lane.b32.xlu0 %v1812, 48
        %v1843 = vpop.permute.xlu0 %1842
        %1844 = vrot.lane.b32.xlu0 %v1813, 48
        %v1845 = vpop.permute.xlu0 %1844
        %vm1846 = vcmask 130048
        %v1849 = vsel %vm1846, %v1569, %v1666
        %v1852 = vsel %vm1846, %v1570, %v1668
        %v1855 = vsel %vm1846, %v1571, %v1670
        %v1858 = vsel %vm1846, %v1572, %v1672
        %v1861 = vsel %vm1846, %v1573, %v1674
        %v1864 = vsel %vm1846, %v1574, %v1676
        %v1867 = vsel %vm1846, %v1575, %v1678
        %v1870 = vsel %vm1846, %v1576, %v1680
        %v1873 = vsel %vm1846, %v1577, %v1682
        %v1876 = vsel %vm1846, %v1578, %v1684
        %v1879 = vsel %vm1846, %v1579, %v1686
        %v1882 = vsel %vm1846, %v1580, %v1688
        %v1885 = vsel %vm1846, %v1581, %v1690
        %v1888 = vsel %vm1846, %v1582, %v1692
        %v1891 = vsel %vm1846, %v1583, %v1694
        %v1894 = vsel %vm1846, %v1584, %v1696
        %vm1895 = vcmask 261120
        %v1897 = vsel %vm1895, %v1849, %v1703
        %v1899 = vsel %vm1895, %v1852, %v1705
        %v1901 = vsel %vm1895, %v1855, %v1707
        %v1903 = vsel %vm1895, %v1858, %v1709
        %v1905 = vsel %vm1895, %v1861, %v1711
        %v1907 = vsel %vm1895, %v1864, %v1713
        %v1909 = vsel %vm1895, %v1867, %v1715
        %v1911 = vsel %vm1895, %v1870, %v1717
        %v1913 = vsel %vm1895, %v1873, %v1719
        %v1915 = vsel %vm1895, %v1876, %v1721
        %v1917 = vsel %vm1895, %v1879, %v1723
        %v1919 = vsel %vm1895, %v1882, %v1725
        %v1921 = vsel %vm1895, %v1885, %v1727
        %v1923 = vsel %vm1895, %v1888, %v1729
        %v1925 = vsel %vm1895, %v1891, %v1731
        %v1927 = vsel %vm1895, %v1894, %v1733
        %vm1928 = vcmask 392192
        %v1930 = vsel %vm1928, %v1897, %v1815
        %v1932 = vsel %vm1928, %v1899, %v1817
        %v1934 = vsel %vm1928, %v1901, %v1819
        %v1936 = vsel %vm1928, %v1903, %v1821
        %v1938 = vsel %vm1928, %v1905, %v1823
        %v1940 = vsel %vm1928, %v1907, %v1825
        %v1942 = vsel %vm1928, %v1909, %v1827
        %v1944 = vsel %vm1928, %v1911, %v1829
        %v1946 = vsel %vm1928, %v1913, %v1831
        %v1948 = vsel %vm1928, %v1915, %v1833
        %v1950 = vsel %vm1928, %v1917, %v1835
        %v1952 = vsel %vm1928, %v1919, %v1837
        %v1954 = vsel %vm1928, %v1921, %v1839
        %v1956 = vsel %vm1928, %v1923, %v1841
        %v1958 = vsel %vm1928, %v1925, %v1843
        %v1960 = vsel %vm1928, %v1927, %v1845
        %v1961 = vld [vmem:[%s4] sm:$0xf]
        %v1962 = vld [vmem:[%s4 + $0x4] sm:$0xf]
        %v1963 = vld [vmem:[%s4 + $0x8] sm:$0xf]
        %v1964 = vld [vmem:[%s4 + $0xc] sm:$0xf]
        %v1965 = vld [vmem:[%s4 + $0x10] sm:$0xf]
        %v1966 = vld [vmem:[%s4 + $0x14] sm:$0xf]
        %v1967 = vld [vmem:[%s4 + $0x18] sm:$0xf]
        %v1968 = vld [vmem:[%s4 + $0x1c] sm:$0xf]
        %v1969 = vld [vmem:[%s5] sm:$0x1]
        %v1971 = vperm.slane %v1969, 0
        %v1981 = vunpack.c.l.b16 %v1961
        %v1982 = vunpack.c.l.b16 %v1962
        %v1983 = vunpack.c.l.b16 %v1963
        %v1984 = vunpack.c.l.b16 %v1964
        %v1985 = vunpack.c.l.b16 %v1965
        %v1986 = vunpack.c.l.b16 %v1966
        %v1987 = vunpack.c.l.b16 %v1967
        %v1988 = vunpack.c.l.b16 %v1968
        %v1989 = vpack.c.b16 %v1982, %v1981
        %v1990 = vpack.c.b16 %v1984, %v1983
        %v1991 = vpack.c.b16 %v1986, %v1985
        %v1992 = vpack.c.b16 %v1988, %v1987
        %v1997 = vsel %vm548, %v1930, 0
        %v1999 = vsel %vm548, %v1932, 0
        %v2001 = vsel %vm548, %v1934, 0
        %v2003 = vsel %vm548, %v1936, 0
        %v2005 = vsel %vm548, %v1938, 0
        %v2007 = vsel %vm548, %v1940, 0
        %v2009 = vsel %vm548, %v1942, 0
        %v2011 = vsel %vm548, %v1944, 0
        %v2013 = vsel %vm548, %v1946, 0
        %v2015 = vsel %vm548, %v1948, 0
        %v2017 = vsel %vm548, %v1950, 0
        %v2019 = vsel %vm548, %v1952, 0
        %v2021 = vsel %vm548, %v1954, 0
        %v2023 = vsel %vm548, %v1956, 0
        %v2025 = vsel %vm548, %v1958, 0
        %v2027 = vsel %vm548, %v1960, 0
        %2029 = vmatpush.bf16.msra.mxu0 0
        %2030 = vmatpush.bf16.msra.mxu0 0
        %2031 = vmatpush.bf16.msra.mxu0 0
        %2032 = vmatpush.bf16.msra.mxu0 0
        %2033 = vmatpush.bf16.msra.mxu0 %v1992
        %2034 = vmatpush.bf16.msra.mxu0 %v1991
        %2035 = vmatpush.bf16.msra.mxu0 %v1990
        %2036 = vmatpush.bf16.msra.mxu0 %v1989
        %2037 = vmatmul.bf16.gmra.mxu0 %v1997
        %v2038 = vpop.f32.mrf.mxu0
        %v2039 = vadd.f32 %v1971, %v2038
        %v2040 = vpop.f32.mrf.mxu0
        %v2041 = vadd.f32 %v1971, %v2040
        %2042 = vmatmul.bf16.gmra.mxu0 %v1999
        %v2043 = vpop.f32.mrf.mxu0
        %v2044 = vadd.f32 %v1971, %v2043
        %v2045 = vpop.f32.mrf.mxu0
        %v2046 = vadd.f32 %v1971, %v2045
        %2047 = vmatmul.bf16.gmra.mxu0 %v2001
        %v2048 = vpop.f32.mrf.mxu0
        %v2049 = vadd.f32 %v1971, %v2048
        %v2050 = vpop.f32.mrf.mxu0
        %v2051 = vadd.f32 %v1971, %v2050
        %2052 = vmatmul.bf16.gmra.mxu0 %v2003
        %v2053 = vpop.f32.mrf.mxu0
        %v2054 = vadd.f32 %v1971, %v2053
        %v2055 = vpop.f32.mrf.mxu0
        %v2056 = vadd.f32 %v1971, %v2055
        %2057 = vmatmul.bf16.gmra.mxu0 %v2005
        %v2058 = vpop.f32.mrf.mxu0
        %v2059 = vadd.f32 %v1971, %v2058
        %v2060 = vpop.f32.mrf.mxu0
        %v2061 = vadd.f32 %v1971, %v2060
        %2062 = vmatmul.bf16.gmra.mxu0 %v2007
        %v2063 = vpop.f32.mrf.mxu0
        %v2064 = vadd.f32 %v1971, %v2063
        %v2065 = vpop.f32.mrf.mxu0
        %v2066 = vadd.f32 %v1971, %v2065
        %2067 = vmatmul.bf16.gmra.mxu0 %v2009
        %v2068 = vpop.f32.mrf.mxu0
        %v2069 = vadd.f32 %v1971, %v2068
        %v2070 = vpop.f32.mrf.mxu0
        %v2071 = vadd.f32 %v1971, %v2070
        %2072 = vmatmul.bf16.gmra.mxu0 %v2011
        %v2073 = vpop.f32.mrf.mxu0
        %v2074 = vadd.f32 %v1971, %v2073
        %v2075 = vpop.f32.mrf.mxu0
        %v2076 = vadd.f32 %v1971, %v2075
        %2077 = vmatmul.bf16.gmra.mxu0 %v2013
        %v2078 = vpop.f32.mrf.mxu0
        %v2079 = vadd.f32 %v1971, %v2078
        %v2080 = vpop.f32.mrf.mxu0
        %v2081 = vadd.f32 %v1971, %v2080
        %2082 = vmatmul.bf16.gmra.mxu0 %v2015
        %v2083 = vpop.f32.mrf.mxu0
        %v2084 = vadd.f32 %v1971, %v2083
        %v2085 = vpop.f32.mrf.mxu0
        %v2086 = vadd.f32 %v1971, %v2085
        %2087 = vmatmul.bf16.gmra.mxu0 %v2017
        %v2088 = vpop.f32.mrf.mxu0
        %v2089 = vadd.f32 %v1971, %v2088
        %v2090 = vpop.f32.mrf.mxu0
        %v2091 = vadd.f32 %v1971, %v2090
        %2092 = vmatmul.bf16.gmra.mxu0 %v2019
        %v2093 = vpop.f32.mrf.mxu0
        %v2094 = vadd.f32 %v1971, %v2093
        %v2095 = vpop.f32.mrf.mxu0
        %v2096 = vadd.f32 %v1971, %v2095
        %2097 = vmatmul.bf16.gmra.mxu0 %v2021
        %v2098 = vpop.f32.mrf.mxu0
        %v2099 = vadd.f32 %v1971, %v2098
        %v2100 = vpop.f32.mrf.mxu0
        %v2101 = vadd.f32 %v1971, %v2100
        %2102 = vmatmul.bf16.gmra.mxu0 %v2023
        %v2103 = vpop.f32.mrf.mxu0
        %v2104 = vadd.f32 %v1971, %v2103
        %v2105 = vpop.f32.mrf.mxu0
        %v2106 = vadd.f32 %v1971, %v2105
        %2107 = vmatmul.bf16.gmra.mxu0 %v2025
        %v2108 = vpop.f32.mrf.mxu0
        %v2109 = vadd.f32 %v1971, %v2108
        %v2110 = vpop.f32.mrf.mxu0
        %v2111 = vadd.f32 %v1971, %v2110
        %2112 = vmatmul.bf16.gmra.mxu0 %v2027
        %v2113 = vpop.f32.mrf.mxu0
        %v2114 = vadd.f32 %v1971, %v2113
        %v2115 = vpop.f32.mrf.mxu0
        %v2116 = vadd.f32 %v1971, %v2115
        %2117 = vdwg.mxu0
        %v2118 = vmax.f32 %v2039, 0.0
        %v2119 = vmax.f32 %v2041, 0.0
        %v2120 = vmax.f32 %v2044, 0.0
        %v2121 = vmax.f32 %v2046, 0.0
        %v2122 = vmax.f32 %v2049, 0.0
        %v2123 = vmax.f32 %v2051, 0.0
        %v2124 = vmax.f32 %v2054, 0.0
        %v2125 = vmax.f32 %v2056, 0.0
        %v2126 = vmax.f32 %v2059, 0.0
        %v2127 = vmax.f32 %v2061, 0.0
        %v2128 = vmax.f32 %v2064, 0.0
        %v2129 = vmax.f32 %v2066, 0.0
        %v2130 = vmax.f32 %v2069, 0.0
        %v2131 = vmax.f32 %v2071, 0.0
        %v2132 = vmax.f32 %v2074, 0.0
        %v2133 = vmax.f32 %v2076, 0.0
        %v2134 = vmax.f32 %v2079, 0.0
        %v2135 = vmax.f32 %v2081, 0.0
        %v2136 = vmax.f32 %v2084, 0.0
        %v2137 = vmax.f32 %v2086, 0.0
        %v2138 = vmax.f32 %v2089, 0.0
        %v2139 = vmax.f32 %v2091, 0.0
        %v2140 = vmax.f32 %v2094, 0.0
        %v2141 = vmax.f32 %v2096, 0.0
        %v2142 = vmax.f32 %v2099, 0.0
        %v2143 = vmax.f32 %v2101, 0.0
        %v2144 = vmax.f32 %v2104, 0.0
        %v2145 = vmax.f32 %v2106, 0.0
        %v2146 = vmax.f32 %v2109, 0.0
        %v2147 = vmax.f32 %v2111, 0.0
        %v2148 = vmax.f32 %v2114, 0.0
        %v2149 = vmax.f32 %v2116, 0.0
        %v2150 = vpack.c.bf16 %v2119, %v2118
        %v2151 = vpack.c.bf16 %v2121, %v2120
        %v2152 = vpack.c.bf16 %v2123, %v2122
        %v2153 = vpack.c.bf16 %v2125, %v2124
        %v2154 = vpack.c.bf16 %v2127, %v2126
        %v2155 = vpack.c.bf16 %v2129, %v2128
        %v2156 = vpack.c.bf16 %v2131, %v2130
        %v2157 = vpack.c.bf16 %v2133, %v2132
        %v2158 = vpack.c.bf16 %v2135, %v2134
        %v2159 = vpack.c.bf16 %v2137, %v2136
        %v2160 = vpack.c.bf16 %v2139, %v2138
        %v2161 = vpack.c.bf16 %v2141, %v2140
        %v2162 = vpack.c.bf16 %v2143, %v2142
        %v2163 = vpack.c.bf16 %v2145, %v2144
        %v2164 = vpack.c.bf16 %v2147, %v2146
        %v2165 = vpack.c.bf16 %v2149, %v2148
        %v2166 = vld [vmem:[%s6] sm:$0xf]
        %v2167 = vld [vmem:[%s6 + $0x4] sm:$0xf]
        %v2168 = vld [vmem:[%s6 + $0x8] sm:$0xf]
        %v2169 = vld [vmem:[%s6 + $0xc] sm:$0xf]
        %v2170 = vld [vmem:[%s6 + $0x10] sm:$0xf]
        %v2171 = vld [vmem:[%s6 + $0x14] sm:$0xf]
        %v2172 = vld [vmem:[%s6 + $0x18] sm:$0xf]
        %v2173 = vld [vmem:[%s6 + $0x1c] sm:$0xf]
        %v2174 = vld [vmem:[%s7] sm:$0x1]
        %v2176 = vperm.slane %v2174, 0
        %v2186 = vunpack.c.l.b16 %v2166
        %v2187 = vunpack.c.l.b16 %v2167
        %v2188 = vunpack.c.l.b16 %v2168
        %v2189 = vunpack.c.l.b16 %v2169
        %v2190 = vunpack.c.l.b16 %v2170
        %v2191 = vunpack.c.l.b16 %v2171
        %v2192 = vunpack.c.l.b16 %v2172
        %v2193 = vunpack.c.l.b16 %v2173
        %v2194 = vpack.c.b16 %v2187, %v2186
        %v2195 = vpack.c.b16 %v2189, %v2188
        %v2196 = vpack.c.b16 %v2191, %v2190
        %v2197 = vpack.c.b16 %v2193, %v2192
        %v2203 = vsel %vm548, %v2150, 0
        %v2206 = vsel %vm548, %v2151, 0
        %v2209 = vsel %vm548, %v2152, 0
        %v2212 = vsel %vm548, %v2153, 0
        %v2215 = vsel %vm548, %v2154, 0
        %v2218 = vsel %vm548, %v2155, 0
        %v2221 = vsel %vm548, %v2156, 0
        %v2224 = vsel %vm548, %v2157, 0
        %v2227 = vsel %vm548, %v2158, 0
        %v2230 = vsel %vm548, %v2159, 0
        %v2233 = vsel %vm548, %v2160, 0
        %v2236 = vsel %vm548, %v2161, 0
        %v2239 = vsel %vm548, %v2162, 0
        %v2242 = vsel %vm548, %v2163, 0
        %v2245 = vsel %vm548, %v2164, 0
        %v2248 = vsel %vm548, %v2165, 0
        %2250 = vmatpush.bf16.msra.mxu0 0
        %2251 = vmatpush.bf16.msra.mxu0 0
        %2252 = vmatpush.bf16.msra.mxu0 0
        %2253 = vmatpush.bf16.msra.mxu0 0
        %2254 = vmatpush.bf16.msra.mxu0 %v2197
        %2255 = vmatpush.bf16.msra.mxu0 %v2196
        %2256 = vmatpush.bf16.msra.mxu0 %v2195
        %2257 = vmatpush.bf16.msra.mxu0 %v2194
        %2258 = vmatmul.bf16.gmra.mxu0 %v2203
        %v2259 = vpop.f32.mrf.mxu0
        %v2260 = vadd.f32 %v2176, %v2259
        %v2261 = vpop.f32.mrf.mxu0
        %v2262 = vadd.f32 %v2176, %v2261
        %2263 = vmatmul.bf16.gmra.mxu0 %v2206
        %v2264 = vpop.f32.mrf.mxu0
        %v2265 = vadd.f32 %v2176, %v2264
        %v2266 = vpop.f32.mrf.mxu0
        %v2267 = vadd.f32 %v2176, %v2266
        %2268 = vmatmul.bf16.gmra.mxu0 %v2209
        %v2269 = vpop.f32.mrf.mxu0
        %v2270 = vadd.f32 %v2176, %v2269
        %v2271 = vpop.f32.mrf.mxu0
        %v2272 = vadd.f32 %v2176, %v2271
        %2273 = vmatmul.bf16.gmra.mxu0 %v2212
        %v2274 = vpop.f32.mrf.mxu0
        %v2275 = vadd.f32 %v2176, %v2274
        %v2276 = vpop.f32.mrf.mxu0
        %v2277 = vadd.f32 %v2176, %v2276
        %2278 = vmatmul.bf16.gmra.mxu0 %v2215
        %v2279 = vpop.f32.mrf.mxu0
        %v2280 = vadd.f32 %v2176, %v2279
        %v2281 = vpop.f32.mrf.mxu0
        %v2282 = vadd.f32 %v2176, %v2281
        %2283 = vmatmul.bf16.gmra.mxu0 %v2218
        %v2284 = vpop.f32.mrf.mxu0
        %v2285 = vadd.f32 %v2176, %v2284
        %v2286 = vpop.f32.mrf.mxu0
        %v2287 = vadd.f32 %v2176, %v2286
        %2288 = vmatmul.bf16.gmra.mxu0 %v2221
        %v2289 = vpop.f32.mrf.mxu0
        %v2290 = vadd.f32 %v2176, %v2289
        %v2291 = vpop.f32.mrf.mxu0
        %v2292 = vadd.f32 %v2176, %v2291
        %2293 = vmatmul.bf16.gmra.mxu0 %v2224
        %v2294 = vpop.f32.mrf.mxu0
        %v2295 = vadd.f32 %v2176, %v2294
        %v2296 = vpop.f32.mrf.mxu0
        %v2297 = vadd.f32 %v2176, %v2296
        %2298 = vmatmul.bf16.gmra.mxu0 %v2227
        %v2299 = vpop.f32.mrf.mxu0
        %v2300 = vadd.f32 %v2176, %v2299
        %v2301 = vpop.f32.mrf.mxu0
        %v2302 = vadd.f32 %v2176, %v2301
        %2303 = vmatmul.bf16.gmra.mxu0 %v2230
        %v2304 = vpop.f32.mrf.mxu0
        %v2305 = vadd.f32 %v2176, %v2304
        %v2306 = vpop.f32.mrf.mxu0
        %v2307 = vadd.f32 %v2176, %v2306
        %2308 = vmatmul.bf16.gmra.mxu0 %v2233
        %v2309 = vpop.f32.mrf.mxu0
        %v2310 = vadd.f32 %v2176, %v2309
        %v2311 = vpop.f32.mrf.mxu0
        %v2312 = vadd.f32 %v2176, %v2311
        %2313 = vmatmul.bf16.gmra.mxu0 %v2236
        %v2314 = vpop.f32.mrf.mxu0
        %v2315 = vadd.f32 %v2176, %v2314
        %v2316 = vpop.f32.mrf.mxu0
        %v2317 = vadd.f32 %v2176, %v2316
        %2318 = vmatmul.bf16.gmra.mxu0 %v2239
        %v2319 = vpop.f32.mrf.mxu0
        %v2320 = vadd.f32 %v2176, %v2319
        %v2321 = vpop.f32.mrf.mxu0
        %v2322 = vadd.f32 %v2176, %v2321
        %2323 = vmatmul.bf16.gmra.mxu0 %v2242
        %v2324 = vpop.f32.mrf.mxu0
        %v2325 = vadd.f32 %v2176, %v2324
        %v2326 = vpop.f32.mrf.mxu0
        %v2327 = vadd.f32 %v2176, %v2326
        %2328 = vmatmul.bf16.gmra.mxu0 %v2245
        %v2329 = vpop.f32.mrf.mxu0
        %v2330 = vadd.f32 %v2176, %v2329
        %v2331 = vpop.f32.mrf.mxu0
        %v2332 = vadd.f32 %v2176, %v2331
        %2333 = vmatmul.bf16.gmra.mxu0 %v2248
        %v2334 = vpop.f32.mrf.mxu0
        %v2335 = vadd.f32 %v2176, %v2334
        %v2336 = vpop.f32.mrf.mxu0
        %v2337 = vadd.f32 %v2176, %v2336
        %2338 = vdwg.mxu0
        %v2339 = vmax.f32 %v2260, 0.0
        %v2340 = vmax.f32 %v2262, 0.0
        %v2341 = vmax.f32 %v2265, 0.0
        %v2342 = vmax.f32 %v2267, 0.0
        %v2343 = vmax.f32 %v2270, 0.0
        %v2344 = vmax.f32 %v2272, 0.0
        %v2345 = vmax.f32 %v2275, 0.0
        %v2346 = vmax.f32 %v2277, 0.0
        %v2347 = vmax.f32 %v2280, 0.0
        %v2348 = vmax.f32 %v2282, 0.0
        %v2349 = vmax.f32 %v2285, 0.0
        %v2350 = vmax.f32 %v2287, 0.0
        %v2351 = vmax.f32 %v2290, 0.0
        %v2352 = vmax.f32 %v2292, 0.0
        %v2353 = vmax.f32 %v2295, 0.0
        %v2354 = vmax.f32 %v2297, 0.0
        %v2355 = vmax.f32 %v2300, 0.0
        %v2356 = vmax.f32 %v2302, 0.0
        %v2357 = vmax.f32 %v2305, 0.0
        %v2358 = vmax.f32 %v2307, 0.0
        %v2359 = vmax.f32 %v2310, 0.0
        %v2360 = vmax.f32 %v2312, 0.0
        %v2361 = vmax.f32 %v2315, 0.0
        %v2362 = vmax.f32 %v2317, 0.0
        %v2363 = vmax.f32 %v2320, 0.0
        %v2364 = vmax.f32 %v2322, 0.0
        %v2365 = vmax.f32 %v2325, 0.0
        %v2366 = vmax.f32 %v2327, 0.0
        %v2367 = vmax.f32 %v2330, 0.0
        %v2368 = vmax.f32 %v2332, 0.0
        %v2369 = vmax.f32 %v2335, 0.0
        %v2370 = vmax.f32 %v2337, 0.0
        %v2371 = vpack.c.bf16 %v2339, %v2339
        %v2372 = vpack.c.bf16 %v2340, %v2340
        %v2373 = vpack.c.bf16 %v2341, %v2341
        %v2374 = vpack.c.bf16 %v2342, %v2342
        %v2375 = vpack.c.bf16 %v2343, %v2343
        %v2376 = vpack.c.bf16 %v2344, %v2344
        %v2377 = vpack.c.bf16 %v2345, %v2345
        %v2378 = vpack.c.bf16 %v2346, %v2346
        %v2379 = vpack.c.bf16 %v2347, %v2347
        %v2380 = vpack.c.bf16 %v2348, %v2348
        %v2381 = vpack.c.bf16 %v2349, %v2349
        %v2382 = vpack.c.bf16 %v2350, %v2350
        %v2383 = vpack.c.bf16 %v2351, %v2351
        %v2384 = vpack.c.bf16 %v2352, %v2352
        %v2385 = vpack.c.bf16 %v2353, %v2353
        %v2386 = vpack.c.bf16 %v2354, %v2354
        %v2387 = vpack.c.bf16 %v2355, %v2355
        %v2388 = vpack.c.bf16 %v2356, %v2356
        %v2389 = vpack.c.bf16 %v2357, %v2357
        %v2390 = vpack.c.bf16 %v2358, %v2358
        %v2391 = vpack.c.bf16 %v2359, %v2359
        %v2392 = vpack.c.bf16 %v2360, %v2360
        %v2393 = vpack.c.bf16 %v2361, %v2361
        %v2394 = vpack.c.bf16 %v2362, %v2362
        %v2395 = vpack.c.bf16 %v2363, %v2363
        %v2396 = vpack.c.bf16 %v2364, %v2364
        %v2397 = vpack.c.bf16 %v2365, %v2365
        %v2398 = vpack.c.bf16 %v2366, %v2366
        %v2399 = vpack.c.bf16 %v2367, %v2367
        %v2400 = vpack.c.bf16 %v2368, %v2368
        %v2401 = vpack.c.bf16 %v2369, %v2369
        %v2402 = vpack.c.bf16 %v2370, %v2370
        %2403 = vst [vmem:[%s369] sm:$0xf] %v2371
        %2404 = vst [vmem:[%s369 + $0x4] sm:$0xf] %v2372
        %2405 = vst [vmem:[%s369 + $0x8] sm:$0xf] %v2373
        %2406 = vst [vmem:[%s369 + $0xc] sm:$0xf] %v2374
        %2407 = vst [vmem:[%s369 + $0x10] sm:$0xf] %v2375
        %2408 = vst [vmem:[%s369 + $0x14] sm:$0xf] %v2376
        %2409 = vst [vmem:[%s369 + $0x18] sm:$0xf] %v2377
        %2410 = vst [vmem:[%s369 + $0x1c] sm:$0xf] %v2378
        %2411 = vst [vmem:[%s369 + $0x20] sm:$0xf] %v2379
        %2412 = vst [vmem:[%s369 + $0x24] sm:$0xf] %v2380
        %2413 = vst [vmem:[%s369 + $0x28] sm:$0xf] %v2381
        %2414 = vst [vmem:[%s369 + $0x2c] sm:$0xf] %v2382
        %2415 = vst [vmem:[%s369 + $0x30] sm:$0xf] %v2383
        %2416 = vst [vmem:[%s369 + $0x34] sm:$0xf] %v2384
        %2417 = vst [vmem:[%s369 + $0x38] sm:$0xf] %v2385
        %2418 = vst [vmem:[%s369 + $0x3c] sm:$0xf] %v2386
        %2419 = vst [vmem:[%s369 + $0x40] sm:$0xf] %v2387
        %2420 = vst [vmem:[%s369 + $0x44] sm:$0xf] %v2388
        %2421 = vst [vmem:[%s369 + $0x48] sm:$0xf] %v2389
        %2422 = vst [vmem:[%s369 + $0x4c] sm:$0xf] %v2390
        %2423 = vst [vmem:[%s369 + $0x50] sm:$0xf] %v2391
        %2424 = vst [vmem:[%s369 + $0x54] sm:$0xf] %v2392
        %2425 = vst [vmem:[%s369 + $0x58] sm:$0xf] %v2393
        %2426 = vst [vmem:[%s369 + $0x5c] sm:$0xf] %v2394
        %2427 = vst [vmem:[%s369 + $0x60] sm:$0xf] %v2395
        %2428 = vst [vmem:[%s369 + $0x64] sm:$0xf] %v2396
        %2429 = vst [vmem:[%s369 + $0x68] sm:$0xf] %v2397
        %2430 = vst [vmem:[%s369 + $0x6c] sm:$0xf] %v2398
        %2431 = vst [vmem:[%s369 + $0x70] sm:$0xf] %v2399
        %2432 = vst [vmem:[%s369 + $0x74] sm:$0xf] %v2400
        %2433 = vst [vmem:[%s369 + $0x78] sm:$0xf] %v2401
        %2434 = vst [vmem:[%s369 + $0x7c] sm:$0xf] %v2402
        %s2435 = sand.u32 %s234, 1
        %s2436 = scalar_lea.sflag [#allocation4], %s2435
        %s2437 = sand.u32 %s234, 1
        %s2438 = smul.addr %s2437, 128
        %s2439 = scalar_lea.vmem [#allocation3], %s2438
        // Predicated region
        $region61: #{tpu_custom_call.1} parent=51 // pred_check
          %p2440 = pneg %p244
        $region62: #{tpu_custom_call.1} parent=51 // pred_check_branch
          %2442 = sbr.rel (%p2440) target = $region64
        $region63: #{tpu_custom_call.1} parent=51 // pred_region
          %s2443 = smul.u32 32, %s27
          %2445 = vsyncadd %s2436, 0
          %s2446 = smul.addr %s26, 32
          %s2447 = sadd.s32 %s2443, %s2446
          %s2448 = smul.addr %s2447, 4
          %s2449 = scalar_lea.hbm %s8, %s2448
          %s2450 = sshll.u32 %s2439, 4
          %s2451 = int_to_ptr.vmem [resolvable:$true] %s2450
          %s2452 = sshll.u32 %s2449, 4
          %s2453 = int_to_ptr.hbm [resolvable:$true] %s2452
          %2458 = dma.vmem_to_hbm [thread:$0]  %s2451, 2048, %s2453, %s2436, 64, 64, 4
        $region64: #{tpu_custom_call.1} parent=51 // pred_fallthru
          _
      $region52: #{tpu_custom_call.1} parent=5 // pred_fallthru
        _
      %p2459 = scmp.le.s32.totalorder 2, %s17
      // Predicated region
      $region65: #{tpu_custom_call.1} parent=5 // pred_check
        %p2460 = pneg %p2459
      $region66: #{tpu_custom_call.1} parent=5 // pred_check_branch
        %2462 = sbr.rel (%p2460) target = $region68
      $region67: #{tpu_custom_call.1} parent=5 // pred_region
        %s2463 = ssub.s32 %s17, 2
        // Predicated region
        $region69: #{tpu_custom_call.1} parent=67 // pred_check
          %p2464 = pneg %p250
        $region70: #{tpu_custom_call.1} parent=67 // pred_check_branch
          %2466 = sbr.rel (%p2464) target = $region72
        $region71: #{tpu_custom_call.1} parent=67 // pred_region
          %s2467 = sand.u32 %s235, 1
          %s2468 = scalar_lea.sflag [#allocation4], %s2467
          %s2469 = sand.u32 %s235, 1
          %s2470 = smul.addr %s2469, 128
          %s2471 = scalar_lea.vmem [#allocation3], %s2470
          %2473 = dma.done %s2468, 2048
        $region72: #{tpu_custom_call.1} parent=67 // pred_fallthru
          _
      $region68: #{tpu_custom_call.1} parent=5 // pred_fallthru
        _
    $region6: #{tpu_custom_call.1} parent=1 // loop_footer
      %s21 = sadd.s32 1, %s17
    $region7: #{tpu_custom_call.1} parent=1 // loop_footer_branch
      %16 = sbr.rel target = $region3
    $region8: #{tpu_custom_call.1} parent=1 // loop_exit
      _
    %2474 = vsyncpa [#allocation4], 1
    %s2475 = scalar_lea.sflag [#allocation4], 1
    %2476 = vsyncpa %s2475, 1

</llo_original>
